<compile_context>
chip_gen: v7x
topology: tpu7x:2x2x1
jax: 0.10.0
libtpu: 0.0.40
codegen_flags: <defaults>
</compile_context>

<pallas_src>
import functools

import jax
import jax.numpy as jnp
import numpy as np
from jax import lax
from jax.experimental import pallas as pl
from jax.experimental.pallas import tpu as pltpu

TM_MAX = 512   # max packed rows per grid step


def _round_up(x, m):
    return ((x + m - 1) // m) * m


def _cdiv(a, b):
    return (a + b - 1) // b


def _default_f_pad(hidden_features):
    """Lane width of the packed hidden activations.

    v6e / v7x have a 256-wide MXU: a 128-wide K/N leaves half the array idle,
    so pack to 256 lanes whenever that increases the packed group count.
    v5e (128-wide MXU) and unknown chips stay at 128.
    """
    try:
        kind = jax.devices()[0].device_kind.lower()
    except Exception:
        kind = ""
    wide_mxu = ("v6" in kind) or ("v7" in kind)
    g128 = 128 // hidden_features if hidden_features <= 128 else 0
    g256 = 256 // hidden_features if hidden_features <= 256 else 0
    if wide_mxu and g256 > g128:
        return 256
    return 128


def _pick_tm(rows):
    """Adaptive row tile (always a multiple of 128 for lane-dense stores).

    Avoids full matmul+sin on hundreds of dead padded rows at small N and
    prefers >= 2 grid steps so v7x's two TensorCores can share the grid.
    """
    if rows >= 2 * TM_MAX:
        return TM_MAX
    half = _round_up(max(_cdiv(rows, 2), 1), 128)
    return int(min(TM_MAX, max(128, half)))


def siren_kernel(x_ref, w0_ref, wmid_ref, b_ref, wlast_ref, blast_ref, o_ref,
                 *, n_mid, last_is_linear):
    """Whole SIREN forward for one tile of packed rows.

    x_ref    : (TM, IN_LANES)                 packed input coords (G groups)
    w0_ref   : (IN_LANES, F_PAD)              layer-0 weight, block-diag, omega folded (f32)
    wmid_ref : (max(n_mid,1), F_PAD, F_PAD)   middle weights (f32 or bf16)
    b_ref    : (n_mid+1, F_PAD)               biases of layers 0..n_mid, omega folded (f32)
    wlast_ref: (OUT_ROWS, F_PAD)              last weight, pre-transposed, block-diag (f32)
    blast_ref: (OUT_ROWS, 1)                  last bias (f32)
    o_ref    : (OUT_ROWS, TM)                 lane-dense transposed output
    """
    # Layer 0 stays f32: omega_0-folded weights make sine arguments O(30), so
    # bf16 operand error would be strongly amplified by sin().
    pre = jnp.dot(x_ref[...], w0_ref[...], preferred_element_type=jnp.float32)
    h = jnp.sin(pre + b_ref[pl.ds(0, 1), :])

    # Hidden layers: static unroll (n_mid is tiny).  Operands are cast to the
    # stored weight dtype (bf16 fast path, f32 accumulation; astype is a
    # no-op on the f32 path).
    for i in range(n_mid):
        w = wmid_ref[i]
        pre = jnp.dot(h.astype(w.dtype), w,
                      preferred_element_type=jnp.float32)
        h = jnp.sin(pre + b_ref[pl.ds(i + 1, 1), :])

    # Last layer computed directly transposed (lane-dense output):
    # (OUT_ROWS, F_PAD) x (TM, F_PAD) contracted on the feature axis.
    pre_t = lax.dot_general(wlast_ref[...], h, (((1,), (1,)), ((), ())),
                            preferred_element_type=jnp.float32)
    pre_t = pre_t + blast_ref[...]
    out = pre_t if last_is_linear else jnp.sin(pre_t)
    o_ref[...] = out.astype(o_ref.dtype)


def init_siren_params(key, in_features, hidden_features, hidden_layers,
                      out_features, outermost_linear=False,
                      first_omega_0=30.0, hidden_omega_0=30.0):
    """Deterministic init matching the PyTorch module's init ranges."""
    dims = ([in_features]
            + [hidden_features] * (hidden_layers + 1)
            + [out_features])
    L = len(dims) - 1
    weights, biases, omegas = [], [], []
    for i in range(L):
        fan_in, fan_out = dims[i], dims[i + 1]
        key, kw, kb = jax.random.split(key, 3)
        if i == 0:
            lim = 1.0 / fan_in
            omega = first_omega_0
        else:
            lim = np.sqrt(6.0 / fan_in) / hidden_omega_0
            omega = hidden_omega_0
        w = jax.random.uniform(kw, (fan_in, fan_out), jnp.float32, -lim, lim)
        # nn.Linear default bias init: U(-1/sqrt(fan_in), 1/sqrt(fan_in))
        blim = 1.0 / np.sqrt(fan_in)
        b = jax.random.uniform(kb, (fan_out,), jnp.float32, -blim, blim)
        weights.append(w)
        biases.append(b)
        omegas.append(float(omega))
    return weights, biases, omegas, bool(outermost_linear)


def pack_params(weights, biases, omegas, last_is_linear, *, groups, f_pad,
                in_lanes, out_rows_pad, hidden_dtype):
    """Zero-pad + block-diagonal-pack to kernel layout; fold omega_0 (exact)."""
    L = len(weights)
    n_mid = L - 2
    in_f = weights[0].shape[0]
    hid = weights[0].shape[1]
    out_f = weights[-1].shape[1]

    w0 = np.zeros((in_lanes, f_pad), np.float32)
    wm = np.zeros((max(n_mid, 1), f_pad, f_pad), np.float32)
    b = np.zeros((n_mid + 1, f_pad), np.float32)
    wl = np.zeros((out_rows_pad, f_pad), np.float32)
    bl = np.zeros((out_rows_pad, 1), np.float32)

    w0_s = np.asarray(weights[0], np.float32) * omegas[0]
    b0_s = np.asarray(biases[0], np.float32) * omegas[0]
    wm_s = [np.asarray(weights[i], np.float32) * omegas[i]
            for i in range(1, L - 1)]
    bm_s = [np.asarray(biases[i], np.float32) * omegas[i]
            for i in range(1, L - 1)]
    last_scale = 1.0 if last_is_linear else omegas[L - 1]
    wl_s = np.asarray(weights[L - 1], np.float32).T * last_scale  # (out_f, hid)
    bl_s = np.asarray(biases[L - 1], np.float32) * last_scale

    for g in range(groups):
        hs, he = g * hid, (g + 1) * hid
        w0[g * in_f:(g + 1) * in_f, hs:he] = w0_s
        b[0, hs:he] = b0_s
        wl[g * out_f:(g + 1) * out_f, hs:he] = wl_s
        bl[g * out_f:(g + 1) * out_f, 0] = bl_s
        for i in range(n_mid):
            wm[i, hs:he, hs:he] = wm_s[i]
            b[i + 1, hs:he] = bm_s[i]

    return (jnp.asarray(w0), jnp.asarray(wm, dtype=hidden_dtype),
            jnp.asarray(b), jnp.asarray(wl), jnp.asarray(bl))


def siren_forward(coords, weights, biases, omegas, last_is_linear, *,
                  hidden_matmul_dtype=jnp.float32, f_pad=None):
    """coords: (N, in_features) float32 -> (N, out_features) float32."""
    N, in_f = coords.shape
    hid = weights[0].shape[1]
    out_f = weights[-1].shape[1]
    L = len(weights)
    assert L >= 2, "Siren always has at least first + final layer"
    for w in weights[1:]:
        assert w.shape[0] == hid, "hidden width must be constant"
    assert out_f <= hid, "packing assumes out_features <= hidden_features"
    # TODO(synk): out_features > hidden_features would need its own group width.

    if f_pad is None:
        f_pad = _default_f_pad(hid)
    assert hid <= f_pad, f"hidden_features={hid} exceeds lane budget {f_pad}"

    G = f_pad // hid                       # packed groups per lane tile
    in_lanes = _round_up(G * in_f, 8)
    out_rows = G * out_f
    out_rows_pad = _round_up(out_rows, 8)
    n_mid = L - 2

    # ---- host-side row packing: G coordinate groups share each packed row.
    rows = _cdiv(N, G)                     # packed rows of real data
    coords_f32 = jnp.asarray(coords, jnp.float32)
    pad_n = G * rows - N
    if pad_n:
        coords_f32 = jnp.concatenate(
            [coords_f32, jnp.zeros((pad_n, in_f), jnp.float32)], axis=0)
    packed = coords_f32.reshape(G, rows, in_f).transpose(1, 0, 2).reshape(
        rows, G * in_f)

    tm = _pick_tm(rows)
    n_pad = _round_up(rows, tm)
    x = jnp.zeros((n_pad, in_lanes), jnp.float32)
    x = x.at[:rows, :G * in_f].set(packed)

    w0, wm, b, wl, bl = pack_params(
        weights, biases, omegas, last_is_linear, groups=G, f_pad=f_pad,
        in_lanes=in_lanes, out_rows_pad=out_rows_pad,
        hidden_dtype=hidden_matmul_dtype)

    kernel = functools.partial(siren_kernel, n_mid=n_mid,
                               last_is_linear=last_is_linear)

    flops = 2 * n_pad * (in_lanes * f_pad + n_mid * f_pad * f_pad
                         + out_rows_pad * f_pad)
    transcendentals = n_pad * ((1 + n_mid) * f_pad
                               + (0 if last_is_linear else out_rows_pad))
    bytes_accessed = 4 * (n_pad * in_lanes + in_lanes * f_pad
                          + max(n_mid, 1) * f_pad * f_pad
                          + (n_mid + 1) * f_pad
                          + out_rows_pad * (f_pad + 1)
                          + out_rows_pad * n_pad)

    out_t = pl.pallas_call(
        kernel,
        out_shape=jax.ShapeDtypeStruct((out_rows_pad, n_pad), jnp.float32),
        grid_spec=pltpu.PrefetchScalarGridSpec(
            num_scalar_prefetch=0,
            grid=(n_pad // tm,),
            in_specs=[
                pl.BlockSpec((tm, in_lanes), lambda i: (i, 0)),
                pl.BlockSpec((in_lanes, f_pad), lambda i: (0, 0)),
                pl.BlockSpec((max(n_mid, 1), f_pad, f_pad),
                             lambda i: (0, 0, 0)),
                pl.BlockSpec((n_mid + 1, f_pad), lambda i: (0, 0)),
                pl.BlockSpec((out_rows_pad, f_pad), lambda i: (0, 0)),
                pl.BlockSpec((out_rows_pad, 1), lambda i: (0, 0)),
            ],
            out_specs=pl.BlockSpec((out_rows_pad, tm), lambda i: (0, i)),
        ),
        compiler_params=pltpu.CompilerParams(
            dimension_semantics=("parallel",),
            # Working set is ~few MiB; 32 MiB is within every generation's
            # scoped/physical VMEM (incl. v7x's 64 MiB physical).
            vmem_limit_bytes=32 * 1024 * 1024),
        cost_estimate=pl.CostEstimate(
            flops=int(flops),
            transcendentals=int(transcendentals),
            bytes_accessed=int(bytes_accessed)),
    )(x, w0, wm, b, wl, bl)

    # Unpack: (out_rows_pad, n_pad) -> (N, out_features).
    out_t = out_t[:out_rows, :rows]
    out = out_t.reshape(G, out_f, rows).transpose(0, 2, 1).reshape(
        G * rows, out_f)
    return out[:N]


def siren_reference(coords, weights, biases, omegas, last_is_linear):
    """Pure-JAX reference with the original (unfolded) module semantics."""
    h = coords.astype(jnp.float32)
    L = len(weights)
    for i in range(L):
        pre = h @ weights[i] + biases[i]
        if i == L - 1 and last_is_linear:
            h = pre
        else:
            h = jnp.sin(omegas[i] * pre)
    return h


if __name__ == "__main__":
    key = jax.random.PRNGKey(0)

    # (in_f, hidden_f, hidden_layers, out_f, outermost_linear, N,
    #  hidden_matmul_dtype, rtol, atol)
    configs = [
        (2, 32, 2, 1, False, 1003, jnp.float32, 2e-4, 2e-4),
        (2, 64, 1, 3, True, 300, jnp.float32, 2e-4, 2e-4),
        # bf16 hidden-matmul fast path (layer 0 and last layer stay f32),
        # re-validated at a looser tolerance as recommended.
        (2, 64, 2, 3, True, 1000, jnp.bfloat16, 2e-2, 2e-2),
    ]

    for (in_f, hid_f, hid_l, out_f, outermost, N, hdt, rtol, atol) in configs:
        key, kparams, kdata = jax.random.split(key, 3)
        weights, biases, omegas, last_is_linear = init_siren_params(
            kparams, in_f, hid_f, hid_l, out_f,
            outermost_linear=outermost,
            first_omega_0=30.0, hidden_omega_0=30.0)

        coords = jax.random.uniform(kdata, (N, in_f), jnp.float32, -1.0, 1.0)

        out = siren_forward(coords, weights, biases, omegas, last_is_linear,
                            hidden_matmul_dtype=hdt)
        out = jax.block_until_ready(out)

        ref = siren_reference(coords, weights, biases, omegas, last_is_linear)
        assert out.shape == (N, out_f)
        np.testing.assert_allclose(np.asarray(out), np.asarray(ref),
                                   rtol=rtol, atol=atol)

    print("KERNEL_OK")
</pallas_src>

<mosaic_0001>
module attributes {stable_mosaic.version = 11 : i64} {
  func.func @siren_kernel(%arg0: i32, %arg1: memref<128x8xf32, #tpu.memory_space<vmem>>, %arg2: memref<8x128xf32, #tpu.memory_space<vmem>>, %arg3: memref<2x128x128xf32, #tpu.memory_space<vmem>>, %arg4: memref<3x128xf32, #tpu.memory_space<vmem>>, %arg5: memref<8x128xf32, #tpu.memory_space<vmem>>, %arg6: memref<8x1xf32, #tpu.memory_space<vmem>>, %arg7: memref<8x128xf32, #tpu.memory_space<vmem>>) attributes {dimension_semantics = [#tpu.dimension_semantics<parallel>], iteration_bounds = array<i64: 2>, scalar_prefetch = 0 : i64, scratch_operands = 0 : i64, tpu.core_type = #tpu.core_type<tc>, window_params = [{transform_indices = @transform_0, window_bounds = array<i64: 128, 8>}, {pipeline_mode = #tpu.pipeline_mode<synchronous>, transform_indices = @transform_1, window_bounds = array<i64: 8, 128>}, {pipeline_mode = #tpu.pipeline_mode<synchronous>, transform_indices = @transform_2, window_bounds = array<i64: 2, 128, 128>}, {pipeline_mode = #tpu.pipeline_mode<synchronous>, transform_indices = @transform_3, window_bounds = array<i64: 3, 128>}, {pipeline_mode = #tpu.pipeline_mode<synchronous>, transform_indices = @transform_4, window_bounds = array<i64: 8, 128>}, {pipeline_mode = #tpu.pipeline_mode<synchronous>, transform_indices = @transform_5, window_bounds = array<i64: 8, 1>}, {transform_indices = @transform_6, window_bounds = array<i64: 8, 128>}]} {
    %c0 = arith.constant 0 : index
    %c0_0 = arith.constant 0 : index
    %0 = vector.load %arg1[%c0, %c0_0] : memref<128x8xf32, #tpu.memory_space<vmem>>, vector<128x8xf32>
    %c0_1 = arith.constant 0 : index
    %c0_2 = arith.constant 0 : index
    %1 = vector.load %arg2[%c0_1, %c0_2] : memref<8x128xf32, #tpu.memory_space<vmem>>, vector<8x128xf32>
    %cst = arith.constant dense<0.000000e+00> : vector<128x128xf32>
    %2 = tpu.matmul %0, %1, %cst {dimension_numbers = #tpu.dot_dimension_numbers<[1], [0], [0], [1], [0, 0, 1, 1], [], []>} : vector<128x8xf32>, vector<8x128xf32>, vector<128x128xf32> -> vector<128x128xf32>
    %c0_3 = arith.constant 0 : index
    %c0_4 = arith.constant 0 : index
    %3 = vector.load %arg4[%c0_3, %c0_4] : memref<3x128xf32, #tpu.memory_space<vmem>>, vector<1x128xf32>
    %4 = vector.broadcast %3 : vector<1x128xf32> to vector<128x128xf32>
    %5 = arith.addf %2, %4 : vector<128x128xf32>
    %6 = math.sin %5 : vector<128x128xf32>
    %c0_5 = arith.constant 0 : index
    %c0_6 = arith.constant 0 : index
    %c0_7 = arith.constant 0 : index
    %7 = vector.load %arg3[%c0_5, %c0_6, %c0_7] : memref<2x128x128xf32, #tpu.memory_space<vmem>>, vector<1x128x128xf32>
    %8 = vector.shape_cast %7 : vector<1x128x128xf32> to vector<128x128xf32>
    %cst_8 = arith.constant dense<0.000000e+00> : vector<128x128xf32>
    %9 = tpu.matmul %6, %8, %cst_8 {dimension_numbers = #tpu.dot_dimension_numbers<[1], [0], [0], [1], [0, 0, 1, 1], [], []>} : vector<128x128xf32>, vector<128x128xf32>, vector<128x128xf32> -> vector<128x128xf32>
    %c1 = arith.constant 1 : index
    %c0_9 = arith.constant 0 : index
    %10 = vector.load %arg4[%c1, %c0_9] : memref<3x128xf32, #tpu.memory_space<vmem>>, vector<1x128xf32>
    %11 = vector.broadcast %10 : vector<1x128xf32> to vector<128x128xf32>
    %12 = arith.addf %9, %11 : vector<128x128xf32>
    %13 = math.sin %12 : vector<128x128xf32>
    %c1_10 = arith.constant 1 : index
    %c0_11 = arith.constant 0 : index
    %c0_12 = arith.constant 0 : index
    %14 = vector.load %arg3[%c1_10, %c0_11, %c0_12] : memref<2x128x128xf32, #tpu.memory_space<vmem>>, vector<1x128x128xf32>
    %15 = vector.shape_cast %14 : vector<1x128x128xf32> to vector<128x128xf32>
    %cst_13 = arith.constant dense<0.000000e+00> : vector<128x128xf32>
    %16 = tpu.matmul %13, %15, %cst_13 {dimension_numbers = #tpu.dot_dimension_numbers<[1], [0], [0], [1], [0, 0, 1, 1], [], []>} : vector<128x128xf32>, vector<128x128xf32>, vector<128x128xf32> -> vector<128x128xf32>
    %c2 = arith.constant 2 : index
    %c0_14 = arith.constant 0 : index
    %17 = vector.load %arg4[%c2, %c0_14] : memref<3x128xf32, #tpu.memory_space<vmem>>, vector<1x128xf32>
    %18 = vector.broadcast %17 : vector<1x128xf32> to vector<128x128xf32>
    %19 = arith.addf %16, %18 : vector<128x128xf32>
    %20 = math.sin %19 : vector<128x128xf32>
    %c0_15 = arith.constant 0 : index
    %c0_16 = arith.constant 0 : index
    %21 = vector.load %arg5[%c0_15, %c0_16] : memref<8x128xf32, #tpu.memory_space<vmem>>, vector<8x128xf32>
    %cst_17 = arith.constant dense<0.000000e+00> : vector<8x128xf32>
    %22 = tpu.matmul %21, %20, %cst_17 {dimension_numbers = #tpu.dot_dimension_numbers<[1], [1], [0], [0], [0, 0, 1, 0], [], []>} : vector<8x128xf32>, vector<128x128xf32>, vector<8x128xf32> -> vector<8x128xf32>
    %c0_18 = arith.constant 0 : index
    %c0_19 = arith.constant 0 : index
    %23 = vector.load %arg6[%c0_18, %c0_19] : memref<8x1xf32, #tpu.memory_space<vmem>>, vector<8x1xf32>
    %24 = vector.broadcast %23 : vector<8x1xf32> to vector<8x128xf32>
    %25 = arith.addf %22, %24 : vector<8x128xf32>
    %26 = math.sin %25 : vector<8x128xf32>
    %c0_20 = arith.constant 0 : index
    %c0_21 = arith.constant 0 : index
    %27 = vector.load %arg7[%c0_20, %c0_21] : memref<8x128xf32, #tpu.memory_space<vmem>>, vector<8x128xf32>
    tpu.vector_store %arg7[%c0_20, %c0_21], %26 {strides = array<i32>} : memref<8x128xf32, #tpu.memory_space<vmem>>, vector<8x128xf32>,
    return
  }
  func.func @transform_0(%arg0: i32) -> (i32, i32) {
    %c0_i32 = arith.constant 0 : i32
    %c0_i32_0 = arith.constant 0 : i32
    return %arg0, %c0_i32 : i32, i32
  }
  func.func @transform_1(%arg0: i32) -> (i32, i32) {
    %c0_i32 = arith.constant 0 : i32
    %c0_i32_0 = arith.constant 0 : i32
    %c0_i32_1 = arith.constant 0 : i32
    return %c0_i32, %c0_i32_0 : i32, i32
  }
  func.func @transform_2(%arg0: i32) -> (i32, i32, i32) {
    %c0_i32 = arith.constant 0 : i32
    %c0_i32_0 = arith.constant 0 : i32
    %c0_i32_1 = arith.constant 0 : i32
    %c0_i32_2 = arith.constant 0 : i32
    return %c0_i32, %c0_i32_0, %c0_i32_1 : i32, i32, i32
  }
  func.func @transform_3(%arg0: i32) -> (i32, i32) {
    %c0_i32 = arith.constant 0 : i32
    %c0_i32_0 = arith.constant 0 : i32
    %c0_i32_1 = arith.constant 0 : i32
    return %c0_i32, %c0_i32_0 : i32, i32
  }
  func.func @transform_4(%arg0: i32) -> (i32, i32) {
    %c0_i32 = arith.constant 0 : i32
    %c0_i32_0 = arith.constant 0 : i32
    %c0_i32_1 = arith.constant 0 : i32
    return %c0_i32, %c0_i32_0 : i32, i32
  }
  func.func @transform_5(%arg0: i32) -> (i32, i32) {
    %c0_i32 = arith.constant 0 : i32
    %c0_i32_0 = arith.constant 0 : i32
    %c0_i32_1 = arith.constant 0 : i32
    return %c0_i32, %c0_i32_0 : i32, i32
  }
  func.func @transform_6(%arg0: i32) -> (i32, i32) {
    %c0_i32 = arith.constant 0 : i32
    %c0_i32_0 = arith.constant 0 : i32
    return %c0_i32, %arg0 : i32, i32
  }
}

</mosaic_0001>

<llo_original>
// kernel: tpu_custom_call.1
$region0: #{tpu_custom_call.1}
  #allocation0 [shape = 'u32[]', space=smem, size = 0x4, offset = 0x4, fixed_abs, tag = 'smem constant byte address 0x4 - core index']
  #allocation1 [shape = 'u32[144,128]{1,0:T(1,128)}', space=vmem, size = 0x12000, scoped, tag = 'internal scratch']
  %s0 = inlined_call_operand.vmem [shape: f32[256,8], index: 0, kind: input, shape index: {}]
  %s1 = inlined_call_operand.vmem [shape: f32[8,128], index: 1, kind: input, shape index: {}]
  %s2 = inlined_call_operand.vmem [shape: f32[2,128,128], index: 2, kind: input, shape index: {}]
  %s3 = inlined_call_operand.vmem [shape: f32[3,128], index: 3, kind: input, shape index: {}]
  %s4 = inlined_call_operand.vmem [shape: f32[8,128], index: 4, kind: input, shape index: {}]
  %s5 = inlined_call_operand.vmem [shape: f32[8,1], index: 5, kind: input, shape index: {}]
  %s6 = inlined_call_operand.hbm [shape: f32[8,256], index: 6, kind: output, shape index: {}]
  %s7 = sld [smem:[#allocation0]]
  $region57: #{tpu_custom_call.1} parent=0
    _
  %s9 = ssub.s32 1, %s7
  %s10 = scalar_select 0, %s9, %s7
  $region1: #{tpu_custom_call.1} parent=0
    #allocation2 [shape = 'u8[8192]{0}', space=vmem, size = 0x2000, scoped, tag = 'output window, operand 0']
    #allocation3 [shape = 's32[2]{0}', space=sflag, size = 0x8, scoped, tag = 'scoped memory for tpu_custom_call.1']
    %11 = vsyncpa [#allocation3], 0
    %s12 = scalar_lea.sflag [#allocation3], 1
    %13 = vsyncpa %s12, 0
    loop: start=0, step=1, limit=4
    $region2: #{tpu_custom_call.1} parent=1 // loop_pre_header
      _
    $region3: #{tpu_custom_call.1} parent=1 // loop_header
      %s15 = sphi 0, %s19
      %p16 = scmp.ge.s32.totalorder %s15, 4
      %s25 = sphi 0, %s27
      %s28 = sphi 0, %s25
      %s29 = sphi 0, %s28
      %s45 = sphi 0, %s29
      %s49 = sphi 0, %s49
      %s51 = sphi 0, %s49
      %s52 = sphi 0, %s51
      %s66 = sphi 0, %s52
      %s70 = sphi 0, %s70
      %s72 = sphi 0, %s70
      %s73 = sphi 0, %s72
      %s87 = sphi 0, %s73
      %s91 = sphi 0, %s91
      %s93 = sphi 0, %s91
      %s94 = sphi 0, %s93
      %s108 = sphi 0, %s94
      %s112 = sphi 0, %s112
      %s114 = sphi 0, %s112
      %s115 = sphi 0, %s114
      %s129 = sphi 0, %s115
      %s133 = sphi 0, %s133
      %s135 = sphi 0, %s133
      %s136 = sphi 0, %s135
      %s150 = sphi 0, %s136
      %s156 = sphi 0, %s158
      %s159 = sphi 0, %s156
      %s160 = sphi 0, %s159
      %s176 = sphi 0, %s160
    $region4: #{tpu_custom_call.1} parent=1 // loop_header_branch
      %18 = sbr.rel (%p16) target = $region8
    $region5: #{tpu_custom_call.1} parent=1 // loop_body
      %s20 = ssub.s32 %s15, 1
      %s21 = ssub.s32 %s15, 2
      %s22 = sadd.s32 %s15, 1
      %s23 = ssub.s32 %s15, %s22
      %p24 = scmp.eq.s32.totalorder %s23, 0
      %s26 = sadd.s32 %s25, 1
      %s27 = scalar_select %p24, %s25, %s26
      %p30 = pneg %p24
      %p31 = scmp.eq.s32.totalorder %s15, 1
      %p32 = por %p30, %p31
      %p33 = scmp.ne.s32.totalorder %s25, %s28
      %p34 = scmp.eq.s32.totalorder %s15, 0
      %p35 = por %p33, %p34
      %p36 = scmp.ne.s32.totalorder %s25, %s28
      %p37 = scmp.eq.s32.totalorder %s20, 1
      %p38 = por %p36, %p37
      %p39 = scmp.ne.s32.totalorder %s28, %s29
      %p40 = scmp.eq.s32.totalorder %s20, 0
      %p41 = por %p39, %p40
      %p42 = scmp.ne.s32.totalorder %s28, %s29
      %p43 = scmp.eq.s32.totalorder %s21, 1
      %p44 = por %p42, %p43
      %p46 = scmp.ne.s32.totalorder %s29, %s45
      %p47 = scmp.eq.s32.totalorder %s21, 0
      %p48 = por %p46, %p47
      %s50 = sadd.s32 %s49, 1
      %p53 = scmp.eq.s32.totalorder %s15, 1
      %p54 = scmp.ne.s32.totalorder %s49, %s51
      %p55 = scmp.eq.s32.totalorder %s15, 0
      %p56 = por %p54, %p55
      %p57 = scmp.ne.s32.totalorder %s49, %s51
      %p58 = scmp.eq.s32.totalorder %s20, 1
      %p59 = por %p57, %p58
      %p60 = scmp.ne.s32.totalorder %s51, %s52
      %p61 = scmp.eq.s32.totalorder %s20, 0
      %p62 = por %p60, %p61
      %p63 = scmp.ne.s32.totalorder %s51, %s52
      %p64 = scmp.eq.s32.totalorder %s21, 1
      %p65 = por %p63, %p64
      %p67 = scmp.ne.s32.totalorder %s52, %s66
      %p68 = scmp.eq.s32.totalorder %s21, 0
      %p69 = por %p67, %p68
      %s71 = sadd.s32 %s70, 1
      %p74 = scmp.eq.s32.totalorder %s15, 1
      %p75 = scmp.ne.s32.totalorder %s70, %s72
      %p76 = scmp.eq.s32.totalorder %s15, 0
      %p77 = por %p75, %p76
      %p78 = scmp.ne.s32.totalorder %s70, %s72
      %p79 = scmp.eq.s32.totalorder %s20, 1
      %p80 = por %p78, %p79
      %p81 = scmp.ne.s32.totalorder %s72, %s73
      %p82 = scmp.eq.s32.totalorder %s20, 0
      %p83 = por %p81, %p82
      %p84 = scmp.ne.s32.totalorder %s72, %s73
      %p85 = scmp.eq.s32.totalorder %s21, 1
      %p86 = por %p84, %p85
      %p88 = scmp.ne.s32.totalorder %s73, %s87
      %p89 = scmp.eq.s32.totalorder %s21, 0
      %p90 = por %p88, %p89
      %s92 = sadd.s32 %s91, 1
      %p95 = scmp.eq.s32.totalorder %s15, 1
      %p96 = scmp.ne.s32.totalorder %s91, %s93
      %p97 = scmp.eq.s32.totalorder %s15, 0
      %p98 = por %p96, %p97
      %p99 = scmp.ne.s32.totalorder %s91, %s93
      %p100 = scmp.eq.s32.totalorder %s20, 1
      %p101 = por %p99, %p100
      %p102 = scmp.ne.s32.totalorder %s93, %s94
      %p103 = scmp.eq.s32.totalorder %s20, 0
      %p104 = por %p102, %p103
      %p105 = scmp.ne.s32.totalorder %s93, %s94
      %p106 = scmp.eq.s32.totalorder %s21, 1
      %p107 = por %p105, %p106
      %p109 = scmp.ne.s32.totalorder %s94, %s108
      %p110 = scmp.eq.s32.totalorder %s21, 0
      %p111 = por %p109, %p110
      %s113 = sadd.s32 %s112, 1
      %p116 = scmp.eq.s32.totalorder %s15, 1
      %p117 = scmp.ne.s32.totalorder %s112, %s114
      %p118 = scmp.eq.s32.totalorder %s15, 0
      %p119 = por %p117, %p118
      %p120 = scmp.ne.s32.totalorder %s112, %s114
      %p121 = scmp.eq.s32.totalorder %s20, 1
      %p122 = por %p120, %p121
      %p123 = scmp.ne.s32.totalorder %s114, %s115
      %p124 = scmp.eq.s32.totalorder %s20, 0
      %p125 = por %p123, %p124
      %p126 = scmp.ne.s32.totalorder %s114, %s115
      %p127 = scmp.eq.s32.totalorder %s21, 1
      %p128 = por %p126, %p127
      %p130 = scmp.ne.s32.totalorder %s115, %s129
      %p131 = scmp.eq.s32.totalorder %s21, 0
      %p132 = por %p130, %p131
      %s134 = sadd.s32 %s133, 1
      %p137 = scmp.eq.s32.totalorder %s15, 1
      %p138 = scmp.ne.s32.totalorder %s133, %s135
      %p139 = scmp.eq.s32.totalorder %s15, 0
      %p140 = por %p138, %p139
      %p141 = scmp.ne.s32.totalorder %s133, %s135
      %p142 = scmp.eq.s32.totalorder %s20, 1
      %p143 = por %p141, %p142
      %p144 = scmp.ne.s32.totalorder %s135, %s136
      %p145 = scmp.eq.s32.totalorder %s20, 0
      %p146 = por %p144, %p145
      %p147 = scmp.ne.s32.totalorder %s135, %s136
      %p148 = scmp.eq.s32.totalorder %s21, 1
      %p149 = por %p147, %p148
      %p151 = scmp.ne.s32.totalorder %s136, %s150
      %p152 = scmp.eq.s32.totalorder %s21, 0
      %p153 = por %p151, %p152
      %s154 = ssub.s32 %s15, %s22
      %p155 = scmp.eq.s32.totalorder %s154, 0
      %s157 = sadd.s32 %s156, 1
      %s158 = scalar_select %p155, %s156, %s157
      %p161 = pneg %p155
      %p162 = scmp.eq.s32.totalorder %s15, 1
      %p163 = por %p161, %p162
      %p164 = scmp.ne.s32.totalorder %s156, %s159
      %p165 = scmp.eq.s32.totalorder %s15, 0
      %p166 = por %p164, %p165
      %p167 = scmp.ne.s32.totalorder %s156, %s159
      %p168 = scmp.eq.s32.totalorder %s20, 1
      %p169 = por %p167, %p168
      %p170 = scmp.ne.s32.totalorder %s159, %s160
      %p171 = scmp.eq.s32.totalorder %s20, 0
      %p172 = por %p170, %p171
      %p173 = scmp.ne.s32.totalorder %s159, %s160
      %p174 = scmp.eq.s32.totalorder %s21, 1
      %p175 = por %p173, %p174
      %p177 = scmp.ne.s32.totalorder %s160, %s176
      %p178 = scmp.eq.s32.totalorder %s21, 0
      %p179 = por %p177, %p178
      %p180 = scmp.le.s32.totalorder 1, %s15
      %p181 = scmp.lt.s32.totalorder %s15, 3
      %p182 = pnand %p180, %p181
      %p183 = pneg %p182
      // Predicated region
      $region9: #{tpu_custom_call.1} parent=5 // pred_check
        _
      $region10: #{tpu_custom_call.1} parent=5 // pred_check_branch
        %185 = sbr.rel (%p182) target = $region12
      $region11: #{tpu_custom_call.1} parent=5 // pred_region
        %s186 = ssub.s32 %s15, 1
        // Predicated region
        $region13: #{tpu_custom_call.1} parent=11 // pred_check
          %p187 = pneg %p62
        $region14: #{tpu_custom_call.1} parent=11 // pred_check_branch
          %189 = sbr.rel (%p187) target = $region16
        $region15: #{tpu_custom_call.1} parent=11 // pred_region
          _
        $region16: #{tpu_custom_call.1} parent=11 // pred_fallthru
          _
        // Predicated region
        $region17: #{tpu_custom_call.1} parent=11 // pred_check
          %p190 = pneg %p83
        $region18: #{tpu_custom_call.1} parent=11 // pred_check_branch
          %192 = sbr.rel (%p190) target = $region20
        $region19: #{tpu_custom_call.1} parent=11 // pred_region
          _
        $region20: #{tpu_custom_call.1} parent=11 // pred_fallthru
          _
        // Predicated region
        $region21: #{tpu_custom_call.1} parent=11 // pred_check
          %p193 = pneg %p104
        $region22: #{tpu_custom_call.1} parent=11 // pred_check_branch
          %195 = sbr.rel (%p193) target = $region24
        $region23: #{tpu_custom_call.1} parent=11 // pred_region
          _
        $region24: #{tpu_custom_call.1} parent=11 // pred_fallthru
          _
        // Predicated region
        $region25: #{tpu_custom_call.1} parent=11 // pred_check
          %p196 = pneg %p125
        $region26: #{tpu_custom_call.1} parent=11 // pred_check_branch
          %198 = sbr.rel (%p196) target = $region28
        $region27: #{tpu_custom_call.1} parent=11 // pred_region
          _
        $region28: #{tpu_custom_call.1} parent=11 // pred_fallthru
          _
        // Predicated region
        $region29: #{tpu_custom_call.1} parent=11 // pred_check
          %p199 = pneg %p146
        $region30: #{tpu_custom_call.1} parent=11 // pred_check_branch
          %201 = sbr.rel (%p199) target = $region32
        $region31: #{tpu_custom_call.1} parent=11 // pred_region
          _
        $region32: #{tpu_custom_call.1} parent=11 // pred_fallthru
          _
      $region12: #{tpu_custom_call.1} parent=5 // pred_fallthru
        _
      %p202 = scmp.lt.s32.totalorder %s15, 2
      // Predicated region
      $region33: #{tpu_custom_call.1} parent=5 // pred_check
        %p203 = pneg %p202
      $region34: #{tpu_custom_call.1} parent=5 // pred_check_branch
        %205 = sbr.rel (%p203) target = $region36
      $region35: #{tpu_custom_call.1} parent=5 // pred_region
        // Predicated region
        $region37: #{tpu_custom_call.1} parent=35 // pred_check
          %p206 = pneg %p35
        $region38: #{tpu_custom_call.1} parent=35 // pred_check_branch
          %208 = sbr.rel (%p206) target = $region40
        $region39: #{tpu_custom_call.1} parent=35 // pred_region
          %s209 = smul.u32 16, %s15
          %p210 = scmp.lt.s32.totalorder %s209, 31
          %s211 = scalar_select %p210, %s209, 31
          %s212 = smul.addr %s211, 8
          %s213 = scalar_lea.vmem %s0, %s212
          %s214 = smul.u32 16, %s15
        $region40: #{tpu_custom_call.1} parent=35 // pred_fallthru
          _
      $region36: #{tpu_custom_call.1} parent=5 // pred_fallthru
        _
      %p215 = scmp.le.s32.totalorder 1, %s15
      %p216 = scmp.lt.s32.totalorder %s15, 3
      %p217 = pnand %p215, %p216
      %p218 = pneg %p217
      // Predicated region
      $region41: #{tpu_custom_call.1} parent=5 // pred_check
        _
      $region42: #{tpu_custom_call.1} parent=5 // pred_check_branch
        %220 = sbr.rel (%p217) target = $region44
      $region43: #{tpu_custom_call.1} parent=5 // pred_region
        %s221 = ssub.s32 %s15, 1
        %s222 = smul.u32 16, %s20
        %p223 = scmp.lt.s32.totalorder %s222, 31
        %s224 = scalar_select %p223, %s222, 31
        %s225 = smul.addr %s224, 8
        %s226 = scalar_lea.vmem %s0, %s225
        %p227 = pneg %p41
        %p228 = pneg %p38
        %p229 = pneg %p62
        %p230 = pneg %p59
        %p231 = pneg %p83
        %p232 = pneg %p80
        %p233 = pneg %p104
        %p234 = pneg %p101
        %p235 = pneg %p125
        %p236 = pneg %p122
        %p237 = pneg %p146
        %p238 = pneg %p143
        %p239 = pneg %p172
        %p240 = pneg %p169
        %s241 = sand.u32 %s159, 1
        %s242 = scalar_lea.sflag [#allocation3], %s241
        %s243 = sand.u32 %s159, 1
        %s244 = smul.addr %s243, 8
        %s245 = scalar_lea.vmem [#allocation2], %s244
        %s246 = smul.u32 16, %s20
        %p247 = scmp.lt.s32.totalorder %s246, 31
        %s248 = scalar_select %p247, %s246, 31
        %s249 = smul.addr %s248, 8
        %s250 = scalar_lea.vmem %s0, %s249
        %s251 = smul.u32 16, %s20
        %v252 = vld [vmem:[%s250] sm:$0xff]
        %v253 = vld [vmem:[%s250 + $0x8] sm:$0xff]
        %v254 = vld [vmem:[%s250 + $0x10] sm:$0xff]
        %v255 = vld [vmem:[%s250 + $0x18] sm:$0xff]
        %v256 = vld [vmem:[%s250 + $0x20] sm:$0xff]
        %v257 = vld [vmem:[%s250 + $0x28] sm:$0xff]
        %v258 = vld [vmem:[%s250 + $0x30] sm:$0xff]
        %v259 = vld [vmem:[%s250 + $0x38] sm:$0xff]
        %v260 = vld [vmem:[%s250 + $0x40] sm:$0xff]
        %v261 = vld [vmem:[%s250 + $0x48] sm:$0xff]
        %v262 = vld [vmem:[%s250 + $0x50] sm:$0xff]
        %v263 = vld [vmem:[%s250 + $0x58] sm:$0xff]
        %v264 = vld [vmem:[%s250 + $0x60] sm:$0xff]
        %v265 = vld [vmem:[%s250 + $0x68] sm:$0xff]
        %v266 = vld [vmem:[%s250 + $0x70] sm:$0xff]
        %v267 = vld [vmem:[%s250 + $0x78] sm:$0xff]
        %v268 = vld [vmem:[%s1] sm:$0xff]
        %v269 = vld [vmem:[%s3] sm:$0x1]
        %v270 = vlaneseq
        %v271 = vshrl.u32 %v270, 7
        %v272 = vsub.s32 0, %v271
        %v273 = vrot.slane %v269, %v272
        %vm274 = vcmask 64512
        %v276 = vsel %vm274, %v252, 0
        %v279 = vsel %vm274, %v253, 0
        %v282 = vsel %vm274, %v254, 0
        %v285 = vsel %vm274, %v255, 0
        %v288 = vsel %vm274, %v256, 0
        %v291 = vsel %vm274, %v257, 0
        %v294 = vsel %vm274, %v258, 0
        %v297 = vsel %vm274, %v259, 0
        %v300 = vsel %vm274, %v260, 0
        %v303 = vsel %vm274, %v261, 0
        %v306 = vsel %vm274, %v262, 0
        %v309 = vsel %vm274, %v263, 0
        %v312 = vsel %vm274, %v264, 0
        %v315 = vsel %vm274, %v265, 0
        %v318 = vsel %vm274, %v266, 0
        %v321 = vsel %vm274, %v267, 0
        %323 = vmatprep.subr.mxu0 0.0
        %324 = vmatpush1.msra.mxu0 %v268
        %325 = vmatprep.subr.mxu0 0.0
        %326 = vmatpush1.msra.mxu0 0.0
        %327 = vmatprep.subr.mxu0 0.0
        %328 = vmatpush1.msra.mxu0 0.0
        %329 = vmatprep.subr.mxu0 0.0
        %330 = vmatpush1.msra.mxu0 0.0
        %331 = vmatprep.subr.mxu0 0.0
        %332 = vmatpush1.msra.mxu0 0.0
        %333 = vmatprep.subr.mxu0 0.0
        %334 = vmatpush1.msra.mxu0 0.0
        %335 = vmatprep.subr.mxu0 0.0
        %336 = vmatpush1.msra.mxu0 0.0
        %337 = vmatprep.subr.mxu0 0.0
        %338 = vmatpush1.msra.mxu0 0.0
        %339 = vmatprep.subr.mxu0 0.0
        %340 = vmatpush1.msra.mxu0 0.0
        %341 = vmatprep.subr.mxu0 0.0
        %342 = vmatpush1.msra.mxu0 0.0
        %343 = vmatprep.subr.mxu0 0.0
        %344 = vmatpush1.msra.mxu0 0.0
        %345 = vmatprep.subr.mxu0 0.0
        %346 = vmatpush1.msra.mxu0 0.0
        %347 = vmatprep.subr.mxu0 0.0
        %348 = vmatpush1.msra.mxu0 0.0
        %349 = vmatprep.subr.mxu0 0.0
        %350 = vmatpush1.msra.mxu0 0.0
        %351 = vmatprep.subr.mxu0 0.0
        %352 = vmatpush1.msra.mxu0 0.0
        %353 = vmatprep.subr.mxu0 0.0
        %354 = vmatpush1.msra.mxu0 0.0
        %355 = vmatprep.subr.mxu0 0.0
        %356 = vmatpush1.msra.mxu0 0.0
        %357 = vmatprep.subr.mxu0 0.0
        %358 = vmatpush1.msra.mxu0 0.0
        %359 = vmatprep.subr.mxu0 0.0
        %360 = vmatpush1.msra.mxu0 0.0
        %361 = vmatprep.subr.mxu0 0.0
        %362 = vmatpush1.msra.mxu0 0.0
        %363 = vmatprep.subr.mxu0 0.0
        %364 = vmatpush1.msra.mxu0 0.0
        %365 = vmatprep.subr.mxu0 0.0
        %366 = vmatpush1.msra.mxu0 0.0
        %367 = vmatprep.subr.mxu0 0.0
        %368 = vmatpush1.msra.mxu0 0.0
        %369 = vmatprep.subr.mxu0 0.0
        %370 = vmatpush1.msra.mxu0 0.0
        %371 = vmatprep.subr.mxu0 0.0
        %372 = vmatpush1.msra.mxu0 0.0
        %373 = vmatprep.subr.mxu0 0.0
        %374 = vmatpush1.msra.mxu0 0.0
        %375 = vmatprep.subr.mxu0 0.0
        %376 = vmatpush1.msra.mxu0 0.0
        %377 = vmatprep.subr.mxu0 0.0
        %378 = vmatpush1.msra.mxu0 0.0
        %379 = vmatprep.subr.mxu0 0.0
        %380 = vmatpush1.msra.mxu0 0.0
        %381 = vmatprep.subr.mxu0 0.0
        %382 = vmatpush1.msra.mxu0 0.0
        %383 = vmatprep.subr.mxu0 0.0
        %384 = vmatpush1.msra.mxu0 0.0
        %385 = vmatprep.subr.mxu0 0.0
        %386 = vmatpush1.msra.mxu0 0.0
        %387 = vmatprep.mubr.f32.mxu0 0.0
        %388 = vmatmul.mubr.f32.gmra.mrb[0].mxu0 %v276
        %v389 = vpop.f32.mrb[0].mxu0
        %v390 = vadd.f32 %v273, %v389
        %v391 = vpop.f32.mrb[0].mxu0
        %392 = vmatprep.mubr.f32.mxu0 0.0
        %393 = vmatmul.mubr.f32.gmra.mrb[0].mxu0 %v279
        %v394 = vpop.f32.mrb[0].mxu0
        %v395 = vadd.f32 %v273, %v394
        %v396 = vpop.f32.mrb[0].mxu0
        %397 = vmatprep.mubr.f32.mxu0 0.0
        %398 = vmatmul.mubr.f32.gmra.mrb[0].mxu0 %v282
        %v399 = vpop.f32.mrb[0].mxu0
        %v400 = vadd.f32 %v273, %v399
        %v401 = vpop.f32.mrb[0].mxu0
        %402 = vmatprep.mubr.f32.mxu0 0.0
        %403 = vmatmul.mubr.f32.gmra.mrb[0].mxu0 %v285
        %v404 = vpop.f32.mrb[0].mxu0
        %v405 = vadd.f32 %v273, %v404
        %v406 = vpop.f32.mrb[0].mxu0
        %407 = vmatprep.mubr.f32.mxu0 0.0
        %408 = vmatmul.mubr.f32.gmra.mrb[0].mxu0 %v288
        %v409 = vpop.f32.mrb[0].mxu0
        %v410 = vadd.f32 %v273, %v409
        %v411 = vpop.f32.mrb[0].mxu0
        %412 = vmatprep.mubr.f32.mxu0 0.0
        %413 = vmatmul.mubr.f32.gmra.mrb[0].mxu0 %v291
        %v414 = vpop.f32.mrb[0].mxu0
        %v415 = vadd.f32 %v273, %v414
        %v416 = vpop.f32.mrb[0].mxu0
        %417 = vmatprep.mubr.f32.mxu0 0.0
        %418 = vmatmul.mubr.f32.gmra.mrb[0].mxu0 %v294
        %v419 = vpop.f32.mrb[0].mxu0
        %v420 = vadd.f32 %v273, %v419
        %v421 = vpop.f32.mrb[0].mxu0
        %422 = vmatprep.mubr.f32.mxu0 0.0
        %423 = vmatmul.mubr.f32.gmra.mrb[0].mxu0 %v297
        %v424 = vpop.f32.mrb[0].mxu0
        %v425 = vadd.f32 %v273, %v424
        %v426 = vpop.f32.mrb[0].mxu0
        %427 = vmatprep.mubr.f32.mxu0 0.0
        %428 = vmatmul.mubr.f32.gmra.mrb[0].mxu0 %v300
        %v429 = vpop.f32.mrb[0].mxu0
        %v430 = vadd.f32 %v273, %v429
        %v431 = vpop.f32.mrb[0].mxu0
        %432 = vmatprep.mubr.f32.mxu0 0.0
        %433 = vmatmul.mubr.f32.gmra.mrb[0].mxu0 %v303
        %v434 = vpop.f32.mrb[0].mxu0
        %v435 = vadd.f32 %v273, %v434
        %v436 = vpop.f32.mrb[0].mxu0
        %437 = vmatprep.mubr.f32.mxu0 0.0
        %438 = vmatmul.mubr.f32.gmra.mrb[0].mxu0 %v306
        %v439 = vpop.f32.mrb[0].mxu0
        %v440 = vadd.f32 %v273, %v439
        %v441 = vpop.f32.mrb[0].mxu0
        %442 = vmatprep.mubr.f32.mxu0 0.0
        %443 = vmatmul.mubr.f32.gmra.mrb[0].mxu0 %v309
        %v444 = vpop.f32.mrb[0].mxu0
        %v445 = vadd.f32 %v273, %v444
        %v446 = vpop.f32.mrb[0].mxu0
        %447 = vmatprep.mubr.f32.mxu0 0.0
        %448 = vmatmul.mubr.f32.gmra.mrb[0].mxu0 %v312
        %v449 = vpop.f32.mrb[0].mxu0
        %v450 = vadd.f32 %v273, %v449
        %v451 = vpop.f32.mrb[0].mxu0
        %452 = vmatprep.mubr.f32.mxu0 0.0
        %453 = vmatmul.mubr.f32.gmra.mrb[0].mxu0 %v315
        %v454 = vpop.f32.mrb[0].mxu0
        %v455 = vadd.f32 %v273, %v454
        %v456 = vpop.f32.mrb[0].mxu0
        %457 = vmatprep.mubr.f32.mxu0 0.0
        %458 = vmatmul.mubr.f32.gmra.mrb[0].mxu0 %v318
        %v459 = vpop.f32.mrb[0].mxu0
        %v460 = vadd.f32 %v273, %v459
        %v461 = vpop.f32.mrb[0].mxu0
        %462 = vmatprep.mubr.f32.mxu0 0.0
        %463 = vmatmul.mubr.f32.gmra.mrb[0].mxu0 %v321
        %v464 = vpop.f32.mrb[0].mxu0
        %v465 = vadd.f32 %v273, %v464
        %v466 = vpop.f32.mrb[0].mxu0
        %467 = vdwg.mxu0
        %v468 = vand.u32 2147483647, %v390
        %vm469 = vcmp.le.f32.partialorder %v468, 0.7853982
        %vm470 = vcmp.lt.s32.totalorder %v390, 0
        %v471 = vand.u32 %v390, 2139095040
        %v472 = vshrl.u32 %v471, 23
        %v473 = vsub.s32 %v472, 127
        %v474 = vand.u32 2147483647, %v390
        %v475 = vand.u32 %v474, 8388607
        %v476 = vor.u32 %v475, 8388608
        %v477 = vsub.s32 0, %v476
        %v478 = vadd.s32 %v473, 1
        %vm479 = vcmp.gt.s32.totalorder %v478, 0
        %v480 = vsel %vm479, %v478, 0
        %v481 = vshrl.u32 %v480, 5
        %v482 = vand.u32 %v480, 31
        %v483 = vsub.s32 32, %v482
        %v484 = vshrl.u32 683565275, %v483
        %v485 = vshll.u32 683565275, %v482
        %v486 = vshrl.u32 2475754826, %v483
        %v487 = vor.u32 %v485, %v486
        %v488 = vshll.u32 2475754826, %v482
        %v489 = vshrl.u32 2131351028, %v483
        %v490 = vor.u32 %v488, %v489
        %v491 = vshll.u32 2131351028, %v482
        %v492 = vshrl.u32 2102212464, %v483
        %v493 = vor.u32 %v491, %v492
        %v494 = vshll.u32 2102212464, %v482
        %v495 = vshrl.u32 920167782, %v483
        %v496 = vor.u32 %v494, %v495
        %v497 = vshll.u32 920167782, %v482
        %v498 = vshrl.u32 1326507024, %v483
        %v499 = vor.u32 %v497, %v498
        %vm500 = vcmp.lt.s32.totalorder %v481, 1
        %vm501 = vcmp.lt.s32.totalorder %v481, 2
        %vm502 = vcmp.lt.s32.totalorder %v481, 3
        %vm503 = vcmp.lt.s32.totalorder %v481, 4
        %v504 = vsel %vm500, %v484, %v487
        %v505 = vsel %vm503, %v493, 2102212464
        %v506 = vsel %vm502, %v490, %v505
        %v507 = vsel %vm501, %v504, %v506
        %v508 = vsel %vm500, %v487, %v490
        %v509 = vsel %vm503, %v496, 920167782
        %v510 = vsel %vm502, %v493, %v509
        %v511 = vsel %vm501, %v508, %v510
        %v512 = vsel %vm500, %v490, %v493
        %v513 = vsel %vm503, %v499, 1326507024
        %v514 = vsel %vm502, %v496, %v513
        %v515 = vsel %vm501, %v512, %v514
        %v516 = vshll.u32 %v476, 8
        %v517 = vmul.u32.u64.compose %v516, %v515
        %v518 = vextract.low.u32 %v517
        %v519 = vextract.high.u32 %v517
        %v520 = vmul.u32.u64.compose %v516, %v511
        %v521 = vextract.low.u32 %v520
        %v522 = vextract.high.u32 %v520
        %v523 = vmul.u32 %v516, %v507
        %v524 = vadd.s32 %v519, %v521
        %vm525 = vc.u32 %v519, %v521
        %v526 = vadd.s32 %v522, 1
        %v527 = vsel %vm525, %v526, %v522
        %v528 = vadd.s32 %v523, %v527
        %v529 = vadd.s32 %v528, 536870912
        %v530 = vshrl.u32 %v529, 30
        %v531 = vshll.u32 %v530, 30
        %v532 = vsub.s32 %v528, %v531
        %vm533 = vcmp.lt.s32.totalorder %v532, 0
        %v534 = vsub.s32 0, %v532
        %v535 = vsel %vm533, %v534, %v532
        %v536 = vclz %v535
        %v537 = vsub.s32 %v536, 2
        %vm538 = vcmp.gt.s32.totalorder 0, %v537
        %v539 = vsel %vm538, 0, %v537
        %v540 = vsub.s32 32, %v539
        %v541 = vshll.u32 %v532, %v539
        %v542 = vshrl.u32 %v524, %v540
        %v543 = vor.u32 %v541, %v542
        %v544 = vsub.s32 4294967266, %v539
        %v545 = vadd.s32 %v544, 127
        %v546 = vshll.u32 %v545, 23
        %v547 = vor.u32 4788187, %v546
        %v548 = vand.u32 2147483647, %v547
        %v550 = vcvt.s32.f32 %v543
        %v551 = vmul.f32 %v550, %v548
        %v552 = vxor.u32 %v551, 2147483648
        %v553 = vsel %vm470, %v552, %v551
        %v554 = vsub.s32 4, %v530
        %v555 = vsel %vm470, %v554, %v530
        %v556 = vsel %vm469, %v390, %v553
        %v557 = vsel %vm469, 0, %v555
        %v558 = vcosq.f32.pop %v556
        %v559 = vsinq.f32.pop %v556
        %vm560 = vweird.f32 %v390
        %v561 = vadd.s32 %v557, 3
        %v562 = vand.u32 %v561, 3
        %vm563 = vcmp.lt.s32.totalorder %v562, 2
        %vm564 = vcmp.eq.s32.totalorder %v562, 0
        %v565 = vxor.u32 %v559, 2147483648
        %v566 = vsel %vm564, %v558, %v565
        %vm567 = vcmp.eq.s32.totalorder %v562, 2
        %v568 = vxor.u32 %v558, 2147483648
        %v569 = vsel %vm567, %v568, %v559
        %v570 = vsel %vm563, %v566, %v569
        %v571 = vsel %vm560, nan, %v570
        %v572 = vand.u32 2147483647, %v395
        %vm573 = vcmp.le.f32.partialorder %v572, 0.7853982
        %vm574 = vcmp.lt.s32.totalorder %v395, 0
        %v575 = vand.u32 %v395, 2139095040
        %v576 = vshrl.u32 %v575, 23
        %v577 = vsub.s32 %v576, 127
        %v578 = vand.u32 2147483647, %v395
        %v579 = vand.u32 %v578, 8388607
        %v580 = vor.u32 %v579, 8388608
        %v581 = vsub.s32 0, %v580
        %v582 = vadd.s32 %v577, 1
        %vm583 = vcmp.gt.s32.totalorder %v582, 0
        %v584 = vsel %vm583, %v582, 0
        %v585 = vshrl.u32 %v584, 5
        %v586 = vand.u32 %v584, 31
        %v587 = vsub.s32 32, %v586
        %v588 = vshrl.u32 683565275, %v587
        %v589 = vshll.u32 683565275, %v586
        %v590 = vshrl.u32 2475754826, %v587
        %v591 = vor.u32 %v589, %v590
        %v592 = vshll.u32 2475754826, %v586
        %v593 = vshrl.u32 2131351028, %v587
        %v594 = vor.u32 %v592, %v593
        %v595 = vshll.u32 2131351028, %v586
        %v596 = vshrl.u32 2102212464, %v587
        %v597 = vor.u32 %v595, %v596
        %v598 = vshll.u32 2102212464, %v586
        %v599 = vshrl.u32 920167782, %v587
        %v600 = vor.u32 %v598, %v599
        %v601 = vshll.u32 920167782, %v586
        %v602 = vshrl.u32 1326507024, %v587
        %v603 = vor.u32 %v601, %v602
        %vm604 = vcmp.lt.s32.totalorder %v585, 1
        %vm605 = vcmp.lt.s32.totalorder %v585, 2
        %vm606 = vcmp.lt.s32.totalorder %v585, 3
        %vm607 = vcmp.lt.s32.totalorder %v585, 4
        %v608 = vsel %vm604, %v588, %v591
        %v609 = vsel %vm607, %v597, 2102212464
        %v610 = vsel %vm606, %v594, %v609
        %v611 = vsel %vm605, %v608, %v610
        %v612 = vsel %vm604, %v591, %v594
        %v613 = vsel %vm607, %v600, 920167782
        %v614 = vsel %vm606, %v597, %v613
        %v615 = vsel %vm605, %v612, %v614
        %v616 = vsel %vm604, %v594, %v597
        %v617 = vsel %vm607, %v603, 1326507024
        %v618 = vsel %vm606, %v600, %v617
        %v619 = vsel %vm605, %v616, %v618
        %v620 = vshll.u32 %v580, 8
        %v621 = vmul.u32.u64.compose %v620, %v619
        %v622 = vextract.low.u32 %v621
        %v623 = vextract.high.u32 %v621
        %v624 = vmul.u32.u64.compose %v620, %v615
        %v625 = vextract.low.u32 %v624
        %v626 = vextract.high.u32 %v624
        %v627 = vmul.u32 %v620, %v611
        %v628 = vadd.s32 %v623, %v625
        %vm629 = vc.u32 %v623, %v625
        %v630 = vadd.s32 %v626, 1
        %v631 = vsel %vm629, %v630, %v626
        %v632 = vadd.s32 %v627, %v631
        %v633 = vadd.s32 %v632, 536870912
        %v634 = vshrl.u32 %v633, 30
        %v635 = vshll.u32 %v634, 30
        %v636 = vsub.s32 %v632, %v635
        %vm637 = vcmp.lt.s32.totalorder %v636, 0
        %v638 = vsub.s32 0, %v636
        %v639 = vsel %vm637, %v638, %v636
        %v640 = vclz %v639
        %v641 = vsub.s32 %v640, 2
        %vm642 = vcmp.gt.s32.totalorder 0, %v641
        %v643 = vsel %vm642, 0, %v641
        %v644 = vsub.s32 32, %v643
        %v645 = vshll.u32 %v636, %v643
        %v646 = vshrl.u32 %v628, %v644
        %v647 = vor.u32 %v645, %v646
        %v648 = vsub.s32 4294967266, %v643
        %v649 = vadd.s32 %v648, 127
        %v650 = vshll.u32 %v649, 23
        %v651 = vor.u32 4788187, %v650
        %v652 = vand.u32 2147483647, %v651
        %v654 = vcvt.s32.f32 %v647
        %v655 = vmul.f32 %v654, %v652
        %v656 = vxor.u32 %v655, 2147483648
        %v657 = vsel %vm574, %v656, %v655
        %v658 = vsub.s32 4, %v634
        %v659 = vsel %vm574, %v658, %v634
        %v660 = vsel %vm573, %v395, %v657
        %v661 = vsel %vm573, 0, %v659
        %v662 = vcosq.f32.pop %v660
        %v663 = vsinq.f32.pop %v660
        %vm664 = vweird.f32 %v395
        %v665 = vadd.s32 %v661, 3
        %v666 = vand.u32 %v665, 3
        %vm667 = vcmp.lt.s32.totalorder %v666, 2
        %vm668 = vcmp.eq.s32.totalorder %v666, 0
        %v669 = vxor.u32 %v663, 2147483648
        %v670 = vsel %vm668, %v662, %v669
        %vm671 = vcmp.eq.s32.totalorder %v666, 2
        %v672 = vxor.u32 %v662, 2147483648
        %v673 = vsel %vm671, %v672, %v663
        %v674 = vsel %vm667, %v670, %v673
        %v675 = vsel %vm664, nan, %v674
        %v676 = vand.u32 2147483647, %v400
        %vm677 = vcmp.le.f32.partialorder %v676, 0.7853982
        %vm678 = vcmp.lt.s32.totalorder %v400, 0
        %v679 = vand.u32 %v400, 2139095040
        %v680 = vshrl.u32 %v679, 23
        %v681 = vsub.s32 %v680, 127
        %v682 = vand.u32 2147483647, %v400
        %v683 = vand.u32 %v682, 8388607
        %v684 = vor.u32 %v683, 8388608
        %v685 = vsub.s32 0, %v684
        %v686 = vadd.s32 %v681, 1
        %vm687 = vcmp.gt.s32.totalorder %v686, 0
        %v688 = vsel %vm687, %v686, 0
        %v689 = vshrl.u32 %v688, 5
        %v690 = vand.u32 %v688, 31
        %v691 = vsub.s32 32, %v690
        %v692 = vshrl.u32 683565275, %v691
        %v693 = vshll.u32 683565275, %v690
        %v694 = vshrl.u32 2475754826, %v691
        %v695 = vor.u32 %v693, %v694
        %v696 = vshll.u32 2475754826, %v690
        %v697 = vshrl.u32 2131351028, %v691
        %v698 = vor.u32 %v696, %v697
        %v699 = vshll.u32 2131351028, %v690
        %v700 = vshrl.u32 2102212464, %v691
        %v701 = vor.u32 %v699, %v700
        %v702 = vshll.u32 2102212464, %v690
        %v703 = vshrl.u32 920167782, %v691
        %v704 = vor.u32 %v702, %v703
        %v705 = vshll.u32 920167782, %v690
        %v706 = vshrl.u32 1326507024, %v691
        %v707 = vor.u32 %v705, %v706
        %vm708 = vcmp.lt.s32.totalorder %v689, 1
        %vm709 = vcmp.lt.s32.totalorder %v689, 2
        %vm710 = vcmp.lt.s32.totalorder %v689, 3
        %vm711 = vcmp.lt.s32.totalorder %v689, 4
        %v712 = vsel %vm708, %v692, %v695
        %v713 = vsel %vm711, %v701, 2102212464
        %v714 = vsel %vm710, %v698, %v713
        %v715 = vsel %vm709, %v712, %v714
        %v716 = vsel %vm708, %v695, %v698
        %v717 = vsel %vm711, %v704, 920167782
        %v718 = vsel %vm710, %v701, %v717
        %v719 = vsel %vm709, %v716, %v718
        %v720 = vsel %vm708, %v698, %v701
        %v721 = vsel %vm711, %v707, 1326507024
        %v722 = vsel %vm710, %v704, %v721
        %v723 = vsel %vm709, %v720, %v722
        %v724 = vshll.u32 %v684, 8
        %v725 = vmul.u32.u64.compose %v724, %v723
        %v726 = vextract.low.u32 %v725
        %v727 = vextract.high.u32 %v725
        %v728 = vmul.u32.u64.compose %v724, %v719
        %v729 = vextract.low.u32 %v728
        %v730 = vextract.high.u32 %v728
        %v731 = vmul.u32 %v724, %v715
        %v732 = vadd.s32 %v727, %v729
        %vm733 = vc.u32 %v727, %v729
        %v734 = vadd.s32 %v730, 1
        %v735 = vsel %vm733, %v734, %v730
        %v736 = vadd.s32 %v731, %v735
        %v737 = vadd.s32 %v736, 536870912
        %v738 = vshrl.u32 %v737, 30
        %v739 = vshll.u32 %v738, 30
        %v740 = vsub.s32 %v736, %v739
        %vm741 = vcmp.lt.s32.totalorder %v740, 0
        %v742 = vsub.s32 0, %v740
        %v743 = vsel %vm741, %v742, %v740
        %v744 = vclz %v743
        %v745 = vsub.s32 %v744, 2
        %vm746 = vcmp.gt.s32.totalorder 0, %v745
        %v747 = vsel %vm746, 0, %v745
        %v748 = vsub.s32 32, %v747
        %v749 = vshll.u32 %v740, %v747
        %v750 = vshrl.u32 %v732, %v748
        %v751 = vor.u32 %v749, %v750
        %v752 = vsub.s32 4294967266, %v747
        %v753 = vadd.s32 %v752, 127
        %v754 = vshll.u32 %v753, 23
        %v755 = vor.u32 4788187, %v754
        %v756 = vand.u32 2147483647, %v755
        %v758 = vcvt.s32.f32 %v751
        %v759 = vmul.f32 %v758, %v756
        %v760 = vxor.u32 %v759, 2147483648
        %v761 = vsel %vm678, %v760, %v759
        %v762 = vsub.s32 4, %v738
        %v763 = vsel %vm678, %v762, %v738
        %v764 = vsel %vm677, %v400, %v761
        %v765 = vsel %vm677, 0, %v763
        %v766 = vcosq.f32.pop %v764
        %v767 = vsinq.f32.pop %v764
        %vm768 = vweird.f32 %v400
        %v769 = vadd.s32 %v765, 3
        %v770 = vand.u32 %v769, 3
        %vm771 = vcmp.lt.s32.totalorder %v770, 2
        %vm772 = vcmp.eq.s32.totalorder %v770, 0
        %v773 = vxor.u32 %v767, 2147483648
        %v774 = vsel %vm772, %v766, %v773
        %vm775 = vcmp.eq.s32.totalorder %v770, 2
        %v776 = vxor.u32 %v766, 2147483648
        %v777 = vsel %vm775, %v776, %v767
        %v778 = vsel %vm771, %v774, %v777
        %v779 = vsel %vm768, nan, %v778
        %v780 = vand.u32 2147483647, %v405
        %vm781 = vcmp.le.f32.partialorder %v780, 0.7853982
        %vm782 = vcmp.lt.s32.totalorder %v405, 0
        %v783 = vand.u32 %v405, 2139095040
        %v784 = vshrl.u32 %v783, 23
        %v785 = vsub.s32 %v784, 127
        %v786 = vand.u32 2147483647, %v405
        %v787 = vand.u32 %v786, 8388607
        %v788 = vor.u32 %v787, 8388608
        %v789 = vsub.s32 0, %v788
        %v790 = vadd.s32 %v785, 1
        %vm791 = vcmp.gt.s32.totalorder %v790, 0
        %v792 = vsel %vm791, %v790, 0
        %v793 = vshrl.u32 %v792, 5
        %v794 = vand.u32 %v792, 31
        %v795 = vsub.s32 32, %v794
        %v796 = vshrl.u32 683565275, %v795
        %v797 = vshll.u32 683565275, %v794
        %v798 = vshrl.u32 2475754826, %v795
        %v799 = vor.u32 %v797, %v798
        %v800 = vshll.u32 2475754826, %v794
        %v801 = vshrl.u32 2131351028, %v795
        %v802 = vor.u32 %v800, %v801
        %v803 = vshll.u32 2131351028, %v794
        %v804 = vshrl.u32 2102212464, %v795
        %v805 = vor.u32 %v803, %v804
        %v806 = vshll.u32 2102212464, %v794
        %v807 = vshrl.u32 920167782, %v795
        %v808 = vor.u32 %v806, %v807
        %v809 = vshll.u32 920167782, %v794
        %v810 = vshrl.u32 1326507024, %v795
        %v811 = vor.u32 %v809, %v810
        %vm812 = vcmp.lt.s32.totalorder %v793, 1
        %vm813 = vcmp.lt.s32.totalorder %v793, 2
        %vm814 = vcmp.lt.s32.totalorder %v793, 3
        %vm815 = vcmp.lt.s32.totalorder %v793, 4
        %v816 = vsel %vm812, %v796, %v799
        %v817 = vsel %vm815, %v805, 2102212464
        %v818 = vsel %vm814, %v802, %v817
        %v819 = vsel %vm813, %v816, %v818
        %v820 = vsel %vm812, %v799, %v802
        %v821 = vsel %vm815, %v808, 920167782
        %v822 = vsel %vm814, %v805, %v821
        %v823 = vsel %vm813, %v820, %v822
        %v824 = vsel %vm812, %v802, %v805
        %v825 = vsel %vm815, %v811, 1326507024
        %v826 = vsel %vm814, %v808, %v825
        %v827 = vsel %vm813, %v824, %v826
        %v828 = vshll.u32 %v788, 8
        %v829 = vmul.u32.u64.compose %v828, %v827
        %v830 = vextract.low.u32 %v829
        %v831 = vextract.high.u32 %v829
        %v832 = vmul.u32.u64.compose %v828, %v823
        %v833 = vextract.low.u32 %v832
        %v834 = vextract.high.u32 %v832
        %v835 = vmul.u32 %v828, %v819
        %v836 = vadd.s32 %v831, %v833
        %vm837 = vc.u32 %v831, %v833
        %v838 = vadd.s32 %v834, 1
        %v839 = vsel %vm837, %v838, %v834
        %v840 = vadd.s32 %v835, %v839
        %v841 = vadd.s32 %v840, 536870912
        %v842 = vshrl.u32 %v841, 30
        %v843 = vshll.u32 %v842, 30
        %v844 = vsub.s32 %v840, %v843
        %vm845 = vcmp.lt.s32.totalorder %v844, 0
        %v846 = vsub.s32 0, %v844
        %v847 = vsel %vm845, %v846, %v844
        %v848 = vclz %v847
        %v849 = vsub.s32 %v848, 2
        %vm850 = vcmp.gt.s32.totalorder 0, %v849
        %v851 = vsel %vm850, 0, %v849
        %v852 = vsub.s32 32, %v851
        %v853 = vshll.u32 %v844, %v851
        %v854 = vshrl.u32 %v836, %v852
        %v855 = vor.u32 %v853, %v854
        %v856 = vsub.s32 4294967266, %v851
        %v857 = vadd.s32 %v856, 127
        %v858 = vshll.u32 %v857, 23
        %v859 = vor.u32 4788187, %v858
        %v860 = vand.u32 2147483647, %v859
        %v862 = vcvt.s32.f32 %v855
        %v863 = vmul.f32 %v862, %v860
        %v864 = vxor.u32 %v863, 2147483648
        %v865 = vsel %vm782, %v864, %v863
        %v866 = vsub.s32 4, %v842
        %v867 = vsel %vm782, %v866, %v842
        %v868 = vsel %vm781, %v405, %v865
        %v869 = vsel %vm781, 0, %v867
        %v870 = vcosq.f32.pop %v868
        %v871 = vsinq.f32.pop %v868
        %vm872 = vweird.f32 %v405
        %v873 = vadd.s32 %v869, 3
        %v874 = vand.u32 %v873, 3
        %vm875 = vcmp.lt.s32.totalorder %v874, 2
        %vm876 = vcmp.eq.s32.totalorder %v874, 0
        %v877 = vxor.u32 %v871, 2147483648
        %v878 = vsel %vm876, %v870, %v877
        %vm879 = vcmp.eq.s32.totalorder %v874, 2
        %v880 = vxor.u32 %v870, 2147483648
        %v881 = vsel %vm879, %v880, %v871
        %v882 = vsel %vm875, %v878, %v881
        %v883 = vsel %vm872, nan, %v882
        %v884 = vand.u32 2147483647, %v410
        %vm885 = vcmp.le.f32.partialorder %v884, 0.7853982
        %vm886 = vcmp.lt.s32.totalorder %v410, 0
        %v887 = vand.u32 %v410, 2139095040
        %v888 = vshrl.u32 %v887, 23
        %v889 = vsub.s32 %v888, 127
        %v890 = vand.u32 2147483647, %v410
        %v891 = vand.u32 %v890, 8388607
        %v892 = vor.u32 %v891, 8388608
        %v893 = vsub.s32 0, %v892
        %v894 = vadd.s32 %v889, 1
        %vm895 = vcmp.gt.s32.totalorder %v894, 0
        %v896 = vsel %vm895, %v894, 0
        %v897 = vshrl.u32 %v896, 5
        %v898 = vand.u32 %v896, 31
        %v899 = vsub.s32 32, %v898
        %v900 = vshrl.u32 683565275, %v899
        %v901 = vshll.u32 683565275, %v898
        %v902 = vshrl.u32 2475754826, %v899
        %v903 = vor.u32 %v901, %v902
        %v904 = vshll.u32 2475754826, %v898
        %v905 = vshrl.u32 2131351028, %v899
        %v906 = vor.u32 %v904, %v905
        %v907 = vshll.u32 2131351028, %v898
        %v908 = vshrl.u32 2102212464, %v899
        %v909 = vor.u32 %v907, %v908
        %v910 = vshll.u32 2102212464, %v898
        %v911 = vshrl.u32 920167782, %v899
        %v912 = vor.u32 %v910, %v911
        %v913 = vshll.u32 920167782, %v898
        %v914 = vshrl.u32 1326507024, %v899
        %v915 = vor.u32 %v913, %v914
        %vm916 = vcmp.lt.s32.totalorder %v897, 1
        %vm917 = vcmp.lt.s32.totalorder %v897, 2
        %vm918 = vcmp.lt.s32.totalorder %v897, 3
        %vm919 = vcmp.lt.s32.totalorder %v897, 4
        %v920 = vsel %vm916, %v900, %v903
        %v921 = vsel %vm919, %v909, 2102212464
        %v922 = vsel %vm918, %v906, %v921
        %v923 = vsel %vm917, %v920, %v922
        %v924 = vsel %vm916, %v903, %v906
        %v925 = vsel %vm919, %v912, 920167782
        %v926 = vsel %vm918, %v909, %v925
        %v927 = vsel %vm917, %v924, %v926
        %v928 = vsel %vm916, %v906, %v909
        %v929 = vsel %vm919, %v915, 1326507024
        %v930 = vsel %vm918, %v912, %v929
        %v931 = vsel %vm917, %v928, %v930
        %v932 = vshll.u32 %v892, 8
        %v933 = vmul.u32.u64.compose %v932, %v931
        %v934 = vextract.low.u32 %v933
        %v935 = vextract.high.u32 %v933
        %v936 = vmul.u32.u64.compose %v932, %v927
        %v937 = vextract.low.u32 %v936
        %v938 = vextract.high.u32 %v936
        %v939 = vmul.u32 %v932, %v923
        %v940 = vadd.s32 %v935, %v937
        %vm941 = vc.u32 %v935, %v937
        %v942 = vadd.s32 %v938, 1
        %v943 = vsel %vm941, %v942, %v938
        %v944 = vadd.s32 %v939, %v943
        %v945 = vadd.s32 %v944, 536870912
        %v946 = vshrl.u32 %v945, 30
        %v947 = vshll.u32 %v946, 30
        %v948 = vsub.s32 %v944, %v947
        %vm949 = vcmp.lt.s32.totalorder %v948, 0
        %v950 = vsub.s32 0, %v948
        %v951 = vsel %vm949, %v950, %v948
        %v952 = vclz %v951
        %v953 = vsub.s32 %v952, 2
        %vm954 = vcmp.gt.s32.totalorder 0, %v953
        %v955 = vsel %vm954, 0, %v953
        %v956 = vsub.s32 32, %v955
        %v957 = vshll.u32 %v948, %v955
        %v958 = vshrl.u32 %v940, %v956
        %v959 = vor.u32 %v957, %v958
        %v960 = vsub.s32 4294967266, %v955
        %v961 = vadd.s32 %v960, 127
        %v962 = vshll.u32 %v961, 23
        %v963 = vor.u32 4788187, %v962
        %v964 = vand.u32 2147483647, %v963
        %v966 = vcvt.s32.f32 %v959
        %v967 = vmul.f32 %v966, %v964
        %v968 = vxor.u32 %v967, 2147483648
        %v969 = vsel %vm886, %v968, %v967
        %v970 = vsub.s32 4, %v946
        %v971 = vsel %vm886, %v970, %v946
        %v972 = vsel %vm885, %v410, %v969
        %v973 = vsel %vm885, 0, %v971
        %v974 = vcosq.f32.pop %v972
        %v975 = vsinq.f32.pop %v972
        %vm976 = vweird.f32 %v410
        %v977 = vadd.s32 %v973, 3
        %v978 = vand.u32 %v977, 3
        %vm979 = vcmp.lt.s32.totalorder %v978, 2
        %vm980 = vcmp.eq.s32.totalorder %v978, 0
        %v981 = vxor.u32 %v975, 2147483648
        %v982 = vsel %vm980, %v974, %v981
        %vm983 = vcmp.eq.s32.totalorder %v978, 2
        %v984 = vxor.u32 %v974, 2147483648
        %v985 = vsel %vm983, %v984, %v975
        %v986 = vsel %vm979, %v982, %v985
        %v987 = vsel %vm976, nan, %v986
        %v988 = vand.u32 2147483647, %v415
        %vm989 = vcmp.le.f32.partialorder %v988, 0.7853982
        %vm990 = vcmp.lt.s32.totalorder %v415, 0
        %v991 = vand.u32 %v415, 2139095040
        %v992 = vshrl.u32 %v991, 23
        %v993 = vsub.s32 %v992, 127
        %v994 = vand.u32 2147483647, %v415
        %v995 = vand.u32 %v994, 8388607
        %v996 = vor.u32 %v995, 8388608
        %v997 = vsub.s32 0, %v996
        %v998 = vadd.s32 %v993, 1
        %vm999 = vcmp.gt.s32.totalorder %v998, 0
        %v1000 = vsel %vm999, %v998, 0
        %v1001 = vshrl.u32 %v1000, 5
        %v1002 = vand.u32 %v1000, 31
        %v1003 = vsub.s32 32, %v1002
        %v1004 = vshrl.u32 683565275, %v1003
        %v1005 = vshll.u32 683565275, %v1002
        %v1006 = vshrl.u32 2475754826, %v1003
        %v1007 = vor.u32 %v1005, %v1006
        %v1008 = vshll.u32 2475754826, %v1002
        %v1009 = vshrl.u32 2131351028, %v1003
        %v1010 = vor.u32 %v1008, %v1009
        %v1011 = vshll.u32 2131351028, %v1002
        %v1012 = vshrl.u32 2102212464, %v1003
        %v1013 = vor.u32 %v1011, %v1012
        %v1014 = vshll.u32 2102212464, %v1002
        %v1015 = vshrl.u32 920167782, %v1003
        %v1016 = vor.u32 %v1014, %v1015
        %v1017 = vshll.u32 920167782, %v1002
        %v1018 = vshrl.u32 1326507024, %v1003
        %v1019 = vor.u32 %v1017, %v1018
        %vm1020 = vcmp.lt.s32.totalorder %v1001, 1
        %vm1021 = vcmp.lt.s32.totalorder %v1001, 2
        %vm1022 = vcmp.lt.s32.totalorder %v1001, 3
        %vm1023 = vcmp.lt.s32.totalorder %v1001, 4
        %v1024 = vsel %vm1020, %v1004, %v1007
        %v1025 = vsel %vm1023, %v1013, 2102212464
        %v1026 = vsel %vm1022, %v1010, %v1025
        %v1027 = vsel %vm1021, %v1024, %v1026
        %v1028 = vsel %vm1020, %v1007, %v1010
        %v1029 = vsel %vm1023, %v1016, 920167782
        %v1030 = vsel %vm1022, %v1013, %v1029
        %v1031 = vsel %vm1021, %v1028, %v1030
        %v1032 = vsel %vm1020, %v1010, %v1013
        %v1033 = vsel %vm1023, %v1019, 1326507024
        %v1034 = vsel %vm1022, %v1016, %v1033
        %v1035 = vsel %vm1021, %v1032, %v1034
        %v1036 = vshll.u32 %v996, 8
        %v1037 = vmul.u32.u64.compose %v1036, %v1035
        %v1038 = vextract.low.u32 %v1037
        %v1039 = vextract.high.u32 %v1037
        %v1040 = vmul.u32.u64.compose %v1036, %v1031
        %v1041 = vextract.low.u32 %v1040
        %v1042 = vextract.high.u32 %v1040
        %v1043 = vmul.u32 %v1036, %v1027
        %v1044 = vadd.s32 %v1039, %v1041
        %vm1045 = vc.u32 %v1039, %v1041
        %v1046 = vadd.s32 %v1042, 1
        %v1047 = vsel %vm1045, %v1046, %v1042
        %v1048 = vadd.s32 %v1043, %v1047
        %v1049 = vadd.s32 %v1048, 536870912
        %v1050 = vshrl.u32 %v1049, 30
        %v1051 = vshll.u32 %v1050, 30
        %v1052 = vsub.s32 %v1048, %v1051
        %vm1053 = vcmp.lt.s32.totalorder %v1052, 0
        %v1054 = vsub.s32 0, %v1052
        %v1055 = vsel %vm1053, %v1054, %v1052
        %v1056 = vclz %v1055
        %v1057 = vsub.s32 %v1056, 2
        %vm1058 = vcmp.gt.s32.totalorder 0, %v1057
        %v1059 = vsel %vm1058, 0, %v1057
        %v1060 = vsub.s32 32, %v1059
        %v1061 = vshll.u32 %v1052, %v1059
        %v1062 = vshrl.u32 %v1044, %v1060
        %v1063 = vor.u32 %v1061, %v1062
        %v1064 = vsub.s32 4294967266, %v1059
        %v1065 = vadd.s32 %v1064, 127
        %v1066 = vshll.u32 %v1065, 23
        %v1067 = vor.u32 4788187, %v1066
        %v1068 = vand.u32 2147483647, %v1067
        %v1070 = vcvt.s32.f32 %v1063
        %v1071 = vmul.f32 %v1070, %v1068
        %v1072 = vxor.u32 %v1071, 2147483648
        %v1073 = vsel %vm990, %v1072, %v1071
        %v1074 = vsub.s32 4, %v1050
        %v1075 = vsel %vm990, %v1074, %v1050
        %v1076 = vsel %vm989, %v415, %v1073
        %v1077 = vsel %vm989, 0, %v1075
        %v1078 = vcosq.f32.pop %v1076
        %v1079 = vsinq.f32.pop %v1076
        %vm1080 = vweird.f32 %v415
        %v1081 = vadd.s32 %v1077, 3
        %v1082 = vand.u32 %v1081, 3
        %vm1083 = vcmp.lt.s32.totalorder %v1082, 2
        %vm1084 = vcmp.eq.s32.totalorder %v1082, 0
        %v1085 = vxor.u32 %v1079, 2147483648
        %v1086 = vsel %vm1084, %v1078, %v1085
        %vm1087 = vcmp.eq.s32.totalorder %v1082, 2
        %v1088 = vxor.u32 %v1078, 2147483648
        %v1089 = vsel %vm1087, %v1088, %v1079
        %v1090 = vsel %vm1083, %v1086, %v1089
        %v1091 = vsel %vm1080, nan, %v1090
        %v1092 = vand.u32 2147483647, %v420
        %vm1093 = vcmp.le.f32.partialorder %v1092, 0.7853982
        %vm1094 = vcmp.lt.s32.totalorder %v420, 0
        %v1095 = vand.u32 %v420, 2139095040
        %v1096 = vshrl.u32 %v1095, 23
        %v1097 = vsub.s32 %v1096, 127
        %v1098 = vand.u32 2147483647, %v420
        %v1099 = vand.u32 %v1098, 8388607
        %v1100 = vor.u32 %v1099, 8388608
        %v1101 = vsub.s32 0, %v1100
        %v1102 = vadd.s32 %v1097, 1
        %vm1103 = vcmp.gt.s32.totalorder %v1102, 0
        %v1104 = vsel %vm1103, %v1102, 0
        %v1105 = vshrl.u32 %v1104, 5
        %v1106 = vand.u32 %v1104, 31
        %v1107 = vsub.s32 32, %v1106
        %v1108 = vshrl.u32 683565275, %v1107
        %v1109 = vshll.u32 683565275, %v1106
        %v1110 = vshrl.u32 2475754826, %v1107
        %v1111 = vor.u32 %v1109, %v1110
        %v1112 = vshll.u32 2475754826, %v1106
        %v1113 = vshrl.u32 2131351028, %v1107
        %v1114 = vor.u32 %v1112, %v1113
        %v1115 = vshll.u32 2131351028, %v1106
        %v1116 = vshrl.u32 2102212464, %v1107
        %v1117 = vor.u32 %v1115, %v1116
        %v1118 = vshll.u32 2102212464, %v1106
        %v1119 = vshrl.u32 920167782, %v1107
        %v1120 = vor.u32 %v1118, %v1119
        %v1121 = vshll.u32 920167782, %v1106
        %v1122 = vshrl.u32 1326507024, %v1107
        %v1123 = vor.u32 %v1121, %v1122
        %vm1124 = vcmp.lt.s32.totalorder %v1105, 1
        %vm1125 = vcmp.lt.s32.totalorder %v1105, 2
        %vm1126 = vcmp.lt.s32.totalorder %v1105, 3
        %vm1127 = vcmp.lt.s32.totalorder %v1105, 4
        %v1128 = vsel %vm1124, %v1108, %v1111
        %v1129 = vsel %vm1127, %v1117, 2102212464
        %v1130 = vsel %vm1126, %v1114, %v1129
        %v1131 = vsel %vm1125, %v1128, %v1130
        %v1132 = vsel %vm1124, %v1111, %v1114
        %v1133 = vsel %vm1127, %v1120, 920167782
        %v1134 = vsel %vm1126, %v1117, %v1133
        %v1135 = vsel %vm1125, %v1132, %v1134
        %v1136 = vsel %vm1124, %v1114, %v1117
        %v1137 = vsel %vm1127, %v1123, 1326507024
        %v1138 = vsel %vm1126, %v1120, %v1137
        %v1139 = vsel %vm1125, %v1136, %v1138
        %v1140 = vshll.u32 %v1100, 8
        %v1141 = vmul.u32.u64.compose %v1140, %v1139
        %v1142 = vextract.low.u32 %v1141
        %v1143 = vextract.high.u32 %v1141
        %v1144 = vmul.u32.u64.compose %v1140, %v1135
        %v1145 = vextract.low.u32 %v1144
        %v1146 = vextract.high.u32 %v1144
        %v1147 = vmul.u32 %v1140, %v1131
        %v1148 = vadd.s32 %v1143, %v1145
        %vm1149 = vc.u32 %v1143, %v1145
        %v1150 = vadd.s32 %v1146, 1
        %v1151 = vsel %vm1149, %v1150, %v1146
        %v1152 = vadd.s32 %v1147, %v1151
        %v1153 = vadd.s32 %v1152, 536870912
        %v1154 = vshrl.u32 %v1153, 30
        %v1155 = vshll.u32 %v1154, 30
        %v1156 = vsub.s32 %v1152, %v1155
        %vm1157 = vcmp.lt.s32.totalorder %v1156, 0
        %v1158 = vsub.s32 0, %v1156
        %v1159 = vsel %vm1157, %v1158, %v1156
        %v1160 = vclz %v1159
        %v1161 = vsub.s32 %v1160, 2
        %vm1162 = vcmp.gt.s32.totalorder 0, %v1161
        %v1163 = vsel %vm1162, 0, %v1161
        %v1164 = vsub.s32 32, %v1163
        %v1165 = vshll.u32 %v1156, %v1163
        %v1166 = vshrl.u32 %v1148, %v1164
        %v1167 = vor.u32 %v1165, %v1166
        %v1168 = vsub.s32 4294967266, %v1163
        %v1169 = vadd.s32 %v1168, 127
        %v1170 = vshll.u32 %v1169, 23
        %v1171 = vor.u32 4788187, %v1170
        %v1172 = vand.u32 2147483647, %v1171
        %v1174 = vcvt.s32.f32 %v1167
        %v1175 = vmul.f32 %v1174, %v1172
        %v1176 = vxor.u32 %v1175, 2147483648
        %v1177 = vsel %vm1094, %v1176, %v1175
        %v1178 = vsub.s32 4, %v1154
        %v1179 = vsel %vm1094, %v1178, %v1154
        %v1180 = vsel %vm1093, %v420, %v1177
        %v1181 = vsel %vm1093, 0, %v1179
        %v1182 = vcosq.f32.pop %v1180
        %v1183 = vsinq.f32.pop %v1180
        %vm1184 = vweird.f32 %v420
        %v1185 = vadd.s32 %v1181, 3
        %v1186 = vand.u32 %v1185, 3
        %vm1187 = vcmp.lt.s32.totalorder %v1186, 2
        %vm1188 = vcmp.eq.s32.totalorder %v1186, 0
        %v1189 = vxor.u32 %v1183, 2147483648
        %v1190 = vsel %vm1188, %v1182, %v1189
        %vm1191 = vcmp.eq.s32.totalorder %v1186, 2
        %v1192 = vxor.u32 %v1182, 2147483648
        %v1193 = vsel %vm1191, %v1192, %v1183
        %v1194 = vsel %vm1187, %v1190, %v1193
        %v1195 = vsel %vm1184, nan, %v1194
        %v1196 = vand.u32 2147483647, %v425
        %vm1197 = vcmp.le.f32.partialorder %v1196, 0.7853982
        %vm1198 = vcmp.lt.s32.totalorder %v425, 0
        %v1199 = vand.u32 %v425, 2139095040
        %v1200 = vshrl.u32 %v1199, 23
        %v1201 = vsub.s32 %v1200, 127
        %v1202 = vand.u32 2147483647, %v425
        %v1203 = vand.u32 %v1202, 8388607
        %v1204 = vor.u32 %v1203, 8388608
        %v1205 = vsub.s32 0, %v1204
        %v1206 = vadd.s32 %v1201, 1
        %vm1207 = vcmp.gt.s32.totalorder %v1206, 0
        %v1208 = vsel %vm1207, %v1206, 0
        %v1209 = vshrl.u32 %v1208, 5
        %v1210 = vand.u32 %v1208, 31
        %v1211 = vsub.s32 32, %v1210
        %v1212 = vshrl.u32 683565275, %v1211
        %v1213 = vshll.u32 683565275, %v1210
        %v1214 = vshrl.u32 2475754826, %v1211
        %v1215 = vor.u32 %v1213, %v1214
        %v1216 = vshll.u32 2475754826, %v1210
        %v1217 = vshrl.u32 2131351028, %v1211
        %v1218 = vor.u32 %v1216, %v1217
        %v1219 = vshll.u32 2131351028, %v1210
        %v1220 = vshrl.u32 2102212464, %v1211
        %v1221 = vor.u32 %v1219, %v1220
        %v1222 = vshll.u32 2102212464, %v1210
        %v1223 = vshrl.u32 920167782, %v1211
        %v1224 = vor.u32 %v1222, %v1223
        %v1225 = vshll.u32 920167782, %v1210
        %v1226 = vshrl.u32 1326507024, %v1211
        %v1227 = vor.u32 %v1225, %v1226
        %vm1228 = vcmp.lt.s32.totalorder %v1209, 1
        %vm1229 = vcmp.lt.s32.totalorder %v1209, 2
        %vm1230 = vcmp.lt.s32.totalorder %v1209, 3
        %vm1231 = vcmp.lt.s32.totalorder %v1209, 4
        %v1232 = vsel %vm1228, %v1212, %v1215
        %v1233 = vsel %vm1231, %v1221, 2102212464
        %v1234 = vsel %vm1230, %v1218, %v1233
        %v1235 = vsel %vm1229, %v1232, %v1234
        %v1236 = vsel %vm1228, %v1215, %v1218
        %v1237 = vsel %vm1231, %v1224, 920167782
        %v1238 = vsel %vm1230, %v1221, %v1237
        %v1239 = vsel %vm1229, %v1236, %v1238
        %v1240 = vsel %vm1228, %v1218, %v1221
        %v1241 = vsel %vm1231, %v1227, 1326507024
        %v1242 = vsel %vm1230, %v1224, %v1241
        %v1243 = vsel %vm1229, %v1240, %v1242
        %v1244 = vshll.u32 %v1204, 8
        %v1245 = vmul.u32.u64.compose %v1244, %v1243
        %v1246 = vextract.low.u32 %v1245
        %v1247 = vextract.high.u32 %v1245
        %v1248 = vmul.u32.u64.compose %v1244, %v1239
        %v1249 = vextract.low.u32 %v1248
        %v1250 = vextract.high.u32 %v1248
        %v1251 = vmul.u32 %v1244, %v1235
        %v1252 = vadd.s32 %v1247, %v1249
        %vm1253 = vc.u32 %v1247, %v1249
        %v1254 = vadd.s32 %v1250, 1
        %v1255 = vsel %vm1253, %v1254, %v1250
        %v1256 = vadd.s32 %v1251, %v1255
        %v1257 = vadd.s32 %v1256, 536870912
        %v1258 = vshrl.u32 %v1257, 30
        %v1259 = vshll.u32 %v1258, 30
        %v1260 = vsub.s32 %v1256, %v1259
        %vm1261 = vcmp.lt.s32.totalorder %v1260, 0
        %v1262 = vsub.s32 0, %v1260
        %v1263 = vsel %vm1261, %v1262, %v1260
        %v1264 = vclz %v1263
        %v1265 = vsub.s32 %v1264, 2
        %vm1266 = vcmp.gt.s32.totalorder 0, %v1265
        %v1267 = vsel %vm1266, 0, %v1265
        %v1268 = vsub.s32 32, %v1267
        %v1269 = vshll.u32 %v1260, %v1267
        %v1270 = vshrl.u32 %v1252, %v1268
        %v1271 = vor.u32 %v1269, %v1270
        %v1272 = vsub.s32 4294967266, %v1267
        %v1273 = vadd.s32 %v1272, 127
        %v1274 = vshll.u32 %v1273, 23
        %v1275 = vor.u32 4788187, %v1274
        %v1276 = vand.u32 2147483647, %v1275
        %v1278 = vcvt.s32.f32 %v1271
        %v1279 = vmul.f32 %v1278, %v1276
        %v1280 = vxor.u32 %v1279, 2147483648
        %v1281 = vsel %vm1198, %v1280, %v1279
        %v1282 = vsub.s32 4, %v1258
        %v1283 = vsel %vm1198, %v1282, %v1258
        %v1284 = vsel %vm1197, %v425, %v1281
        %v1285 = vsel %vm1197, 0, %v1283
        %v1286 = vcosq.f32.pop %v1284
        %v1287 = vsinq.f32.pop %v1284
        %vm1288 = vweird.f32 %v425
        %v1289 = vadd.s32 %v1285, 3
        %v1290 = vand.u32 %v1289, 3
        %vm1291 = vcmp.lt.s32.totalorder %v1290, 2
        %vm1292 = vcmp.eq.s32.totalorder %v1290, 0
        %v1293 = vxor.u32 %v1287, 2147483648
        %v1294 = vsel %vm1292, %v1286, %v1293
        %vm1295 = vcmp.eq.s32.totalorder %v1290, 2
        %v1296 = vxor.u32 %v1286, 2147483648
        %v1297 = vsel %vm1295, %v1296, %v1287
        %v1298 = vsel %vm1291, %v1294, %v1297
        %v1299 = vsel %vm1288, nan, %v1298
        %v1300 = vand.u32 2147483647, %v430
        %vm1301 = vcmp.le.f32.partialorder %v1300, 0.7853982
        %vm1302 = vcmp.lt.s32.totalorder %v430, 0
        %v1303 = vand.u32 %v430, 2139095040
        %v1304 = vshrl.u32 %v1303, 23
        %v1305 = vsub.s32 %v1304, 127
        %v1306 = vand.u32 2147483647, %v430
        %v1307 = vand.u32 %v1306, 8388607
        %v1308 = vor.u32 %v1307, 8388608
        %v1309 = vsub.s32 0, %v1308
        %v1310 = vadd.s32 %v1305, 1
        %vm1311 = vcmp.gt.s32.totalorder %v1310, 0
        %v1312 = vsel %vm1311, %v1310, 0
        %v1313 = vshrl.u32 %v1312, 5
        %v1314 = vand.u32 %v1312, 31
        %v1315 = vsub.s32 32, %v1314
        %v1316 = vshrl.u32 683565275, %v1315
        %v1317 = vshll.u32 683565275, %v1314
        %v1318 = vshrl.u32 2475754826, %v1315
        %v1319 = vor.u32 %v1317, %v1318
        %v1320 = vshll.u32 2475754826, %v1314
        %v1321 = vshrl.u32 2131351028, %v1315
        %v1322 = vor.u32 %v1320, %v1321
        %v1323 = vshll.u32 2131351028, %v1314
        %v1324 = vshrl.u32 2102212464, %v1315
        %v1325 = vor.u32 %v1323, %v1324
        %v1326 = vshll.u32 2102212464, %v1314
        %v1327 = vshrl.u32 920167782, %v1315
        %v1328 = vor.u32 %v1326, %v1327
        %v1329 = vshll.u32 920167782, %v1314
        %v1330 = vshrl.u32 1326507024, %v1315
        %v1331 = vor.u32 %v1329, %v1330
        %vm1332 = vcmp.lt.s32.totalorder %v1313, 1
        %vm1333 = vcmp.lt.s32.totalorder %v1313, 2
        %vm1334 = vcmp.lt.s32.totalorder %v1313, 3
        %vm1335 = vcmp.lt.s32.totalorder %v1313, 4
        %v1336 = vsel %vm1332, %v1316, %v1319
        %v1337 = vsel %vm1335, %v1325, 2102212464
        %v1338 = vsel %vm1334, %v1322, %v1337
        %v1339 = vsel %vm1333, %v1336, %v1338
        %v1340 = vsel %vm1332, %v1319, %v1322
        %v1341 = vsel %vm1335, %v1328, 920167782
        %v1342 = vsel %vm1334, %v1325, %v1341
        %v1343 = vsel %vm1333, %v1340, %v1342
        %v1344 = vsel %vm1332, %v1322, %v1325
        %v1345 = vsel %vm1335, %v1331, 1326507024
        %v1346 = vsel %vm1334, %v1328, %v1345
        %v1347 = vsel %vm1333, %v1344, %v1346
        %v1348 = vshll.u32 %v1308, 8
        %v1349 = vmul.u32.u64.compose %v1348, %v1347
        %v1350 = vextract.low.u32 %v1349
        %v1351 = vextract.high.u32 %v1349
        %v1352 = vmul.u32.u64.compose %v1348, %v1343
        %v1353 = vextract.low.u32 %v1352
        %v1354 = vextract.high.u32 %v1352
        %v1355 = vmul.u32 %v1348, %v1339
        %v1356 = vadd.s32 %v1351, %v1353
        %vm1357 = vc.u32 %v1351, %v1353
        %v1358 = vadd.s32 %v1354, 1
        %v1359 = vsel %vm1357, %v1358, %v1354
        %v1360 = vadd.s32 %v1355, %v1359
        %v1361 = vadd.s32 %v1360, 536870912
        %v1362 = vshrl.u32 %v1361, 30
        %v1363 = vshll.u32 %v1362, 30
        %v1364 = vsub.s32 %v1360, %v1363
        %vm1365 = vcmp.lt.s32.totalorder %v1364, 0
        %v1366 = vsub.s32 0, %v1364
        %v1367 = vsel %vm1365, %v1366, %v1364
        %v1368 = vclz %v1367
        %v1369 = vsub.s32 %v1368, 2
        %vm1370 = vcmp.gt.s32.totalorder 0, %v1369
        %v1371 = vsel %vm1370, 0, %v1369
        %v1372 = vsub.s32 32, %v1371
        %v1373 = vshll.u32 %v1364, %v1371
        %v1374 = vshrl.u32 %v1356, %v1372
        %v1375 = vor.u32 %v1373, %v1374
        %v1376 = vsub.s32 4294967266, %v1371
        %v1377 = vadd.s32 %v1376, 127
        %v1378 = vshll.u32 %v1377, 23
        %v1379 = vor.u32 4788187, %v1378
        %v1380 = vand.u32 2147483647, %v1379
        %v1382 = vcvt.s32.f32 %v1375
        %v1383 = vmul.f32 %v1382, %v1380
        %v1384 = vxor.u32 %v1383, 2147483648
        %v1385 = vsel %vm1302, %v1384, %v1383
        %v1386 = vsub.s32 4, %v1362
        %v1387 = vsel %vm1302, %v1386, %v1362
        %v1388 = vsel %vm1301, %v430, %v1385
        %v1389 = vsel %vm1301, 0, %v1387
        %v1390 = vcosq.f32.pop %v1388
        %v1391 = vsinq.f32.pop %v1388
        %vm1392 = vweird.f32 %v430
        %v1393 = vadd.s32 %v1389, 3
        %v1394 = vand.u32 %v1393, 3
        %vm1395 = vcmp.lt.s32.totalorder %v1394, 2
        %vm1396 = vcmp.eq.s32.totalorder %v1394, 0
        %v1397 = vxor.u32 %v1391, 2147483648
        %v1398 = vsel %vm1396, %v1390, %v1397
        %vm1399 = vcmp.eq.s32.totalorder %v1394, 2
        %v1400 = vxor.u32 %v1390, 2147483648
        %v1401 = vsel %vm1399, %v1400, %v1391
        %v1402 = vsel %vm1395, %v1398, %v1401
        %v1403 = vsel %vm1392, nan, %v1402
        %v1404 = vand.u32 2147483647, %v435
        %vm1405 = vcmp.le.f32.partialorder %v1404, 0.7853982
        %vm1406 = vcmp.lt.s32.totalorder %v435, 0
        %v1407 = vand.u32 %v435, 2139095040
        %v1408 = vshrl.u32 %v1407, 23
        %v1409 = vsub.s32 %v1408, 127
        %v1410 = vand.u32 2147483647, %v435
        %v1411 = vand.u32 %v1410, 8388607
        %v1412 = vor.u32 %v1411, 8388608
        %v1413 = vsub.s32 0, %v1412
        %v1414 = vadd.s32 %v1409, 1
        %vm1415 = vcmp.gt.s32.totalorder %v1414, 0
        %v1416 = vsel %vm1415, %v1414, 0
        %v1417 = vshrl.u32 %v1416, 5
        %v1418 = vand.u32 %v1416, 31
        %v1419 = vsub.s32 32, %v1418
        %v1420 = vshrl.u32 683565275, %v1419
        %v1421 = vshll.u32 683565275, %v1418
        %v1422 = vshrl.u32 2475754826, %v1419
        %v1423 = vor.u32 %v1421, %v1422
        %v1424 = vshll.u32 2475754826, %v1418
        %v1425 = vshrl.u32 2131351028, %v1419
        %v1426 = vor.u32 %v1424, %v1425
        %v1427 = vshll.u32 2131351028, %v1418
        %v1428 = vshrl.u32 2102212464, %v1419
        %v1429 = vor.u32 %v1427, %v1428
        %v1430 = vshll.u32 2102212464, %v1418
        %v1431 = vshrl.u32 920167782, %v1419
        %v1432 = vor.u32 %v1430, %v1431
        %v1433 = vshll.u32 920167782, %v1418
        %v1434 = vshrl.u32 1326507024, %v1419
        %v1435 = vor.u32 %v1433, %v1434
        %vm1436 = vcmp.lt.s32.totalorder %v1417, 1
        %vm1437 = vcmp.lt.s32.totalorder %v1417, 2
        %vm1438 = vcmp.lt.s32.totalorder %v1417, 3
        %vm1439 = vcmp.lt.s32.totalorder %v1417, 4
        %v1440 = vsel %vm1436, %v1420, %v1423
        %v1441 = vsel %vm1439, %v1429, 2102212464
        %v1442 = vsel %vm1438, %v1426, %v1441
        %v1443 = vsel %vm1437, %v1440, %v1442
        %v1444 = vsel %vm1436, %v1423, %v1426
        %v1445 = vsel %vm1439, %v1432, 920167782
        %v1446 = vsel %vm1438, %v1429, %v1445
        %v1447 = vsel %vm1437, %v1444, %v1446
        %v1448 = vsel %vm1436, %v1426, %v1429
        %v1449 = vsel %vm1439, %v1435, 1326507024
        %v1450 = vsel %vm1438, %v1432, %v1449
        %v1451 = vsel %vm1437, %v1448, %v1450
        %v1452 = vshll.u32 %v1412, 8
        %v1453 = vmul.u32.u64.compose %v1452, %v1451
        %v1454 = vextract.low.u32 %v1453
        %v1455 = vextract.high.u32 %v1453
        %v1456 = vmul.u32.u64.compose %v1452, %v1447
        %v1457 = vextract.low.u32 %v1456
        %v1458 = vextract.high.u32 %v1456
        %v1459 = vmul.u32 %v1452, %v1443
        %v1460 = vadd.s32 %v1455, %v1457
        %vm1461 = vc.u32 %v1455, %v1457
        %v1462 = vadd.s32 %v1458, 1
        %v1463 = vsel %vm1461, %v1462, %v1458
        %v1464 = vadd.s32 %v1459, %v1463
        %v1465 = vadd.s32 %v1464, 536870912
        %v1466 = vshrl.u32 %v1465, 30
        %v1467 = vshll.u32 %v1466, 30
        %v1468 = vsub.s32 %v1464, %v1467
        %vm1469 = vcmp.lt.s32.totalorder %v1468, 0
        %v1470 = vsub.s32 0, %v1468
        %v1471 = vsel %vm1469, %v1470, %v1468
        %v1472 = vclz %v1471
        %v1473 = vsub.s32 %v1472, 2
        %vm1474 = vcmp.gt.s32.totalorder 0, %v1473
        %v1475 = vsel %vm1474, 0, %v1473
        %v1476 = vsub.s32 32, %v1475
        %v1477 = vshll.u32 %v1468, %v1475
        %v1478 = vshrl.u32 %v1460, %v1476
        %v1479 = vor.u32 %v1477, %v1478
        %v1480 = vsub.s32 4294967266, %v1475
        %v1481 = vadd.s32 %v1480, 127
        %v1482 = vshll.u32 %v1481, 23
        %v1483 = vor.u32 4788187, %v1482
        %v1484 = vand.u32 2147483647, %v1483
        %v1486 = vcvt.s32.f32 %v1479
        %v1487 = vmul.f32 %v1486, %v1484
        %v1488 = vxor.u32 %v1487, 2147483648
        %v1489 = vsel %vm1406, %v1488, %v1487
        %v1490 = vsub.s32 4, %v1466
        %v1491 = vsel %vm1406, %v1490, %v1466
        %v1492 = vsel %vm1405, %v435, %v1489
        %v1493 = vsel %vm1405, 0, %v1491
        %v1494 = vcosq.f32.pop %v1492
        %v1495 = vsinq.f32.pop %v1492
        %vm1496 = vweird.f32 %v435
        %v1497 = vadd.s32 %v1493, 3
        %v1498 = vand.u32 %v1497, 3
        %vm1499 = vcmp.lt.s32.totalorder %v1498, 2
        %vm1500 = vcmp.eq.s32.totalorder %v1498, 0
        %v1501 = vxor.u32 %v1495, 2147483648
        %v1502 = vsel %vm1500, %v1494, %v1501
        %vm1503 = vcmp.eq.s32.totalorder %v1498, 2
        %v1504 = vxor.u32 %v1494, 2147483648
        %v1505 = vsel %vm1503, %v1504, %v1495
        %v1506 = vsel %vm1499, %v1502, %v1505
        %v1507 = vsel %vm1496, nan, %v1506
        %v1508 = vand.u32 2147483647, %v440
        %vm1509 = vcmp.le.f32.partialorder %v1508, 0.7853982
        %vm1510 = vcmp.lt.s32.totalorder %v440, 0
        %v1511 = vand.u32 %v440, 2139095040
        %v1512 = vshrl.u32 %v1511, 23
        %v1513 = vsub.s32 %v1512, 127
        %v1514 = vand.u32 2147483647, %v440
        %v1515 = vand.u32 %v1514, 8388607
        %v1516 = vor.u32 %v1515, 8388608
        %v1517 = vsub.s32 0, %v1516
        %v1518 = vadd.s32 %v1513, 1
        %vm1519 = vcmp.gt.s32.totalorder %v1518, 0
        %v1520 = vsel %vm1519, %v1518, 0
        %v1521 = vshrl.u32 %v1520, 5
        %v1522 = vand.u32 %v1520, 31
        %v1523 = vsub.s32 32, %v1522
        %v1524 = vshrl.u32 683565275, %v1523
        %v1525 = vshll.u32 683565275, %v1522
        %v1526 = vshrl.u32 2475754826, %v1523
        %v1527 = vor.u32 %v1525, %v1526
        %v1528 = vshll.u32 2475754826, %v1522
        %v1529 = vshrl.u32 2131351028, %v1523
        %v1530 = vor.u32 %v1528, %v1529
        %v1531 = vshll.u32 2131351028, %v1522
        %v1532 = vshrl.u32 2102212464, %v1523
        %v1533 = vor.u32 %v1531, %v1532
        %v1534 = vshll.u32 2102212464, %v1522
        %v1535 = vshrl.u32 920167782, %v1523
        %v1536 = vor.u32 %v1534, %v1535
        %v1537 = vshll.u32 920167782, %v1522
        %v1538 = vshrl.u32 1326507024, %v1523
        %v1539 = vor.u32 %v1537, %v1538
        %vm1540 = vcmp.lt.s32.totalorder %v1521, 1
        %vm1541 = vcmp.lt.s32.totalorder %v1521, 2
        %vm1542 = vcmp.lt.s32.totalorder %v1521, 3
        %vm1543 = vcmp.lt.s32.totalorder %v1521, 4
        %v1544 = vsel %vm1540, %v1524, %v1527
        %v1545 = vsel %vm1543, %v1533, 2102212464
        %v1546 = vsel %vm1542, %v1530, %v1545
        %v1547 = vsel %vm1541, %v1544, %v1546
        %v1548 = vsel %vm1540, %v1527, %v1530
        %v1549 = vsel %vm1543, %v1536, 920167782
        %v1550 = vsel %vm1542, %v1533, %v1549
        %v1551 = vsel %vm1541, %v1548, %v1550
        %v1552 = vsel %vm1540, %v1530, %v1533
        %v1553 = vsel %vm1543, %v1539, 1326507024
        %v1554 = vsel %vm1542, %v1536, %v1553
        %v1555 = vsel %vm1541, %v1552, %v1554
        %v1556 = vshll.u32 %v1516, 8
        %v1557 = vmul.u32.u64.compose %v1556, %v1555
        %v1558 = vextract.low.u32 %v1557
        %v1559 = vextract.high.u32 %v1557
        %v1560 = vmul.u32.u64.compose %v1556, %v1551
        %v1561 = vextract.low.u32 %v1560
        %v1562 = vextract.high.u32 %v1560
        %v1563 = vmul.u32 %v1556, %v1547
        %v1564 = vadd.s32 %v1559, %v1561
        %vm1565 = vc.u32 %v1559, %v1561
        %v1566 = vadd.s32 %v1562, 1
        %v1567 = vsel %vm1565, %v1566, %v1562
        %v1568 = vadd.s32 %v1563, %v1567
        %v1569 = vadd.s32 %v1568, 536870912
        %v1570 = vshrl.u32 %v1569, 30
        %v1571 = vshll.u32 %v1570, 30
        %v1572 = vsub.s32 %v1568, %v1571
        %vm1573 = vcmp.lt.s32.totalorder %v1572, 0
        %v1574 = vsub.s32 0, %v1572
        %v1575 = vsel %vm1573, %v1574, %v1572
        %v1576 = vclz %v1575
        %v1577 = vsub.s32 %v1576, 2
        %vm1578 = vcmp.gt.s32.totalorder 0, %v1577
        %v1579 = vsel %vm1578, 0, %v1577
        %v1580 = vsub.s32 32, %v1579
        %v1581 = vshll.u32 %v1572, %v1579
        %v1582 = vshrl.u32 %v1564, %v1580
        %v1583 = vor.u32 %v1581, %v1582
        %v1584 = vsub.s32 4294967266, %v1579
        %v1585 = vadd.s32 %v1584, 127
        %v1586 = vshll.u32 %v1585, 23
        %v1587 = vor.u32 4788187, %v1586
        %v1588 = vand.u32 2147483647, %v1587
        %v1590 = vcvt.s32.f32 %v1583
        %v1591 = vmul.f32 %v1590, %v1588
        %v1592 = vxor.u32 %v1591, 2147483648
        %v1593 = vsel %vm1510, %v1592, %v1591
        %v1594 = vsub.s32 4, %v1570
        %v1595 = vsel %vm1510, %v1594, %v1570
        %v1596 = vsel %vm1509, %v440, %v1593
        %v1597 = vsel %vm1509, 0, %v1595
        %v1598 = vcosq.f32.pop %v1596
        %v1599 = vsinq.f32.pop %v1596
        %vm1600 = vweird.f32 %v440
        %v1601 = vadd.s32 %v1597, 3
        %v1602 = vand.u32 %v1601, 3
        %vm1603 = vcmp.lt.s32.totalorder %v1602, 2
        %vm1604 = vcmp.eq.s32.totalorder %v1602, 0
        %v1605 = vxor.u32 %v1599, 2147483648
        %v1606 = vsel %vm1604, %v1598, %v1605
        %vm1607 = vcmp.eq.s32.totalorder %v1602, 2
        %v1608 = vxor.u32 %v1598, 2147483648
        %v1609 = vsel %vm1607, %v1608, %v1599
        %v1610 = vsel %vm1603, %v1606, %v1609
        %v1611 = vsel %vm1600, nan, %v1610
        %v1612 = vand.u32 2147483647, %v445
        %vm1613 = vcmp.le.f32.partialorder %v1612, 0.7853982
        %vm1614 = vcmp.lt.s32.totalorder %v445, 0
        %v1615 = vand.u32 %v445, 2139095040
        %v1616 = vshrl.u32 %v1615, 23
        %v1617 = vsub.s32 %v1616, 127
        %v1618 = vand.u32 2147483647, %v445
        %v1619 = vand.u32 %v1618, 8388607
        %v1620 = vor.u32 %v1619, 8388608
        %v1621 = vsub.s32 0, %v1620
        %v1622 = vadd.s32 %v1617, 1
        %vm1623 = vcmp.gt.s32.totalorder %v1622, 0
        %v1624 = vsel %vm1623, %v1622, 0
        %v1625 = vshrl.u32 %v1624, 5
        %v1626 = vand.u32 %v1624, 31
        %v1627 = vsub.s32 32, %v1626
        %v1628 = vshrl.u32 683565275, %v1627
        %v1629 = vshll.u32 683565275, %v1626
        %v1630 = vshrl.u32 2475754826, %v1627
        %v1631 = vor.u32 %v1629, %v1630
        %v1632 = vshll.u32 2475754826, %v1626
        %v1633 = vshrl.u32 2131351028, %v1627
        %v1634 = vor.u32 %v1632, %v1633
        %v1635 = vshll.u32 2131351028, %v1626
        %v1636 = vshrl.u32 2102212464, %v1627
        %v1637 = vor.u32 %v1635, %v1636
        %v1638 = vshll.u32 2102212464, %v1626
        %v1639 = vshrl.u32 920167782, %v1627
        %v1640 = vor.u32 %v1638, %v1639
        %v1641 = vshll.u32 920167782, %v1626
        %v1642 = vshrl.u32 1326507024, %v1627
        %v1643 = vor.u32 %v1641, %v1642
        %vm1644 = vcmp.lt.s32.totalorder %v1625, 1
        %vm1645 = vcmp.lt.s32.totalorder %v1625, 2
        %vm1646 = vcmp.lt.s32.totalorder %v1625, 3
        %vm1647 = vcmp.lt.s32.totalorder %v1625, 4
        %v1648 = vsel %vm1644, %v1628, %v1631
        %v1649 = vsel %vm1647, %v1637, 2102212464
        %v1650 = vsel %vm1646, %v1634, %v1649
        %v1651 = vsel %vm1645, %v1648, %v1650
        %v1652 = vsel %vm1644, %v1631, %v1634
        %v1653 = vsel %vm1647, %v1640, 920167782
        %v1654 = vsel %vm1646, %v1637, %v1653
        %v1655 = vsel %vm1645, %v1652, %v1654
        %v1656 = vsel %vm1644, %v1634, %v1637
        %v1657 = vsel %vm1647, %v1643, 1326507024
        %v1658 = vsel %vm1646, %v1640, %v1657
        %v1659 = vsel %vm1645, %v1656, %v1658
        %v1660 = vshll.u32 %v1620, 8
        %v1661 = vmul.u32.u64.compose %v1660, %v1659
        %v1662 = vextract.low.u32 %v1661
        %v1663 = vextract.high.u32 %v1661
        %v1664 = vmul.u32.u64.compose %v1660, %v1655
        %v1665 = vextract.low.u32 %v1664
        %v1666 = vextract.high.u32 %v1664
        %v1667 = vmul.u32 %v1660, %v1651
        %v1668 = vadd.s32 %v1663, %v1665
        %vm1669 = vc.u32 %v1663, %v1665
        %v1670 = vadd.s32 %v1666, 1
        %v1671 = vsel %vm1669, %v1670, %v1666
        %v1672 = vadd.s32 %v1667, %v1671
        %v1673 = vadd.s32 %v1672, 536870912
        %v1674 = vshrl.u32 %v1673, 30
        %v1675 = vshll.u32 %v1674, 30
        %v1676 = vsub.s32 %v1672, %v1675
        %vm1677 = vcmp.lt.s32.totalorder %v1676, 0
        %v1678 = vsub.s32 0, %v1676
        %v1679 = vsel %vm1677, %v1678, %v1676
        %v1680 = vclz %v1679
        %v1681 = vsub.s32 %v1680, 2
        %vm1682 = vcmp.gt.s32.totalorder 0, %v1681
        %v1683 = vsel %vm1682, 0, %v1681
        %v1684 = vsub.s32 32, %v1683
        %v1685 = vshll.u32 %v1676, %v1683
        %v1686 = vshrl.u32 %v1668, %v1684
        %v1687 = vor.u32 %v1685, %v1686
        %v1688 = vsub.s32 4294967266, %v1683
        %v1689 = vadd.s32 %v1688, 127
        %v1690 = vshll.u32 %v1689, 23
        %v1691 = vor.u32 4788187, %v1690
        %v1692 = vand.u32 2147483647, %v1691
        %v1694 = vcvt.s32.f32 %v1687
        %v1695 = vmul.f32 %v1694, %v1692
        %v1696 = vxor.u32 %v1695, 2147483648
        %v1697 = vsel %vm1614, %v1696, %v1695
        %v1698 = vsub.s32 4, %v1674
        %v1699 = vsel %vm1614, %v1698, %v1674
        %v1700 = vsel %vm1613, %v445, %v1697
        %v1701 = vsel %vm1613, 0, %v1699
        %v1702 = vcosq.f32.pop %v1700
        %v1703 = vsinq.f32.pop %v1700
        %vm1704 = vweird.f32 %v445
        %v1705 = vadd.s32 %v1701, 3
        %v1706 = vand.u32 %v1705, 3
        %vm1707 = vcmp.lt.s32.totalorder %v1706, 2
        %vm1708 = vcmp.eq.s32.totalorder %v1706, 0
        %v1709 = vxor.u32 %v1703, 2147483648
        %v1710 = vsel %vm1708, %v1702, %v1709
        %vm1711 = vcmp.eq.s32.totalorder %v1706, 2
        %v1712 = vxor.u32 %v1702, 2147483648
        %v1713 = vsel %vm1711, %v1712, %v1703
        %v1714 = vsel %vm1707, %v1710, %v1713
        %v1715 = vsel %vm1704, nan, %v1714
        %v1716 = vand.u32 2147483647, %v450
        %vm1717 = vcmp.le.f32.partialorder %v1716, 0.7853982
        %vm1718 = vcmp.lt.s32.totalorder %v450, 0
        %v1719 = vand.u32 %v450, 2139095040
        %v1720 = vshrl.u32 %v1719, 23
        %v1721 = vsub.s32 %v1720, 127
        %v1722 = vand.u32 2147483647, %v450
        %v1723 = vand.u32 %v1722, 8388607
        %v1724 = vor.u32 %v1723, 8388608
        %v1725 = vsub.s32 0, %v1724
        %v1726 = vadd.s32 %v1721, 1
        %vm1727 = vcmp.gt.s32.totalorder %v1726, 0
        %v1728 = vsel %vm1727, %v1726, 0
        %v1729 = vshrl.u32 %v1728, 5
        %v1730 = vand.u32 %v1728, 31
        %v1731 = vsub.s32 32, %v1730
        %v1732 = vshrl.u32 683565275, %v1731
        %v1733 = vshll.u32 683565275, %v1730
        %v1734 = vshrl.u32 2475754826, %v1731
        %v1735 = vor.u32 %v1733, %v1734
        %v1736 = vshll.u32 2475754826, %v1730
        %v1737 = vshrl.u32 2131351028, %v1731
        %v1738 = vor.u32 %v1736, %v1737
        %v1739 = vshll.u32 2131351028, %v1730
        %v1740 = vshrl.u32 2102212464, %v1731
        %v1741 = vor.u32 %v1739, %v1740
        %v1742 = vshll.u32 2102212464, %v1730
        %v1743 = vshrl.u32 920167782, %v1731
        %v1744 = vor.u32 %v1742, %v1743
        %v1745 = vshll.u32 920167782, %v1730
        %v1746 = vshrl.u32 1326507024, %v1731
        %v1747 = vor.u32 %v1745, %v1746
        %vm1748 = vcmp.lt.s32.totalorder %v1729, 1
        %vm1749 = vcmp.lt.s32.totalorder %v1729, 2
        %vm1750 = vcmp.lt.s32.totalorder %v1729, 3
        %vm1751 = vcmp.lt.s32.totalorder %v1729, 4
        %v1752 = vsel %vm1748, %v1732, %v1735
        %v1753 = vsel %vm1751, %v1741, 2102212464
        %v1754 = vsel %vm1750, %v1738, %v1753
        %v1755 = vsel %vm1749, %v1752, %v1754
        %v1756 = vsel %vm1748, %v1735, %v1738
        %v1757 = vsel %vm1751, %v1744, 920167782
        %v1758 = vsel %vm1750, %v1741, %v1757
        %v1759 = vsel %vm1749, %v1756, %v1758
        %v1760 = vsel %vm1748, %v1738, %v1741
        %v1761 = vsel %vm1751, %v1747, 1326507024
        %v1762 = vsel %vm1750, %v1744, %v1761
        %v1763 = vsel %vm1749, %v1760, %v1762
        %v1764 = vshll.u32 %v1724, 8
        %v1765 = vmul.u32.u64.compose %v1764, %v1763
        %v1766 = vextract.low.u32 %v1765
        %v1767 = vextract.high.u32 %v1765
        %v1768 = vmul.u32.u64.compose %v1764, %v1759
        %v1769 = vextract.low.u32 %v1768
        %v1770 = vextract.high.u32 %v1768
        %v1771 = vmul.u32 %v1764, %v1755
        %v1772 = vadd.s32 %v1767, %v1769
        %vm1773 = vc.u32 %v1767, %v1769
        %v1774 = vadd.s32 %v1770, 1
        %v1775 = vsel %vm1773, %v1774, %v1770
        %v1776 = vadd.s32 %v1771, %v1775
        %v1777 = vadd.s32 %v1776, 536870912
        %v1778 = vshrl.u32 %v1777, 30
        %v1779 = vshll.u32 %v1778, 30
        %v1780 = vsub.s32 %v1776, %v1779
        %vm1781 = vcmp.lt.s32.totalorder %v1780, 0
        %v1782 = vsub.s32 0, %v1780
        %v1783 = vsel %vm1781, %v1782, %v1780
        %v1784 = vclz %v1783
        %v1785 = vsub.s32 %v1784, 2
        %vm1786 = vcmp.gt.s32.totalorder 0, %v1785
        %v1787 = vsel %vm1786, 0, %v1785
        %v1788 = vsub.s32 32, %v1787
        %v1789 = vshll.u32 %v1780, %v1787
        %v1790 = vshrl.u32 %v1772, %v1788
        %v1791 = vor.u32 %v1789, %v1790
        %v1792 = vsub.s32 4294967266, %v1787
        %v1793 = vadd.s32 %v1792, 127
        %v1794 = vshll.u32 %v1793, 23
        %v1795 = vor.u32 4788187, %v1794
        %v1796 = vand.u32 2147483647, %v1795
        %v1798 = vcvt.s32.f32 %v1791
        %v1799 = vmul.f32 %v1798, %v1796
        %v1800 = vxor.u32 %v1799, 2147483648
        %v1801 = vsel %vm1718, %v1800, %v1799
        %v1802 = vsub.s32 4, %v1778
        %v1803 = vsel %vm1718, %v1802, %v1778
        %v1804 = vsel %vm1717, %v450, %v1801
        %v1805 = vsel %vm1717, 0, %v1803
        %v1806 = vcosq.f32.pop %v1804
        %v1807 = vsinq.f32.pop %v1804
        %vm1808 = vweird.f32 %v450
        %v1809 = vadd.s32 %v1805, 3
        %v1810 = vand.u32 %v1809, 3
        %vm1811 = vcmp.lt.s32.totalorder %v1810, 2
        %vm1812 = vcmp.eq.s32.totalorder %v1810, 0
        %v1813 = vxor.u32 %v1807, 2147483648
        %v1814 = vsel %vm1812, %v1806, %v1813
        %vm1815 = vcmp.eq.s32.totalorder %v1810, 2
        %v1816 = vxor.u32 %v1806, 2147483648
        %v1817 = vsel %vm1815, %v1816, %v1807
        %v1818 = vsel %vm1811, %v1814, %v1817
        %v1819 = vsel %vm1808, nan, %v1818
        %v1820 = vand.u32 2147483647, %v455
        %vm1821 = vcmp.le.f32.partialorder %v1820, 0.7853982
        %vm1822 = vcmp.lt.s32.totalorder %v455, 0
        %v1823 = vand.u32 %v455, 2139095040
        %v1824 = vshrl.u32 %v1823, 23
        %v1825 = vsub.s32 %v1824, 127
        %v1826 = vand.u32 2147483647, %v455
        %v1827 = vand.u32 %v1826, 8388607
        %v1828 = vor.u32 %v1827, 8388608
        %v1829 = vsub.s32 0, %v1828
        %v1830 = vadd.s32 %v1825, 1
        %vm1831 = vcmp.gt.s32.totalorder %v1830, 0
        %v1832 = vsel %vm1831, %v1830, 0
        %v1833 = vshrl.u32 %v1832, 5
        %v1834 = vand.u32 %v1832, 31
        %v1835 = vsub.s32 32, %v1834
        %v1836 = vshrl.u32 683565275, %v1835
        %v1837 = vshll.u32 683565275, %v1834
        %v1838 = vshrl.u32 2475754826, %v1835
        %v1839 = vor.u32 %v1837, %v1838
        %v1840 = vshll.u32 2475754826, %v1834
        %v1841 = vshrl.u32 2131351028, %v1835
        %v1842 = vor.u32 %v1840, %v1841
        %v1843 = vshll.u32 2131351028, %v1834
        %v1844 = vshrl.u32 2102212464, %v1835
        %v1845 = vor.u32 %v1843, %v1844
        %v1846 = vshll.u32 2102212464, %v1834
        %v1847 = vshrl.u32 920167782, %v1835
        %v1848 = vor.u32 %v1846, %v1847
        %v1849 = vshll.u32 920167782, %v1834
        %v1850 = vshrl.u32 1326507024, %v1835
        %v1851 = vor.u32 %v1849, %v1850
        %vm1852 = vcmp.lt.s32.totalorder %v1833, 1
        %vm1853 = vcmp.lt.s32.totalorder %v1833, 2
        %vm1854 = vcmp.lt.s32.totalorder %v1833, 3
        %vm1855 = vcmp.lt.s32.totalorder %v1833, 4
        %v1856 = vsel %vm1852, %v1836, %v1839
        %v1857 = vsel %vm1855, %v1845, 2102212464
        %v1858 = vsel %vm1854, %v1842, %v1857
        %v1859 = vsel %vm1853, %v1856, %v1858
        %v1860 = vsel %vm1852, %v1839, %v1842
        %v1861 = vsel %vm1855, %v1848, 920167782
        %v1862 = vsel %vm1854, %v1845, %v1861
        %v1863 = vsel %vm1853, %v1860, %v1862
        %v1864 = vsel %vm1852, %v1842, %v1845
        %v1865 = vsel %vm1855, %v1851, 1326507024
        %v1866 = vsel %vm1854, %v1848, %v1865
        %v1867 = vsel %vm1853, %v1864, %v1866
        %v1868 = vshll.u32 %v1828, 8
        %v1869 = vmul.u32.u64.compose %v1868, %v1867
        %v1870 = vextract.low.u32 %v1869
        %v1871 = vextract.high.u32 %v1869
        %v1872 = vmul.u32.u64.compose %v1868, %v1863
        %v1873 = vextract.low.u32 %v1872
        %v1874 = vextract.high.u32 %v1872
        %v1875 = vmul.u32 %v1868, %v1859
        %v1876 = vadd.s32 %v1871, %v1873
        %vm1877 = vc.u32 %v1871, %v1873
        %v1878 = vadd.s32 %v1874, 1
        %v1879 = vsel %vm1877, %v1878, %v1874
        %v1880 = vadd.s32 %v1875, %v1879
        %v1881 = vadd.s32 %v1880, 536870912
        %v1882 = vshrl.u32 %v1881, 30
        %v1883 = vshll.u32 %v1882, 30
        %v1884 = vsub.s32 %v1880, %v1883
        %vm1885 = vcmp.lt.s32.totalorder %v1884, 0
        %v1886 = vsub.s32 0, %v1884
        %v1887 = vsel %vm1885, %v1886, %v1884
        %v1888 = vclz %v1887
        %v1889 = vsub.s32 %v1888, 2
        %vm1890 = vcmp.gt.s32.totalorder 0, %v1889
        %v1891 = vsel %vm1890, 0, %v1889
        %v1892 = vsub.s32 32, %v1891
        %v1893 = vshll.u32 %v1884, %v1891
        %v1894 = vshrl.u32 %v1876, %v1892
        %v1895 = vor.u32 %v1893, %v1894
        %v1896 = vsub.s32 4294967266, %v1891
        %v1897 = vadd.s32 %v1896, 127
        %v1898 = vshll.u32 %v1897, 23
        %v1899 = vor.u32 4788187, %v1898
        %v1900 = vand.u32 2147483647, %v1899
        %v1902 = vcvt.s32.f32 %v1895
        %v1903 = vmul.f32 %v1902, %v1900
        %v1904 = vxor.u32 %v1903, 2147483648
        %v1905 = vsel %vm1822, %v1904, %v1903
        %v1906 = vsub.s32 4, %v1882
        %v1907 = vsel %vm1822, %v1906, %v1882
        %v1908 = vsel %vm1821, %v455, %v1905
        %v1909 = vsel %vm1821, 0, %v1907
        %v1910 = vcosq.f32.pop %v1908
        %v1911 = vsinq.f32.pop %v1908
        %vm1912 = vweird.f32 %v455
        %v1913 = vadd.s32 %v1909, 3
        %v1914 = vand.u32 %v1913, 3
        %vm1915 = vcmp.lt.s32.totalorder %v1914, 2
        %vm1916 = vcmp.eq.s32.totalorder %v1914, 0
        %v1917 = vxor.u32 %v1911, 2147483648
        %v1918 = vsel %vm1916, %v1910, %v1917
        %vm1919 = vcmp.eq.s32.totalorder %v1914, 2
        %v1920 = vxor.u32 %v1910, 2147483648
        %v1921 = vsel %vm1919, %v1920, %v1911
        %v1922 = vsel %vm1915, %v1918, %v1921
        %v1923 = vsel %vm1912, nan, %v1922
        %v1924 = vand.u32 2147483647, %v460
        %vm1925 = vcmp.le.f32.partialorder %v1924, 0.7853982
        %vm1926 = vcmp.lt.s32.totalorder %v460, 0
        %v1927 = vand.u32 %v460, 2139095040
        %v1928 = vshrl.u32 %v1927, 23
        %v1929 = vsub.s32 %v1928, 127
        %v1930 = vand.u32 2147483647, %v460
        %v1931 = vand.u32 %v1930, 8388607
        %v1932 = vor.u32 %v1931, 8388608
        %v1933 = vsub.s32 0, %v1932
        %v1934 = vadd.s32 %v1929, 1
        %vm1935 = vcmp.gt.s32.totalorder %v1934, 0
        %v1936 = vsel %vm1935, %v1934, 0
        %v1937 = vshrl.u32 %v1936, 5
        %v1938 = vand.u32 %v1936, 31
        %v1939 = vsub.s32 32, %v1938
        %v1940 = vshrl.u32 683565275, %v1939
        %v1941 = vshll.u32 683565275, %v1938
        %v1942 = vshrl.u32 2475754826, %v1939
        %v1943 = vor.u32 %v1941, %v1942
        %v1944 = vshll.u32 2475754826, %v1938
        %v1945 = vshrl.u32 2131351028, %v1939
        %v1946 = vor.u32 %v1944, %v1945
        %v1947 = vshll.u32 2131351028, %v1938
        %v1948 = vshrl.u32 2102212464, %v1939
        %v1949 = vor.u32 %v1947, %v1948
        %v1950 = vshll.u32 2102212464, %v1938
        %v1951 = vshrl.u32 920167782, %v1939
        %v1952 = vor.u32 %v1950, %v1951
        %v1953 = vshll.u32 920167782, %v1938
        %v1954 = vshrl.u32 1326507024, %v1939
        %v1955 = vor.u32 %v1953, %v1954
        %vm1956 = vcmp.lt.s32.totalorder %v1937, 1
        %vm1957 = vcmp.lt.s32.totalorder %v1937, 2
        %vm1958 = vcmp.lt.s32.totalorder %v1937, 3
        %vm1959 = vcmp.lt.s32.totalorder %v1937, 4
        %v1960 = vsel %vm1956, %v1940, %v1943
        %v1961 = vsel %vm1959, %v1949, 2102212464
        %v1962 = vsel %vm1958, %v1946, %v1961
        %v1963 = vsel %vm1957, %v1960, %v1962
        %v1964 = vsel %vm1956, %v1943, %v1946
        %v1965 = vsel %vm1959, %v1952, 920167782
        %v1966 = vsel %vm1958, %v1949, %v1965
        %v1967 = vsel %vm1957, %v1964, %v1966
        %v1968 = vsel %vm1956, %v1946, %v1949
        %v1969 = vsel %vm1959, %v1955, 1326507024
        %v1970 = vsel %vm1958, %v1952, %v1969
        %v1971 = vsel %vm1957, %v1968, %v1970
        %v1972 = vshll.u32 %v1932, 8
        %v1973 = vmul.u32.u64.compose %v1972, %v1971
        %v1974 = vextract.low.u32 %v1973
        %v1975 = vextract.high.u32 %v1973
        %v1976 = vmul.u32.u64.compose %v1972, %v1967
        %v1977 = vextract.low.u32 %v1976
        %v1978 = vextract.high.u32 %v1976
        %v1979 = vmul.u32 %v1972, %v1963
        %v1980 = vadd.s32 %v1975, %v1977
        %vm1981 = vc.u32 %v1975, %v1977
        %v1982 = vadd.s32 %v1978, 1
        %v1983 = vsel %vm1981, %v1982, %v1978
        %v1984 = vadd.s32 %v1979, %v1983
        %v1985 = vadd.s32 %v1984, 536870912
        %v1986 = vshrl.u32 %v1985, 30
        %v1987 = vshll.u32 %v1986, 30
        %v1988 = vsub.s32 %v1984, %v1987
        %vm1989 = vcmp.lt.s32.totalorder %v1988, 0
        %v1990 = vsub.s32 0, %v1988
        %v1991 = vsel %vm1989, %v1990, %v1988
        %v1992 = vclz %v1991
        %v1993 = vsub.s32 %v1992, 2
        %vm1994 = vcmp.gt.s32.totalorder 0, %v1993
        %v1995 = vsel %vm1994, 0, %v1993
        %v1996 = vsub.s32 32, %v1995
        %v1997 = vshll.u32 %v1988, %v1995
        %v1998 = vshrl.u32 %v1980, %v1996
        %v1999 = vor.u32 %v1997, %v1998
        %v2000 = vsub.s32 4294967266, %v1995
        %v2001 = vadd.s32 %v2000, 127
        %v2002 = vshll.u32 %v2001, 23
        %v2003 = vor.u32 4788187, %v2002
        %v2004 = vand.u32 2147483647, %v2003
        %v2006 = vcvt.s32.f32 %v1999
        %v2007 = vmul.f32 %v2006, %v2004
        %v2008 = vxor.u32 %v2007, 2147483648
        %v2009 = vsel %vm1926, %v2008, %v2007
        %v2010 = vsub.s32 4, %v1986
        %v2011 = vsel %vm1926, %v2010, %v1986
        %v2012 = vsel %vm1925, %v460, %v2009
        %v2013 = vsel %vm1925, 0, %v2011
        %v2014 = vcosq.f32.pop %v2012
        %v2015 = vsinq.f32.pop %v2012
        %vm2016 = vweird.f32 %v460
        %v2017 = vadd.s32 %v2013, 3
        %v2018 = vand.u32 %v2017, 3
        %vm2019 = vcmp.lt.s32.totalorder %v2018, 2
        %vm2020 = vcmp.eq.s32.totalorder %v2018, 0
        %v2021 = vxor.u32 %v2015, 2147483648
        %v2022 = vsel %vm2020, %v2014, %v2021
        %vm2023 = vcmp.eq.s32.totalorder %v2018, 2
        %v2024 = vxor.u32 %v2014, 2147483648
        %v2025 = vsel %vm2023, %v2024, %v2015
        %v2026 = vsel %vm2019, %v2022, %v2025
        %v2027 = vsel %vm2016, nan, %v2026
        %v2028 = vand.u32 2147483647, %v465
        %vm2029 = vcmp.le.f32.partialorder %v2028, 0.7853982
        %vm2030 = vcmp.lt.s32.totalorder %v465, 0
        %v2031 = vand.u32 %v465, 2139095040
        %v2032 = vshrl.u32 %v2031, 23
        %v2033 = vsub.s32 %v2032, 127
        %v2034 = vand.u32 2147483647, %v465
        %v2035 = vand.u32 %v2034, 8388607
        %v2036 = vor.u32 %v2035, 8388608
        %v2037 = vsub.s32 0, %v2036
        %v2038 = vadd.s32 %v2033, 1
        %vm2039 = vcmp.gt.s32.totalorder %v2038, 0
        %v2040 = vsel %vm2039, %v2038, 0
        %v2041 = vshrl.u32 %v2040, 5
        %v2042 = vand.u32 %v2040, 31
        %v2043 = vsub.s32 32, %v2042
        %v2044 = vshrl.u32 683565275, %v2043
        %v2045 = vshll.u32 683565275, %v2042
        %v2046 = vshrl.u32 2475754826, %v2043
        %v2047 = vor.u32 %v2045, %v2046
        %v2048 = vshll.u32 2475754826, %v2042
        %v2049 = vshrl.u32 2131351028, %v2043
        %v2050 = vor.u32 %v2048, %v2049
        %v2051 = vshll.u32 2131351028, %v2042
        %v2052 = vshrl.u32 2102212464, %v2043
        %v2053 = vor.u32 %v2051, %v2052
        %v2054 = vshll.u32 2102212464, %v2042
        %v2055 = vshrl.u32 920167782, %v2043
        %v2056 = vor.u32 %v2054, %v2055
        %v2057 = vshll.u32 920167782, %v2042
        %v2058 = vshrl.u32 1326507024, %v2043
        %v2059 = vor.u32 %v2057, %v2058
        %vm2060 = vcmp.lt.s32.totalorder %v2041, 1
        %vm2061 = vcmp.lt.s32.totalorder %v2041, 2
        %vm2062 = vcmp.lt.s32.totalorder %v2041, 3
        %vm2063 = vcmp.lt.s32.totalorder %v2041, 4
        %v2064 = vsel %vm2060, %v2044, %v2047
        %v2065 = vsel %vm2063, %v2053, 2102212464
        %v2066 = vsel %vm2062, %v2050, %v2065
        %v2067 = vsel %vm2061, %v2064, %v2066
        %v2068 = vsel %vm2060, %v2047, %v2050
        %v2069 = vsel %vm2063, %v2056, 920167782
        %v2070 = vsel %vm2062, %v2053, %v2069
        %v2071 = vsel %vm2061, %v2068, %v2070
        %v2072 = vsel %vm2060, %v2050, %v2053
        %v2073 = vsel %vm2063, %v2059, 1326507024
        %v2074 = vsel %vm2062, %v2056, %v2073
        %v2075 = vsel %vm2061, %v2072, %v2074
        %v2076 = vshll.u32 %v2036, 8
        %v2077 = vmul.u32.u64.compose %v2076, %v2075
        %v2078 = vextract.low.u32 %v2077
        %v2079 = vextract.high.u32 %v2077
        %v2080 = vmul.u32.u64.compose %v2076, %v2071
        %v2081 = vextract.low.u32 %v2080
        %v2082 = vextract.high.u32 %v2080
        %v2083 = vmul.u32 %v2076, %v2067
        %v2084 = vadd.s32 %v2079, %v2081
        %vm2085 = vc.u32 %v2079, %v2081
        %v2086 = vadd.s32 %v2082, 1
        %v2087 = vsel %vm2085, %v2086, %v2082
        %v2088 = vadd.s32 %v2083, %v2087
        %v2089 = vadd.s32 %v2088, 536870912
        %v2090 = vshrl.u32 %v2089, 30
        %v2091 = vshll.u32 %v2090, 30
        %v2092 = vsub.s32 %v2088, %v2091
        %vm2093 = vcmp.lt.s32.totalorder %v2092, 0
        %v2094 = vsub.s32 0, %v2092
        %v2095 = vsel %vm2093, %v2094, %v2092
        %v2096 = vclz %v2095
        %v2097 = vsub.s32 %v2096, 2
        %vm2098 = vcmp.gt.s32.totalorder 0, %v2097
        %v2099 = vsel %vm2098, 0, %v2097
        %v2100 = vsub.s32 32, %v2099
        %v2101 = vshll.u32 %v2092, %v2099
        %v2102 = vshrl.u32 %v2084, %v2100
        %v2103 = vor.u32 %v2101, %v2102
        %v2104 = vsub.s32 4294967266, %v2099
        %v2105 = vadd.s32 %v2104, 127
        %v2106 = vshll.u32 %v2105, 23
        %v2107 = vor.u32 4788187, %v2106
        %v2108 = vand.u32 2147483647, %v2107
        %v2110 = vcvt.s32.f32 %v2103
        %v2111 = vmul.f32 %v2110, %v2108
        %v2112 = vxor.u32 %v2111, 2147483648
        %v2113 = vsel %vm2030, %v2112, %v2111
        %v2114 = vsub.s32 4, %v2090
        %v2115 = vsel %vm2030, %v2114, %v2090
        %v2116 = vsel %vm2029, %v465, %v2113
        %v2117 = vsel %vm2029, 0, %v2115
        %v2118 = vcosq.f32.pop %v2116
        %v2119 = vsinq.f32.pop %v2116
        %vm2120 = vweird.f32 %v465
        %v2121 = vadd.s32 %v2117, 3
        %v2122 = vand.u32 %v2121, 3
        %vm2123 = vcmp.lt.s32.totalorder %v2122, 2
        %vm2124 = vcmp.eq.s32.totalorder %v2122, 0
        %v2125 = vxor.u32 %v2119, 2147483648
        %v2126 = vsel %vm2124, %v2118, %v2125
        %vm2127 = vcmp.eq.s32.totalorder %v2122, 2
        %v2128 = vxor.u32 %v2118, 2147483648
        %v2129 = vsel %vm2127, %v2128, %v2119
        %v2130 = vsel %vm2123, %v2126, %v2129
        %v2131 = vsel %vm2120, nan, %v2130
        %v2132 = vld [vmem:[%s2] sm:$0xff]
        %v2133 = vld [vmem:[%s2 + $0x8] sm:$0xff]
        %v2134 = vld [vmem:[%s2 + $0x10] sm:$0xff]
        %v2135 = vld [vmem:[%s2 + $0x18] sm:$0xff]
        %v2136 = vld [vmem:[%s2 + $0x20] sm:$0xff]
        %v2137 = vld [vmem:[%s2 + $0x28] sm:$0xff]
        %v2138 = vld [vmem:[%s2 + $0x30] sm:$0xff]
        %v2139 = vld [vmem:[%s2 + $0x38] sm:$0xff]
        %v2140 = vld [vmem:[%s2 + $0x40] sm:$0xff]
        %v2141 = vld [vmem:[%s2 + $0x48] sm:$0xff]
        %v2142 = vld [vmem:[%s2 + $0x50] sm:$0xff]
        %v2143 = vld [vmem:[%s2 + $0x58] sm:$0xff]
        %v2144 = vld [vmem:[%s2 + $0x60] sm:$0xff]
        %v2145 = vld [vmem:[%s2 + $0x68] sm:$0xff]
        %v2146 = vld [vmem:[%s2 + $0x70] sm:$0xff]
        %v2147 = vld [vmem:[%s2 + $0x78] sm:$0xff]
        %v2148 = vld [vmem:[%s3 + $0x1] sm:$0x1]
        %v2149 = vlaneseq
        %v2150 = vshrl.u32 %v2149, 7
        %v2151 = vsub.s32 0, %v2150
        %v2152 = vrot.slane %v2148, %v2151
        %2153 = vmatprep.subr.mxu0 0.0
        %2154 = vmatpush1.msra.mxu0 %v2132
        %2155 = vmatprep.subr.mxu0 0.0
        %2156 = vmatpush1.msra.mxu0 %v2133
        %2157 = vmatprep.subr.mxu0 0.0
        %2158 = vmatpush1.msra.mxu0 %v2134
        %2159 = vmatprep.subr.mxu0 0.0
        %2160 = vmatpush1.msra.mxu0 %v2135
        %2161 = vmatprep.subr.mxu0 0.0
        %2162 = vmatpush1.msra.mxu0 %v2136
        %2163 = vmatprep.subr.mxu0 0.0
        %2164 = vmatpush1.msra.mxu0 %v2137
        %2165 = vmatprep.subr.mxu0 0.0
        %2166 = vmatpush1.msra.mxu0 %v2138
        %2167 = vmatprep.subr.mxu0 0.0
        %2168 = vmatpush1.msra.mxu0 %v2139
        %2169 = vmatprep.subr.mxu0 0.0
        %2170 = vmatpush1.msra.mxu0 %v2140
        %2171 = vmatprep.subr.mxu0 0.0
        %2172 = vmatpush1.msra.mxu0 %v2141
        %2173 = vmatprep.subr.mxu0 0.0
        %2174 = vmatpush1.msra.mxu0 %v2142
        %2175 = vmatprep.subr.mxu0 0.0
        %2176 = vmatpush1.msra.mxu0 %v2143
        %2177 = vmatprep.subr.mxu0 0.0
        %2178 = vmatpush1.msra.mxu0 %v2144
        %2179 = vmatprep.subr.mxu0 0.0
        %2180 = vmatpush1.msra.mxu0 %v2145
        %2181 = vmatprep.subr.mxu0 0.0
        %2182 = vmatpush1.msra.mxu0 %v2146
        %2183 = vmatprep.subr.mxu0 0.0
        %2184 = vmatpush1.msra.mxu0 %v2147
        %2185 = vmatprep.subr.mxu0 0.0
        %2186 = vmatpush1.msra.mxu0 0.0
        %2187 = vmatprep.subr.mxu0 0.0
        %2188 = vmatpush1.msra.mxu0 0.0
        %2189 = vmatprep.subr.mxu0 0.0
        %2190 = vmatpush1.msra.mxu0 0.0
        %2191 = vmatprep.subr.mxu0 0.0
        %2192 = vmatpush1.msra.mxu0 0.0
        %2193 = vmatprep.subr.mxu0 0.0
        %2194 = vmatpush1.msra.mxu0 0.0
        %2195 = vmatprep.subr.mxu0 0.0
        %2196 = vmatpush1.msra.mxu0 0.0
        %2197 = vmatprep.subr.mxu0 0.0
        %2198 = vmatpush1.msra.mxu0 0.0
        %2199 = vmatprep.subr.mxu0 0.0
        %2200 = vmatpush1.msra.mxu0 0.0
        %2201 = vmatprep.subr.mxu0 0.0
        %2202 = vmatpush1.msra.mxu0 0.0
        %2203 = vmatprep.subr.mxu0 0.0
        %2204 = vmatpush1.msra.mxu0 0.0
        %2205 = vmatprep.subr.mxu0 0.0
        %2206 = vmatpush1.msra.mxu0 0.0
        %2207 = vmatprep.subr.mxu0 0.0
        %2208 = vmatpush1.msra.mxu0 0.0
        %2209 = vmatprep.subr.mxu0 0.0
        %2210 = vmatpush1.msra.mxu0 0.0
        %2211 = vmatprep.subr.mxu0 0.0
        %2212 = vmatpush1.msra.mxu0 0.0
        %2213 = vmatprep.subr.mxu0 0.0
        %2214 = vmatpush1.msra.mxu0 0.0
        %2215 = vmatprep.subr.mxu0 0.0
        %2216 = vmatpush1.msra.mxu0 0.0
        %2217 = vmatprep.mubr.f32.mxu0 0.0
        %2218 = vmatmul.mubr.f32.gmra.mrb[0].mxu0 %v571
        %v2219 = vpop.f32.mrb[0].mxu0
        %v2220 = vadd.f32 %v2152, %v2219
        %v2221 = vpop.f32.mrb[0].mxu0
        %2222 = vmatprep.mubr.f32.mxu0 0.0
        %2223 = vmatmul.mubr.f32.gmra.mrb[0].mxu0 %v675
        %v2224 = vpop.f32.mrb[0].mxu0
        %v2225 = vadd.f32 %v2152, %v2224
        %v2226 = vpop.f32.mrb[0].mxu0
        %2227 = vmatprep.mubr.f32.mxu0 0.0
        %2228 = vmatmul.mubr.f32.gmra.mrb[0].mxu0 %v779
        %v2229 = vpop.f32.mrb[0].mxu0
        %v2230 = vadd.f32 %v2152, %v2229
        %v2231 = vpop.f32.mrb[0].mxu0
        %2232 = vmatprep.mubr.f32.mxu0 0.0
        %2233 = vmatmul.mubr.f32.gmra.mrb[0].mxu0 %v883
        %v2234 = vpop.f32.mrb[0].mxu0
        %v2235 = vadd.f32 %v2152, %v2234
        %v2236 = vpop.f32.mrb[0].mxu0
        %2237 = vmatprep.mubr.f32.mxu0 0.0
        %2238 = vmatmul.mubr.f32.gmra.mrb[0].mxu0 %v987
        %v2239 = vpop.f32.mrb[0].mxu0
        %v2240 = vadd.f32 %v2152, %v2239
        %v2241 = vpop.f32.mrb[0].mxu0
        %2242 = vmatprep.mubr.f32.mxu0 0.0
        %2243 = vmatmul.mubr.f32.gmra.mrb[0].mxu0 %v1091
        %v2244 = vpop.f32.mrb[0].mxu0
        %v2245 = vadd.f32 %v2152, %v2244
        %v2246 = vpop.f32.mrb[0].mxu0
        %2247 = vmatprep.mubr.f32.mxu0 0.0
        %2248 = vmatmul.mubr.f32.gmra.mrb[0].mxu0 %v1195
        %v2249 = vpop.f32.mrb[0].mxu0
        %v2250 = vadd.f32 %v2152, %v2249
        %v2251 = vpop.f32.mrb[0].mxu0
        %2252 = vmatprep.mubr.f32.mxu0 0.0
        %2253 = vmatmul.mubr.f32.gmra.mrb[0].mxu0 %v1299
        %v2254 = vpop.f32.mrb[0].mxu0
        %v2255 = vadd.f32 %v2152, %v2254
        %v2256 = vpop.f32.mrb[0].mxu0
        %2257 = vmatprep.mubr.f32.mxu0 0.0
        %2258 = vmatmul.mubr.f32.gmra.mrb[0].mxu0 %v1403
        %v2259 = vpop.f32.mrb[0].mxu0
        %v2260 = vadd.f32 %v2152, %v2259
        %v2261 = vpop.f32.mrb[0].mxu0
        %2262 = vmatprep.mubr.f32.mxu0 0.0
        %2263 = vmatmul.mubr.f32.gmra.mrb[0].mxu0 %v1507
        %v2264 = vpop.f32.mrb[0].mxu0
        %v2265 = vadd.f32 %v2152, %v2264
        %v2266 = vpop.f32.mrb[0].mxu0
        %2267 = vmatprep.mubr.f32.mxu0 0.0
        %2268 = vmatmul.mubr.f32.gmra.mrb[0].mxu0 %v1611
        %v2269 = vpop.f32.mrb[0].mxu0
        %v2270 = vadd.f32 %v2152, %v2269
        %v2271 = vpop.f32.mrb[0].mxu0
        %2272 = vmatprep.mubr.f32.mxu0 0.0
        %2273 = vmatmul.mubr.f32.gmra.mrb[0].mxu0 %v1715
        %v2274 = vpop.f32.mrb[0].mxu0
        %v2275 = vadd.f32 %v2152, %v2274
        %v2276 = vpop.f32.mrb[0].mxu0
        %2277 = vmatprep.mubr.f32.mxu0 0.0
        %2278 = vmatmul.mubr.f32.gmra.mrb[0].mxu0 %v1819
        %v2279 = vpop.f32.mrb[0].mxu0
        %v2280 = vadd.f32 %v2152, %v2279
        %v2281 = vpop.f32.mrb[0].mxu0
        %2282 = vmatprep.mubr.f32.mxu0 0.0
        %2283 = vmatmul.mubr.f32.gmra.mrb[0].mxu0 %v1923
        %v2284 = vpop.f32.mrb[0].mxu0
        %v2285 = vadd.f32 %v2152, %v2284
        %v2286 = vpop.f32.mrb[0].mxu0
        %2287 = vmatprep.mubr.f32.mxu0 0.0
        %2288 = vmatmul.mubr.f32.gmra.mrb[0].mxu0 %v2027
        %v2289 = vpop.f32.mrb[0].mxu0
        %v2290 = vadd.f32 %v2152, %v2289
        %v2291 = vpop.f32.mrb[0].mxu0
        %2292 = vmatprep.mubr.f32.mxu0 0.0
        %2293 = vmatmul.mubr.f32.gmra.mrb[0].mxu0 %v2131
        %v2294 = vpop.f32.mrb[0].mxu0
        %v2295 = vadd.f32 %v2152, %v2294
        %v2296 = vpop.f32.mrb[0].mxu0
        %2297 = vdwg.mxu0
        %v2298 = vand.u32 2147483647, %v2220
        %vm2299 = vcmp.le.f32.partialorder %v2298, 0.7853982
        %vm2300 = vcmp.lt.s32.totalorder %v2220, 0
        %v2301 = vand.u32 %v2220, 2139095040
        %v2302 = vshrl.u32 %v2301, 23
        %v2303 = vsub.s32 %v2302, 127
        %v2304 = vand.u32 2147483647, %v2220
        %v2305 = vand.u32 %v2304, 8388607
        %v2306 = vor.u32 %v2305, 8388608
        %v2307 = vsub.s32 0, %v2306
        %v2308 = vadd.s32 %v2303, 1
        %vm2309 = vcmp.gt.s32.totalorder %v2308, 0
        %v2310 = vsel %vm2309, %v2308, 0
        %v2311 = vshrl.u32 %v2310, 5
        %v2312 = vand.u32 %v2310, 31
        %v2313 = vsub.s32 32, %v2312
        %v2314 = vshrl.u32 683565275, %v2313
        %v2315 = vshll.u32 683565275, %v2312
        %v2316 = vshrl.u32 2475754826, %v2313
        %v2317 = vor.u32 %v2315, %v2316
        %v2318 = vshll.u32 2475754826, %v2312
        %v2319 = vshrl.u32 2131351028, %v2313
        %v2320 = vor.u32 %v2318, %v2319
        %v2321 = vshll.u32 2131351028, %v2312
        %v2322 = vshrl.u32 2102212464, %v2313
        %v2323 = vor.u32 %v2321, %v2322
        %v2324 = vshll.u32 2102212464, %v2312
        %v2325 = vshrl.u32 920167782, %v2313
        %v2326 = vor.u32 %v2324, %v2325
        %v2327 = vshll.u32 920167782, %v2312
        %v2328 = vshrl.u32 1326507024, %v2313
        %v2329 = vor.u32 %v2327, %v2328
        %vm2330 = vcmp.lt.s32.totalorder %v2311, 1
        %vm2331 = vcmp.lt.s32.totalorder %v2311, 2
        %vm2332 = vcmp.lt.s32.totalorder %v2311, 3
        %vm2333 = vcmp.lt.s32.totalorder %v2311, 4
        %v2334 = vsel %vm2330, %v2314, %v2317
        %v2335 = vsel %vm2333, %v2323, 2102212464
        %v2336 = vsel %vm2332, %v2320, %v2335
        %v2337 = vsel %vm2331, %v2334, %v2336
        %v2338 = vsel %vm2330, %v2317, %v2320
        %v2339 = vsel %vm2333, %v2326, 920167782
        %v2340 = vsel %vm2332, %v2323, %v2339
        %v2341 = vsel %vm2331, %v2338, %v2340
        %v2342 = vsel %vm2330, %v2320, %v2323
        %v2343 = vsel %vm2333, %v2329, 1326507024
        %v2344 = vsel %vm2332, %v2326, %v2343
        %v2345 = vsel %vm2331, %v2342, %v2344
        %v2346 = vshll.u32 %v2306, 8
        %v2347 = vmul.u32.u64.compose %v2346, %v2345
        %v2348 = vextract.low.u32 %v2347
        %v2349 = vextract.high.u32 %v2347
        %v2350 = vmul.u32.u64.compose %v2346, %v2341
        %v2351 = vextract.low.u32 %v2350
        %v2352 = vextract.high.u32 %v2350
        %v2353 = vmul.u32 %v2346, %v2337
        %v2354 = vadd.s32 %v2349, %v2351
        %vm2355 = vc.u32 %v2349, %v2351
        %v2356 = vadd.s32 %v2352, 1
        %v2357 = vsel %vm2355, %v2356, %v2352
        %v2358 = vadd.s32 %v2353, %v2357
        %v2359 = vadd.s32 %v2358, 536870912
        %v2360 = vshrl.u32 %v2359, 30
        %v2361 = vshll.u32 %v2360, 30
        %v2362 = vsub.s32 %v2358, %v2361
        %vm2363 = vcmp.lt.s32.totalorder %v2362, 0
        %v2364 = vsub.s32 0, %v2362
        %v2365 = vsel %vm2363, %v2364, %v2362
        %v2366 = vclz %v2365
        %v2367 = vsub.s32 %v2366, 2
        %vm2368 = vcmp.gt.s32.totalorder 0, %v2367
        %v2369 = vsel %vm2368, 0, %v2367
        %v2370 = vsub.s32 32, %v2369
        %v2371 = vshll.u32 %v2362, %v2369
        %v2372 = vshrl.u32 %v2354, %v2370
        %v2373 = vor.u32 %v2371, %v2372
        %v2374 = vsub.s32 4294967266, %v2369
        %v2375 = vadd.s32 %v2374, 127
        %v2376 = vshll.u32 %v2375, 23
        %v2377 = vor.u32 4788187, %v2376
        %v2378 = vand.u32 2147483647, %v2377
        %v2380 = vcvt.s32.f32 %v2373
        %v2381 = vmul.f32 %v2380, %v2378
        %v2382 = vxor.u32 %v2381, 2147483648
        %v2383 = vsel %vm2300, %v2382, %v2381
        %v2384 = vsub.s32 4, %v2360
        %v2385 = vsel %vm2300, %v2384, %v2360
        %v2386 = vsel %vm2299, %v2220, %v2383
        %v2387 = vsel %vm2299, 0, %v2385
        %v2388 = vcosq.f32.pop %v2386
        %v2389 = vsinq.f32.pop %v2386
        %vm2390 = vweird.f32 %v2220
        %v2391 = vadd.s32 %v2387, 3
        %v2392 = vand.u32 %v2391, 3
        %vm2393 = vcmp.lt.s32.totalorder %v2392, 2
        %vm2394 = vcmp.eq.s32.totalorder %v2392, 0
        %v2395 = vxor.u32 %v2389, 2147483648
        %v2396 = vsel %vm2394, %v2388, %v2395
        %vm2397 = vcmp.eq.s32.totalorder %v2392, 2
        %v2398 = vxor.u32 %v2388, 2147483648
        %v2399 = vsel %vm2397, %v2398, %v2389
        %v2400 = vsel %vm2393, %v2396, %v2399
        %v2401 = vsel %vm2390, nan, %v2400
        %v2402 = vand.u32 2147483647, %v2225
        %vm2403 = vcmp.le.f32.partialorder %v2402, 0.7853982
        %vm2404 = vcmp.lt.s32.totalorder %v2225, 0
        %v2405 = vand.u32 %v2225, 2139095040
        %v2406 = vshrl.u32 %v2405, 23
        %v2407 = vsub.s32 %v2406, 127
        %v2408 = vand.u32 2147483647, %v2225
        %v2409 = vand.u32 %v2408, 8388607
        %v2410 = vor.u32 %v2409, 8388608
        %v2411 = vsub.s32 0, %v2410
        %v2412 = vadd.s32 %v2407, 1
        %vm2413 = vcmp.gt.s32.totalorder %v2412, 0
        %v2414 = vsel %vm2413, %v2412, 0
        %v2415 = vshrl.u32 %v2414, 5
        %v2416 = vand.u32 %v2414, 31
        %v2417 = vsub.s32 32, %v2416
        %v2418 = vshrl.u32 683565275, %v2417
        %v2419 = vshll.u32 683565275, %v2416
        %v2420 = vshrl.u32 2475754826, %v2417
        %v2421 = vor.u32 %v2419, %v2420
        %v2422 = vshll.u32 2475754826, %v2416
        %v2423 = vshrl.u32 2131351028, %v2417
        %v2424 = vor.u32 %v2422, %v2423
        %v2425 = vshll.u32 2131351028, %v2416
        %v2426 = vshrl.u32 2102212464, %v2417
        %v2427 = vor.u32 %v2425, %v2426
        %v2428 = vshll.u32 2102212464, %v2416
        %v2429 = vshrl.u32 920167782, %v2417
        %v2430 = vor.u32 %v2428, %v2429
        %v2431 = vshll.u32 920167782, %v2416
        %v2432 = vshrl.u32 1326507024, %v2417
        %v2433 = vor.u32 %v2431, %v2432
        %vm2434 = vcmp.lt.s32.totalorder %v2415, 1
        %vm2435 = vcmp.lt.s32.totalorder %v2415, 2
        %vm2436 = vcmp.lt.s32.totalorder %v2415, 3
        %vm2437 = vcmp.lt.s32.totalorder %v2415, 4
        %v2438 = vsel %vm2434, %v2418, %v2421
        %v2439 = vsel %vm2437, %v2427, 2102212464
        %v2440 = vsel %vm2436, %v2424, %v2439
        %v2441 = vsel %vm2435, %v2438, %v2440
        %v2442 = vsel %vm2434, %v2421, %v2424
        %v2443 = vsel %vm2437, %v2430, 920167782
        %v2444 = vsel %vm2436, %v2427, %v2443
        %v2445 = vsel %vm2435, %v2442, %v2444
        %v2446 = vsel %vm2434, %v2424, %v2427
        %v2447 = vsel %vm2437, %v2433, 1326507024
        %v2448 = vsel %vm2436, %v2430, %v2447
        %v2449 = vsel %vm2435, %v2446, %v2448
        %v2450 = vshll.u32 %v2410, 8
        %v2451 = vmul.u32.u64.compose %v2450, %v2449
        %v2452 = vextract.low.u32 %v2451
        %v2453 = vextract.high.u32 %v2451
        %v2454 = vmul.u32.u64.compose %v2450, %v2445
        %v2455 = vextract.low.u32 %v2454
        %v2456 = vextract.high.u32 %v2454
        %v2457 = vmul.u32 %v2450, %v2441
        %v2458 = vadd.s32 %v2453, %v2455
        %vm2459 = vc.u32 %v2453, %v2455
        %v2460 = vadd.s32 %v2456, 1
        %v2461 = vsel %vm2459, %v2460, %v2456
        %v2462 = vadd.s32 %v2457, %v2461
        %v2463 = vadd.s32 %v2462, 536870912
        %v2464 = vshrl.u32 %v2463, 30
        %v2465 = vshll.u32 %v2464, 30
        %v2466 = vsub.s32 %v2462, %v2465
        %vm2467 = vcmp.lt.s32.totalorder %v2466, 0
        %v2468 = vsub.s32 0, %v2466
        %v2469 = vsel %vm2467, %v2468, %v2466
        %v2470 = vclz %v2469
        %v2471 = vsub.s32 %v2470, 2
        %vm2472 = vcmp.gt.s32.totalorder 0, %v2471
        %v2473 = vsel %vm2472, 0, %v2471
        %v2474 = vsub.s32 32, %v2473
        %v2475 = vshll.u32 %v2466, %v2473
        %v2476 = vshrl.u32 %v2458, %v2474
        %v2477 = vor.u32 %v2475, %v2476
        %v2478 = vsub.s32 4294967266, %v2473
        %v2479 = vadd.s32 %v2478, 127
        %v2480 = vshll.u32 %v2479, 23
        %v2481 = vor.u32 4788187, %v2480
        %v2482 = vand.u32 2147483647, %v2481
        %v2484 = vcvt.s32.f32 %v2477
        %v2485 = vmul.f32 %v2484, %v2482
        %v2486 = vxor.u32 %v2485, 2147483648
        %v2487 = vsel %vm2404, %v2486, %v2485
        %v2488 = vsub.s32 4, %v2464
        %v2489 = vsel %vm2404, %v2488, %v2464
        %v2490 = vsel %vm2403, %v2225, %v2487
        %v2491 = vsel %vm2403, 0, %v2489
        %v2492 = vcosq.f32.pop %v2490
        %v2493 = vsinq.f32.pop %v2490
        %vm2494 = vweird.f32 %v2225
        %v2495 = vadd.s32 %v2491, 3
        %v2496 = vand.u32 %v2495, 3
        %vm2497 = vcmp.lt.s32.totalorder %v2496, 2
        %vm2498 = vcmp.eq.s32.totalorder %v2496, 0
        %v2499 = vxor.u32 %v2493, 2147483648
        %v2500 = vsel %vm2498, %v2492, %v2499
        %vm2501 = vcmp.eq.s32.totalorder %v2496, 2
        %v2502 = vxor.u32 %v2492, 2147483648
        %v2503 = vsel %vm2501, %v2502, %v2493
        %v2504 = vsel %vm2497, %v2500, %v2503
        %v2505 = vsel %vm2494, nan, %v2504
        %v2506 = vand.u32 2147483647, %v2230
        %vm2507 = vcmp.le.f32.partialorder %v2506, 0.7853982
        %vm2508 = vcmp.lt.s32.totalorder %v2230, 0
        %v2509 = vand.u32 %v2230, 2139095040
        %v2510 = vshrl.u32 %v2509, 23
        %v2511 = vsub.s32 %v2510, 127
        %v2512 = vand.u32 2147483647, %v2230
        %v2513 = vand.u32 %v2512, 8388607
        %v2514 = vor.u32 %v2513, 8388608
        %v2515 = vsub.s32 0, %v2514
        %v2516 = vadd.s32 %v2511, 1
        %vm2517 = vcmp.gt.s32.totalorder %v2516, 0
        %v2518 = vsel %vm2517, %v2516, 0
        %v2519 = vshrl.u32 %v2518, 5
        %v2520 = vand.u32 %v2518, 31
        %v2521 = vsub.s32 32, %v2520
        %v2522 = vshrl.u32 683565275, %v2521
        %v2523 = vshll.u32 683565275, %v2520
        %v2524 = vshrl.u32 2475754826, %v2521
        %v2525 = vor.u32 %v2523, %v2524
        %v2526 = vshll.u32 2475754826, %v2520
        %v2527 = vshrl.u32 2131351028, %v2521
        %v2528 = vor.u32 %v2526, %v2527
        %v2529 = vshll.u32 2131351028, %v2520
        %v2530 = vshrl.u32 2102212464, %v2521
        %v2531 = vor.u32 %v2529, %v2530
        %v2532 = vshll.u32 2102212464, %v2520
        %v2533 = vshrl.u32 920167782, %v2521
        %v2534 = vor.u32 %v2532, %v2533
        %v2535 = vshll.u32 920167782, %v2520
        %v2536 = vshrl.u32 1326507024, %v2521
        %v2537 = vor.u32 %v2535, %v2536
        %vm2538 = vcmp.lt.s32.totalorder %v2519, 1
        %vm2539 = vcmp.lt.s32.totalorder %v2519, 2
        %vm2540 = vcmp.lt.s32.totalorder %v2519, 3
        %vm2541 = vcmp.lt.s32.totalorder %v2519, 4
        %v2542 = vsel %vm2538, %v2522, %v2525
        %v2543 = vsel %vm2541, %v2531, 2102212464
        %v2544 = vsel %vm2540, %v2528, %v2543
        %v2545 = vsel %vm2539, %v2542, %v2544
        %v2546 = vsel %vm2538, %v2525, %v2528
        %v2547 = vsel %vm2541, %v2534, 920167782
        %v2548 = vsel %vm2540, %v2531, %v2547
        %v2549 = vsel %vm2539, %v2546, %v2548
        %v2550 = vsel %vm2538, %v2528, %v2531
        %v2551 = vsel %vm2541, %v2537, 1326507024
        %v2552 = vsel %vm2540, %v2534, %v2551
        %v2553 = vsel %vm2539, %v2550, %v2552
        %v2554 = vshll.u32 %v2514, 8
        %v2555 = vmul.u32.u64.compose %v2554, %v2553
        %v2556 = vextract.low.u32 %v2555
        %v2557 = vextract.high.u32 %v2555
        %v2558 = vmul.u32.u64.compose %v2554, %v2549
        %v2559 = vextract.low.u32 %v2558
        %v2560 = vextract.high.u32 %v2558
        %v2561 = vmul.u32 %v2554, %v2545
        %v2562 = vadd.s32 %v2557, %v2559
        %vm2563 = vc.u32 %v2557, %v2559
        %v2564 = vadd.s32 %v2560, 1
        %v2565 = vsel %vm2563, %v2564, %v2560
        %v2566 = vadd.s32 %v2561, %v2565
        %v2567 = vadd.s32 %v2566, 536870912
        %v2568 = vshrl.u32 %v2567, 30
        %v2569 = vshll.u32 %v2568, 30
        %v2570 = vsub.s32 %v2566, %v2569
        %vm2571 = vcmp.lt.s32.totalorder %v2570, 0
        %v2572 = vsub.s32 0, %v2570
        %v2573 = vsel %vm2571, %v2572, %v2570
        %v2574 = vclz %v2573
        %v2575 = vsub.s32 %v2574, 2
        %vm2576 = vcmp.gt.s32.totalorder 0, %v2575
        %v2577 = vsel %vm2576, 0, %v2575
        %v2578 = vsub.s32 32, %v2577
        %v2579 = vshll.u32 %v2570, %v2577
        %v2580 = vshrl.u32 %v2562, %v2578
        %v2581 = vor.u32 %v2579, %v2580
        %v2582 = vsub.s32 4294967266, %v2577
        %v2583 = vadd.s32 %v2582, 127
        %v2584 = vshll.u32 %v2583, 23
        %v2585 = vor.u32 4788187, %v2584
        %v2586 = vand.u32 2147483647, %v2585
        %v2588 = vcvt.s32.f32 %v2581
        %v2589 = vmul.f32 %v2588, %v2586
        %v2590 = vxor.u32 %v2589, 2147483648
        %v2591 = vsel %vm2508, %v2590, %v2589
        %v2592 = vsub.s32 4, %v2568
        %v2593 = vsel %vm2508, %v2592, %v2568
        %v2594 = vsel %vm2507, %v2230, %v2591
        %v2595 = vsel %vm2507, 0, %v2593
        %v2596 = vcosq.f32.pop %v2594
        %v2597 = vsinq.f32.pop %v2594
        %vm2598 = vweird.f32 %v2230
        %v2599 = vadd.s32 %v2595, 3
        %v2600 = vand.u32 %v2599, 3
        %vm2601 = vcmp.lt.s32.totalorder %v2600, 2
        %vm2602 = vcmp.eq.s32.totalorder %v2600, 0
        %v2603 = vxor.u32 %v2597, 2147483648
        %v2604 = vsel %vm2602, %v2596, %v2603
        %vm2605 = vcmp.eq.s32.totalorder %v2600, 2
        %v2606 = vxor.u32 %v2596, 2147483648
        %v2607 = vsel %vm2605, %v2606, %v2597
        %v2608 = vsel %vm2601, %v2604, %v2607
        %v2609 = vsel %vm2598, nan, %v2608
        %v2610 = vand.u32 2147483647, %v2235
        %vm2611 = vcmp.le.f32.partialorder %v2610, 0.7853982
        %vm2612 = vcmp.lt.s32.totalorder %v2235, 0
        %v2613 = vand.u32 %v2235, 2139095040
        %v2614 = vshrl.u32 %v2613, 23
        %v2615 = vsub.s32 %v2614, 127
        %v2616 = vand.u32 2147483647, %v2235
        %v2617 = vand.u32 %v2616, 8388607
        %v2618 = vor.u32 %v2617, 8388608
        %v2619 = vsub.s32 0, %v2618
        %v2620 = vadd.s32 %v2615, 1
        %vm2621 = vcmp.gt.s32.totalorder %v2620, 0
        %v2622 = vsel %vm2621, %v2620, 0
        %v2623 = vshrl.u32 %v2622, 5
        %v2624 = vand.u32 %v2622, 31
        %v2625 = vsub.s32 32, %v2624
        %v2626 = vshrl.u32 683565275, %v2625
        %v2627 = vshll.u32 683565275, %v2624
        %v2628 = vshrl.u32 2475754826, %v2625
        %v2629 = vor.u32 %v2627, %v2628
        %v2630 = vshll.u32 2475754826, %v2624
        %v2631 = vshrl.u32 2131351028, %v2625
        %v2632 = vor.u32 %v2630, %v2631
        %v2633 = vshll.u32 2131351028, %v2624
        %v2634 = vshrl.u32 2102212464, %v2625
        %v2635 = vor.u32 %v2633, %v2634
        %v2636 = vshll.u32 2102212464, %v2624
        %v2637 = vshrl.u32 920167782, %v2625
        %v2638 = vor.u32 %v2636, %v2637
        %v2639 = vshll.u32 920167782, %v2624
        %v2640 = vshrl.u32 1326507024, %v2625
        %v2641 = vor.u32 %v2639, %v2640
        %vm2642 = vcmp.lt.s32.totalorder %v2623, 1
        %vm2643 = vcmp.lt.s32.totalorder %v2623, 2
        %vm2644 = vcmp.lt.s32.totalorder %v2623, 3
        %vm2645 = vcmp.lt.s32.totalorder %v2623, 4
        %v2646 = vsel %vm2642, %v2626, %v2629
        %v2647 = vsel %vm2645, %v2635, 2102212464
        %v2648 = vsel %vm2644, %v2632, %v2647
        %v2649 = vsel %vm2643, %v2646, %v2648
        %v2650 = vsel %vm2642, %v2629, %v2632
        %v2651 = vsel %vm2645, %v2638, 920167782
        %v2652 = vsel %vm2644, %v2635, %v2651
        %v2653 = vsel %vm2643, %v2650, %v2652
        %v2654 = vsel %vm2642, %v2632, %v2635
        %v2655 = vsel %vm2645, %v2641, 1326507024
        %v2656 = vsel %vm2644, %v2638, %v2655
        %v2657 = vsel %vm2643, %v2654, %v2656
        %v2658 = vshll.u32 %v2618, 8
        %v2659 = vmul.u32.u64.compose %v2658, %v2657
        %v2660 = vextract.low.u32 %v2659
        %v2661 = vextract.high.u32 %v2659
        %v2662 = vmul.u32.u64.compose %v2658, %v2653
        %v2663 = vextract.low.u32 %v2662
        %v2664 = vextract.high.u32 %v2662
        %v2665 = vmul.u32 %v2658, %v2649
        %v2666 = vadd.s32 %v2661, %v2663
        %vm2667 = vc.u32 %v2661, %v2663
        %v2668 = vadd.s32 %v2664, 1
        %v2669 = vsel %vm2667, %v2668, %v2664
        %v2670 = vadd.s32 %v2665, %v2669
        %v2671 = vadd.s32 %v2670, 536870912
        %v2672 = vshrl.u32 %v2671, 30
        %v2673 = vshll.u32 %v2672, 30
        %v2674 = vsub.s32 %v2670, %v2673
        %vm2675 = vcmp.lt.s32.totalorder %v2674, 0
        %v2676 = vsub.s32 0, %v2674
        %v2677 = vsel %vm2675, %v2676, %v2674
        %v2678 = vclz %v2677
        %v2679 = vsub.s32 %v2678, 2
        %vm2680 = vcmp.gt.s32.totalorder 0, %v2679
        %v2681 = vsel %vm2680, 0, %v2679
        %v2682 = vsub.s32 32, %v2681
        %v2683 = vshll.u32 %v2674, %v2681
        %v2684 = vshrl.u32 %v2666, %v2682
        %v2685 = vor.u32 %v2683, %v2684
        %v2686 = vsub.s32 4294967266, %v2681
        %v2687 = vadd.s32 %v2686, 127
        %v2688 = vshll.u32 %v2687, 23
        %v2689 = vor.u32 4788187, %v2688
        %v2690 = vand.u32 2147483647, %v2689
        %v2692 = vcvt.s32.f32 %v2685
        %v2693 = vmul.f32 %v2692, %v2690
        %v2694 = vxor.u32 %v2693, 2147483648
        %v2695 = vsel %vm2612, %v2694, %v2693
        %v2696 = vsub.s32 4, %v2672
        %v2697 = vsel %vm2612, %v2696, %v2672
        %v2698 = vsel %vm2611, %v2235, %v2695
        %v2699 = vsel %vm2611, 0, %v2697
        %v2700 = vcosq.f32.pop %v2698
        %v2701 = vsinq.f32.pop %v2698
        %vm2702 = vweird.f32 %v2235
        %v2703 = vadd.s32 %v2699, 3
        %v2704 = vand.u32 %v2703, 3
        %vm2705 = vcmp.lt.s32.totalorder %v2704, 2
        %vm2706 = vcmp.eq.s32.totalorder %v2704, 0
        %v2707 = vxor.u32 %v2701, 2147483648
        %v2708 = vsel %vm2706, %v2700, %v2707
        %vm2709 = vcmp.eq.s32.totalorder %v2704, 2
        %v2710 = vxor.u32 %v2700, 2147483648
        %v2711 = vsel %vm2709, %v2710, %v2701
        %v2712 = vsel %vm2705, %v2708, %v2711
        %v2713 = vsel %vm2702, nan, %v2712
        %v2714 = vand.u32 2147483647, %v2240
        %vm2715 = vcmp.le.f32.partialorder %v2714, 0.7853982
        %vm2716 = vcmp.lt.s32.totalorder %v2240, 0
        %v2717 = vand.u32 %v2240, 2139095040
        %v2718 = vshrl.u32 %v2717, 23
        %v2719 = vsub.s32 %v2718, 127
        %v2720 = vand.u32 2147483647, %v2240
        %v2721 = vand.u32 %v2720, 8388607
        %v2722 = vor.u32 %v2721, 8388608
        %v2723 = vsub.s32 0, %v2722
        %v2724 = vadd.s32 %v2719, 1
        %vm2725 = vcmp.gt.s32.totalorder %v2724, 0
        %v2726 = vsel %vm2725, %v2724, 0
        %v2727 = vshrl.u32 %v2726, 5
        %v2728 = vand.u32 %v2726, 31
        %v2729 = vsub.s32 32, %v2728
        %v2730 = vshrl.u32 683565275, %v2729
        %v2731 = vshll.u32 683565275, %v2728
        %v2732 = vshrl.u32 2475754826, %v2729
        %v2733 = vor.u32 %v2731, %v2732
        %v2734 = vshll.u32 2475754826, %v2728
        %v2735 = vshrl.u32 2131351028, %v2729
        %v2736 = vor.u32 %v2734, %v2735
        %v2737 = vshll.u32 2131351028, %v2728
        %v2738 = vshrl.u32 2102212464, %v2729
        %v2739 = vor.u32 %v2737, %v2738
        %v2740 = vshll.u32 2102212464, %v2728
        %v2741 = vshrl.u32 920167782, %v2729
        %v2742 = vor.u32 %v2740, %v2741
        %v2743 = vshll.u32 920167782, %v2728
        %v2744 = vshrl.u32 1326507024, %v2729
        %v2745 = vor.u32 %v2743, %v2744
        %vm2746 = vcmp.lt.s32.totalorder %v2727, 1
        %vm2747 = vcmp.lt.s32.totalorder %v2727, 2
        %vm2748 = vcmp.lt.s32.totalorder %v2727, 3
        %vm2749 = vcmp.lt.s32.totalorder %v2727, 4
        %v2750 = vsel %vm2746, %v2730, %v2733
        %v2751 = vsel %vm2749, %v2739, 2102212464
        %v2752 = vsel %vm2748, %v2736, %v2751
        %v2753 = vsel %vm2747, %v2750, %v2752
        %v2754 = vsel %vm2746, %v2733, %v2736
        %v2755 = vsel %vm2749, %v2742, 920167782
        %v2756 = vsel %vm2748, %v2739, %v2755
        %v2757 = vsel %vm2747, %v2754, %v2756
        %v2758 = vsel %vm2746, %v2736, %v2739
        %v2759 = vsel %vm2749, %v2745, 1326507024
        %v2760 = vsel %vm2748, %v2742, %v2759
        %v2761 = vsel %vm2747, %v2758, %v2760
        %v2762 = vshll.u32 %v2722, 8
        %v2763 = vmul.u32.u64.compose %v2762, %v2761
        %v2764 = vextract.low.u32 %v2763
        %v2765 = vextract.high.u32 %v2763
        %v2766 = vmul.u32.u64.compose %v2762, %v2757
        %v2767 = vextract.low.u32 %v2766
        %v2768 = vextract.high.u32 %v2766
        %v2769 = vmul.u32 %v2762, %v2753
        %v2770 = vadd.s32 %v2765, %v2767
        %vm2771 = vc.u32 %v2765, %v2767
        %v2772 = vadd.s32 %v2768, 1
        %v2773 = vsel %vm2771, %v2772, %v2768
        %v2774 = vadd.s32 %v2769, %v2773
        %v2775 = vadd.s32 %v2774, 536870912
        %v2776 = vshrl.u32 %v2775, 30
        %v2777 = vshll.u32 %v2776, 30
        %v2778 = vsub.s32 %v2774, %v2777
        %vm2779 = vcmp.lt.s32.totalorder %v2778, 0
        %v2780 = vsub.s32 0, %v2778
        %v2781 = vsel %vm2779, %v2780, %v2778
        %v2782 = vclz %v2781
        %v2783 = vsub.s32 %v2782, 2
        %vm2784 = vcmp.gt.s32.totalorder 0, %v2783
        %v2785 = vsel %vm2784, 0, %v2783
        %v2786 = vsub.s32 32, %v2785
        %v2787 = vshll.u32 %v2778, %v2785
        %v2788 = vshrl.u32 %v2770, %v2786
        %v2789 = vor.u32 %v2787, %v2788
        %v2790 = vsub.s32 4294967266, %v2785
        %v2791 = vadd.s32 %v2790, 127
        %v2792 = vshll.u32 %v2791, 23
        %v2793 = vor.u32 4788187, %v2792
        %v2794 = vand.u32 2147483647, %v2793
        %v2796 = vcvt.s32.f32 %v2789
        %v2797 = vmul.f32 %v2796, %v2794
        %v2798 = vxor.u32 %v2797, 2147483648
        %v2799 = vsel %vm2716, %v2798, %v2797
        %v2800 = vsub.s32 4, %v2776
        %v2801 = vsel %vm2716, %v2800, %v2776
        %v2802 = vsel %vm2715, %v2240, %v2799
        %v2803 = vsel %vm2715, 0, %v2801
        %v2804 = vcosq.f32.pop %v2802
        %v2805 = vsinq.f32.pop %v2802
        %vm2806 = vweird.f32 %v2240
        %v2807 = vadd.s32 %v2803, 3
        %v2808 = vand.u32 %v2807, 3
        %vm2809 = vcmp.lt.s32.totalorder %v2808, 2
        %vm2810 = vcmp.eq.s32.totalorder %v2808, 0
        %v2811 = vxor.u32 %v2805, 2147483648
        %v2812 = vsel %vm2810, %v2804, %v2811
        %vm2813 = vcmp.eq.s32.totalorder %v2808, 2
        %v2814 = vxor.u32 %v2804, 2147483648
        %v2815 = vsel %vm2813, %v2814, %v2805
        %v2816 = vsel %vm2809, %v2812, %v2815
        %v2817 = vsel %vm2806, nan, %v2816
        %v2818 = vand.u32 2147483647, %v2245
        %vm2819 = vcmp.le.f32.partialorder %v2818, 0.7853982
        %vm2820 = vcmp.lt.s32.totalorder %v2245, 0
        %v2821 = vand.u32 %v2245, 2139095040
        %v2822 = vshrl.u32 %v2821, 23
        %v2823 = vsub.s32 %v2822, 127
        %v2824 = vand.u32 2147483647, %v2245
        %v2825 = vand.u32 %v2824, 8388607
        %v2826 = vor.u32 %v2825, 8388608
        %v2827 = vsub.s32 0, %v2826
        %v2828 = vadd.s32 %v2823, 1
        %vm2829 = vcmp.gt.s32.totalorder %v2828, 0
        %v2830 = vsel %vm2829, %v2828, 0
        %v2831 = vshrl.u32 %v2830, 5
        %v2832 = vand.u32 %v2830, 31
        %v2833 = vsub.s32 32, %v2832
        %v2834 = vshrl.u32 683565275, %v2833
        %v2835 = vshll.u32 683565275, %v2832
        %v2836 = vshrl.u32 2475754826, %v2833
        %v2837 = vor.u32 %v2835, %v2836
        %v2838 = vshll.u32 2475754826, %v2832
        %v2839 = vshrl.u32 2131351028, %v2833
        %v2840 = vor.u32 %v2838, %v2839
        %v2841 = vshll.u32 2131351028, %v2832
        %v2842 = vshrl.u32 2102212464, %v2833
        %v2843 = vor.u32 %v2841, %v2842
        %v2844 = vshll.u32 2102212464, %v2832
        %v2845 = vshrl.u32 920167782, %v2833
        %v2846 = vor.u32 %v2844, %v2845
        %v2847 = vshll.u32 920167782, %v2832
        %v2848 = vshrl.u32 1326507024, %v2833
        %v2849 = vor.u32 %v2847, %v2848
        %vm2850 = vcmp.lt.s32.totalorder %v2831, 1
        %vm2851 = vcmp.lt.s32.totalorder %v2831, 2
        %vm2852 = vcmp.lt.s32.totalorder %v2831, 3
        %vm2853 = vcmp.lt.s32.totalorder %v2831, 4
        %v2854 = vsel %vm2850, %v2834, %v2837
        %v2855 = vsel %vm2853, %v2843, 2102212464
        %v2856 = vsel %vm2852, %v2840, %v2855
        %v2857 = vsel %vm2851, %v2854, %v2856
        %v2858 = vsel %vm2850, %v2837, %v2840
        %v2859 = vsel %vm2853, %v2846, 920167782
        %v2860 = vsel %vm2852, %v2843, %v2859
        %v2861 = vsel %vm2851, %v2858, %v2860
        %v2862 = vsel %vm2850, %v2840, %v2843
        %v2863 = vsel %vm2853, %v2849, 1326507024
        %v2864 = vsel %vm2852, %v2846, %v2863
        %v2865 = vsel %vm2851, %v2862, %v2864
        %v2866 = vshll.u32 %v2826, 8
        %v2867 = vmul.u32.u64.compose %v2866, %v2865
        %v2868 = vextract.low.u32 %v2867
        %v2869 = vextract.high.u32 %v2867
        %v2870 = vmul.u32.u64.compose %v2866, %v2861
        %v2871 = vextract.low.u32 %v2870
        %v2872 = vextract.high.u32 %v2870
        %v2873 = vmul.u32 %v2866, %v2857
        %v2874 = vadd.s32 %v2869, %v2871
        %vm2875 = vc.u32 %v2869, %v2871
        %v2876 = vadd.s32 %v2872, 1
        %v2877 = vsel %vm2875, %v2876, %v2872
        %v2878 = vadd.s32 %v2873, %v2877
        %v2879 = vadd.s32 %v2878, 536870912
        %v2880 = vshrl.u32 %v2879, 30
        %v2881 = vshll.u32 %v2880, 30
        %v2882 = vsub.s32 %v2878, %v2881
        %vm2883 = vcmp.lt.s32.totalorder %v2882, 0
        %v2884 = vsub.s32 0, %v2882
        %v2885 = vsel %vm2883, %v2884, %v2882
        %v2886 = vclz %v2885
        %v2887 = vsub.s32 %v2886, 2
        %vm2888 = vcmp.gt.s32.totalorder 0, %v2887
        %v2889 = vsel %vm2888, 0, %v2887
        %v2890 = vsub.s32 32, %v2889
        %v2891 = vshll.u32 %v2882, %v2889
        %v2892 = vshrl.u32 %v2874, %v2890
        %v2893 = vor.u32 %v2891, %v2892
        %v2894 = vsub.s32 4294967266, %v2889
        %v2895 = vadd.s32 %v2894, 127
        %v2896 = vshll.u32 %v2895, 23
        %v2897 = vor.u32 4788187, %v2896
        %v2898 = vand.u32 2147483647, %v2897
        %v2900 = vcvt.s32.f32 %v2893
        %v2901 = vmul.f32 %v2900, %v2898
        %v2902 = vxor.u32 %v2901, 2147483648
        %v2903 = vsel %vm2820, %v2902, %v2901
        %v2904 = vsub.s32 4, %v2880
        %v2905 = vsel %vm2820, %v2904, %v2880
        %v2906 = vsel %vm2819, %v2245, %v2903
        %v2907 = vsel %vm2819, 0, %v2905
        %v2908 = vcosq.f32.pop %v2906
        %v2909 = vsinq.f32.pop %v2906
        %vm2910 = vweird.f32 %v2245
        %v2911 = vadd.s32 %v2907, 3
        %v2912 = vand.u32 %v2911, 3
        %vm2913 = vcmp.lt.s32.totalorder %v2912, 2
        %vm2914 = vcmp.eq.s32.totalorder %v2912, 0
        %v2915 = vxor.u32 %v2909, 2147483648
        %v2916 = vsel %vm2914, %v2908, %v2915
        %vm2917 = vcmp.eq.s32.totalorder %v2912, 2
        %v2918 = vxor.u32 %v2908, 2147483648
        %v2919 = vsel %vm2917, %v2918, %v2909
        %v2920 = vsel %vm2913, %v2916, %v2919
        %v2921 = vsel %vm2910, nan, %v2920
        %v2922 = vand.u32 2147483647, %v2250
        %vm2923 = vcmp.le.f32.partialorder %v2922, 0.7853982
        %vm2924 = vcmp.lt.s32.totalorder %v2250, 0
        %v2925 = vand.u32 %v2250, 2139095040
        %v2926 = vshrl.u32 %v2925, 23
        %v2927 = vsub.s32 %v2926, 127
        %v2928 = vand.u32 2147483647, %v2250
        %v2929 = vand.u32 %v2928, 8388607
        %v2930 = vor.u32 %v2929, 8388608
        %v2931 = vsub.s32 0, %v2930
        %v2932 = vadd.s32 %v2927, 1
        %vm2933 = vcmp.gt.s32.totalorder %v2932, 0
        %v2934 = vsel %vm2933, %v2932, 0
        %v2935 = vshrl.u32 %v2934, 5
        %v2936 = vand.u32 %v2934, 31
        %v2937 = vsub.s32 32, %v2936
        %v2938 = vshrl.u32 683565275, %v2937
        %v2939 = vshll.u32 683565275, %v2936
        %v2940 = vshrl.u32 2475754826, %v2937
        %v2941 = vor.u32 %v2939, %v2940
        %v2942 = vshll.u32 2475754826, %v2936
        %v2943 = vshrl.u32 2131351028, %v2937
        %v2944 = vor.u32 %v2942, %v2943
        %v2945 = vshll.u32 2131351028, %v2936
        %v2946 = vshrl.u32 2102212464, %v2937
        %v2947 = vor.u32 %v2945, %v2946
        %v2948 = vshll.u32 2102212464, %v2936
        %v2949 = vshrl.u32 920167782, %v2937
        %v2950 = vor.u32 %v2948, %v2949
        %v2951 = vshll.u32 920167782, %v2936
        %v2952 = vshrl.u32 1326507024, %v2937
        %v2953 = vor.u32 %v2951, %v2952
        %vm2954 = vcmp.lt.s32.totalorder %v2935, 1
        %vm2955 = vcmp.lt.s32.totalorder %v2935, 2
        %vm2956 = vcmp.lt.s32.totalorder %v2935, 3
        %vm2957 = vcmp.lt.s32.totalorder %v2935, 4
        %v2958 = vsel %vm2954, %v2938, %v2941
        %v2959 = vsel %vm2957, %v2947, 2102212464
        %v2960 = vsel %vm2956, %v2944, %v2959
        %v2961 = vsel %vm2955, %v2958, %v2960
        %v2962 = vsel %vm2954, %v2941, %v2944
        %v2963 = vsel %vm2957, %v2950, 920167782
        %v2964 = vsel %vm2956, %v2947, %v2963
        %v2965 = vsel %vm2955, %v2962, %v2964
        %v2966 = vsel %vm2954, %v2944, %v2947
        %v2967 = vsel %vm2957, %v2953, 1326507024
        %v2968 = vsel %vm2956, %v2950, %v2967
        %v2969 = vsel %vm2955, %v2966, %v2968
        %v2970 = vshll.u32 %v2930, 8
        %v2971 = vmul.u32.u64.compose %v2970, %v2969
        %v2972 = vextract.low.u32 %v2971
        %v2973 = vextract.high.u32 %v2971
        %v2974 = vmul.u32.u64.compose %v2970, %v2965
        %v2975 = vextract.low.u32 %v2974
        %v2976 = vextract.high.u32 %v2974
        %v2977 = vmul.u32 %v2970, %v2961
        %v2978 = vadd.s32 %v2973, %v2975
        %vm2979 = vc.u32 %v2973, %v2975
        %v2980 = vadd.s32 %v2976, 1
        %v2981 = vsel %vm2979, %v2980, %v2976
        %v2982 = vadd.s32 %v2977, %v2981
        %v2983 = vadd.s32 %v2982, 536870912
        %v2984 = vshrl.u32 %v2983, 30
        %v2985 = vshll.u32 %v2984, 30
        %v2986 = vsub.s32 %v2982, %v2985
        %vm2987 = vcmp.lt.s32.totalorder %v2986, 0
        %v2988 = vsub.s32 0, %v2986
        %v2989 = vsel %vm2987, %v2988, %v2986
        %v2990 = vclz %v2989
        %v2991 = vsub.s32 %v2990, 2
        %vm2992 = vcmp.gt.s32.totalorder 0, %v2991
        %v2993 = vsel %vm2992, 0, %v2991
        %v2994 = vsub.s32 32, %v2993
        %v2995 = vshll.u32 %v2986, %v2993
        %v2996 = vshrl.u32 %v2978, %v2994
        %v2997 = vor.u32 %v2995, %v2996
        %v2998 = vsub.s32 4294967266, %v2993
        %v2999 = vadd.s32 %v2998, 127
        %v3000 = vshll.u32 %v2999, 23
        %v3001 = vor.u32 4788187, %v3000
        %v3002 = vand.u32 2147483647, %v3001
        %v3004 = vcvt.s32.f32 %v2997
        %v3005 = vmul.f32 %v3004, %v3002
        %v3006 = vxor.u32 %v3005, 2147483648
        %v3007 = vsel %vm2924, %v3006, %v3005
        %v3008 = vsub.s32 4, %v2984
        %v3009 = vsel %vm2924, %v3008, %v2984
        %v3010 = vsel %vm2923, %v2250, %v3007
        %v3011 = vsel %vm2923, 0, %v3009
        %v3012 = vcosq.f32.pop %v3010
        %v3013 = vsinq.f32.pop %v3010
        %vm3014 = vweird.f32 %v2250
        %v3015 = vadd.s32 %v3011, 3
        %v3016 = vand.u32 %v3015, 3
        %vm3017 = vcmp.lt.s32.totalorder %v3016, 2
        %vm3018 = vcmp.eq.s32.totalorder %v3016, 0
        %v3019 = vxor.u32 %v3013, 2147483648
        %v3020 = vsel %vm3018, %v3012, %v3019
        %vm3021 = vcmp.eq.s32.totalorder %v3016, 2
        %v3022 = vxor.u32 %v3012, 2147483648
        %v3023 = vsel %vm3021, %v3022, %v3013
        %v3024 = vsel %vm3017, %v3020, %v3023
        %v3025 = vsel %vm3014, nan, %v3024
        %v3026 = vand.u32 2147483647, %v2255
        %vm3027 = vcmp.le.f32.partialorder %v3026, 0.7853982
        %vm3028 = vcmp.lt.s32.totalorder %v2255, 0
        %v3029 = vand.u32 %v2255, 2139095040
        %v3030 = vshrl.u32 %v3029, 23
        %v3031 = vsub.s32 %v3030, 127
        %v3032 = vand.u32 2147483647, %v2255
        %v3033 = vand.u32 %v3032, 8388607
        %v3034 = vor.u32 %v3033, 8388608
        %v3035 = vsub.s32 0, %v3034
        %v3036 = vadd.s32 %v3031, 1
        %vm3037 = vcmp.gt.s32.totalorder %v3036, 0
        %v3038 = vsel %vm3037, %v3036, 0
        %v3039 = vshrl.u32 %v3038, 5
        %v3040 = vand.u32 %v3038, 31
        %v3041 = vsub.s32 32, %v3040
        %v3042 = vshrl.u32 683565275, %v3041
        %v3043 = vshll.u32 683565275, %v3040
        %v3044 = vshrl.u32 2475754826, %v3041
        %v3045 = vor.u32 %v3043, %v3044
        %v3046 = vshll.u32 2475754826, %v3040
        %v3047 = vshrl.u32 2131351028, %v3041
        %v3048 = vor.u32 %v3046, %v3047
        %v3049 = vshll.u32 2131351028, %v3040
        %v3050 = vshrl.u32 2102212464, %v3041
        %v3051 = vor.u32 %v3049, %v3050
        %v3052 = vshll.u32 2102212464, %v3040
        %v3053 = vshrl.u32 920167782, %v3041
        %v3054 = vor.u32 %v3052, %v3053
        %v3055 = vshll.u32 920167782, %v3040
        %v3056 = vshrl.u32 1326507024, %v3041
        %v3057 = vor.u32 %v3055, %v3056
        %vm3058 = vcmp.lt.s32.totalorder %v3039, 1
        %vm3059 = vcmp.lt.s32.totalorder %v3039, 2
        %vm3060 = vcmp.lt.s32.totalorder %v3039, 3
        %vm3061 = vcmp.lt.s32.totalorder %v3039, 4
        %v3062 = vsel %vm3058, %v3042, %v3045
        %v3063 = vsel %vm3061, %v3051, 2102212464
        %v3064 = vsel %vm3060, %v3048, %v3063
        %v3065 = vsel %vm3059, %v3062, %v3064
        %v3066 = vsel %vm3058, %v3045, %v3048
        %v3067 = vsel %vm3061, %v3054, 920167782
        %v3068 = vsel %vm3060, %v3051, %v3067
        %v3069 = vsel %vm3059, %v3066, %v3068
        %v3070 = vsel %vm3058, %v3048, %v3051
        %v3071 = vsel %vm3061, %v3057, 1326507024
        %v3072 = vsel %vm3060, %v3054, %v3071
        %v3073 = vsel %vm3059, %v3070, %v3072
        %v3074 = vshll.u32 %v3034, 8
        %v3075 = vmul.u32.u64.compose %v3074, %v3073
        %v3076 = vextract.low.u32 %v3075
        %v3077 = vextract.high.u32 %v3075
        %v3078 = vmul.u32.u64.compose %v3074, %v3069
        %v3079 = vextract.low.u32 %v3078
        %v3080 = vextract.high.u32 %v3078
        %v3081 = vmul.u32 %v3074, %v3065
        %v3082 = vadd.s32 %v3077, %v3079
        %vm3083 = vc.u32 %v3077, %v3079
        %v3084 = vadd.s32 %v3080, 1
        %v3085 = vsel %vm3083, %v3084, %v3080
        %v3086 = vadd.s32 %v3081, %v3085
        %v3087 = vadd.s32 %v3086, 536870912
        %v3088 = vshrl.u32 %v3087, 30
        %v3089 = vshll.u32 %v3088, 30
        %v3090 = vsub.s32 %v3086, %v3089
        %vm3091 = vcmp.lt.s32.totalorder %v3090, 0
        %v3092 = vsub.s32 0, %v3090
        %v3093 = vsel %vm3091, %v3092, %v3090
        %v3094 = vclz %v3093
        %v3095 = vsub.s32 %v3094, 2
        %vm3096 = vcmp.gt.s32.totalorder 0, %v3095
        %v3097 = vsel %vm3096, 0, %v3095
        %v3098 = vsub.s32 32, %v3097
        %v3099 = vshll.u32 %v3090, %v3097
        %v3100 = vshrl.u32 %v3082, %v3098
        %v3101 = vor.u32 %v3099, %v3100
        %v3102 = vsub.s32 4294967266, %v3097
        %v3103 = vadd.s32 %v3102, 127
        %v3104 = vshll.u32 %v3103, 23
        %v3105 = vor.u32 4788187, %v3104
        %v3106 = vand.u32 2147483647, %v3105
        %v3108 = vcvt.s32.f32 %v3101
        %v3109 = vmul.f32 %v3108, %v3106
        %v3110 = vxor.u32 %v3109, 2147483648
        %v3111 = vsel %vm3028, %v3110, %v3109
        %v3112 = vsub.s32 4, %v3088
        %v3113 = vsel %vm3028, %v3112, %v3088
        %v3114 = vsel %vm3027, %v2255, %v3111
        %v3115 = vsel %vm3027, 0, %v3113
        %v3116 = vcosq.f32.pop %v3114
        %v3117 = vsinq.f32.pop %v3114
        %vm3118 = vweird.f32 %v2255
        %v3119 = vadd.s32 %v3115, 3
        %v3120 = vand.u32 %v3119, 3
        %vm3121 = vcmp.lt.s32.totalorder %v3120, 2
        %vm3122 = vcmp.eq.s32.totalorder %v3120, 0
        %v3123 = vxor.u32 %v3117, 2147483648
        %v3124 = vsel %vm3122, %v3116, %v3123
        %vm3125 = vcmp.eq.s32.totalorder %v3120, 2
        %v3126 = vxor.u32 %v3116, 2147483648
        %v3127 = vsel %vm3125, %v3126, %v3117
        %v3128 = vsel %vm3121, %v3124, %v3127
        %v3129 = vsel %vm3118, nan, %v3128
        %v3130 = vand.u32 2147483647, %v2260
        %vm3131 = vcmp.le.f32.partialorder %v3130, 0.7853982
        %vm3132 = vcmp.lt.s32.totalorder %v2260, 0
        %v3133 = vand.u32 %v2260, 2139095040
        %v3134 = vshrl.u32 %v3133, 23
        %v3135 = vsub.s32 %v3134, 127
        %v3136 = vand.u32 2147483647, %v2260
        %v3137 = vand.u32 %v3136, 8388607
        %v3138 = vor.u32 %v3137, 8388608
        %v3139 = vsub.s32 0, %v3138
        %v3140 = vadd.s32 %v3135, 1
        %vm3141 = vcmp.gt.s32.totalorder %v3140, 0
        %v3142 = vsel %vm3141, %v3140, 0
        %v3143 = vshrl.u32 %v3142, 5
        %v3144 = vand.u32 %v3142, 31
        %v3145 = vsub.s32 32, %v3144
        %v3146 = vshrl.u32 683565275, %v3145
        %v3147 = vshll.u32 683565275, %v3144
        %v3148 = vshrl.u32 2475754826, %v3145
        %v3149 = vor.u32 %v3147, %v3148
        %v3150 = vshll.u32 2475754826, %v3144
        %v3151 = vshrl.u32 2131351028, %v3145
        %v3152 = vor.u32 %v3150, %v3151
        %v3153 = vshll.u32 2131351028, %v3144
        %v3154 = vshrl.u32 2102212464, %v3145
        %v3155 = vor.u32 %v3153, %v3154
        %v3156 = vshll.u32 2102212464, %v3144
        %v3157 = vshrl.u32 920167782, %v3145
        %v3158 = vor.u32 %v3156, %v3157
        %v3159 = vshll.u32 920167782, %v3144
        %v3160 = vshrl.u32 1326507024, %v3145
        %v3161 = vor.u32 %v3159, %v3160
        %vm3162 = vcmp.lt.s32.totalorder %v3143, 1
        %vm3163 = vcmp.lt.s32.totalorder %v3143, 2
        %vm3164 = vcmp.lt.s32.totalorder %v3143, 3
        %vm3165 = vcmp.lt.s32.totalorder %v3143, 4
        %v3166 = vsel %vm3162, %v3146, %v3149
        %v3167 = vsel %vm3165, %v3155, 2102212464
        %v3168 = vsel %vm3164, %v3152, %v3167
        %v3169 = vsel %vm3163, %v3166, %v3168
        %v3170 = vsel %vm3162, %v3149, %v3152
        %v3171 = vsel %vm3165, %v3158, 920167782
        %v3172 = vsel %vm3164, %v3155, %v3171
        %v3173 = vsel %vm3163, %v3170, %v3172
        %v3174 = vsel %vm3162, %v3152, %v3155
        %v3175 = vsel %vm3165, %v3161, 1326507024
        %v3176 = vsel %vm3164, %v3158, %v3175
        %v3177 = vsel %vm3163, %v3174, %v3176
        %v3178 = vshll.u32 %v3138, 8
        %v3179 = vmul.u32.u64.compose %v3178, %v3177
        %v3180 = vextract.low.u32 %v3179
        %v3181 = vextract.high.u32 %v3179
        %v3182 = vmul.u32.u64.compose %v3178, %v3173
        %v3183 = vextract.low.u32 %v3182
        %v3184 = vextract.high.u32 %v3182
        %v3185 = vmul.u32 %v3178, %v3169
        %v3186 = vadd.s32 %v3181, %v3183
        %vm3187 = vc.u32 %v3181, %v3183
        %v3188 = vadd.s32 %v3184, 1
        %v3189 = vsel %vm3187, %v3188, %v3184
        %v3190 = vadd.s32 %v3185, %v3189
        %v3191 = vadd.s32 %v3190, 536870912
        %v3192 = vshrl.u32 %v3191, 30
        %v3193 = vshll.u32 %v3192, 30
        %v3194 = vsub.s32 %v3190, %v3193
        %vm3195 = vcmp.lt.s32.totalorder %v3194, 0
        %v3196 = vsub.s32 0, %v3194
        %v3197 = vsel %vm3195, %v3196, %v3194
        %v3198 = vclz %v3197
        %v3199 = vsub.s32 %v3198, 2
        %vm3200 = vcmp.gt.s32.totalorder 0, %v3199
        %v3201 = vsel %vm3200, 0, %v3199
        %v3202 = vsub.s32 32, %v3201
        %v3203 = vshll.u32 %v3194, %v3201
        %v3204 = vshrl.u32 %v3186, %v3202
        %v3205 = vor.u32 %v3203, %v3204
        %v3206 = vsub.s32 4294967266, %v3201
        %v3207 = vadd.s32 %v3206, 127
        %v3208 = vshll.u32 %v3207, 23
        %v3209 = vor.u32 4788187, %v3208
        %v3210 = vand.u32 2147483647, %v3209
        %v3212 = vcvt.s32.f32 %v3205
        %v3213 = vmul.f32 %v3212, %v3210
        %v3214 = vxor.u32 %v3213, 2147483648
        %v3215 = vsel %vm3132, %v3214, %v3213
        %v3216 = vsub.s32 4, %v3192
        %v3217 = vsel %vm3132, %v3216, %v3192
        %v3218 = vsel %vm3131, %v2260, %v3215
        %v3219 = vsel %vm3131, 0, %v3217
        %v3220 = vcosq.f32.pop %v3218
        %v3221 = vsinq.f32.pop %v3218
        %vm3222 = vweird.f32 %v2260
        %v3223 = vadd.s32 %v3219, 3
        %v3224 = vand.u32 %v3223, 3
        %vm3225 = vcmp.lt.s32.totalorder %v3224, 2
        %vm3226 = vcmp.eq.s32.totalorder %v3224, 0
        %v3227 = vxor.u32 %v3221, 2147483648
        %v3228 = vsel %vm3226, %v3220, %v3227
        %vm3229 = vcmp.eq.s32.totalorder %v3224, 2
        %v3230 = vxor.u32 %v3220, 2147483648
        %v3231 = vsel %vm3229, %v3230, %v3221
        %v3232 = vsel %vm3225, %v3228, %v3231
        %v3233 = vsel %vm3222, nan, %v3232
        %v3234 = vand.u32 2147483647, %v2265
        %vm3235 = vcmp.le.f32.partialorder %v3234, 0.7853982
        %vm3236 = vcmp.lt.s32.totalorder %v2265, 0
        %v3237 = vand.u32 %v2265, 2139095040
        %v3238 = vshrl.u32 %v3237, 23
        %v3239 = vsub.s32 %v3238, 127
        %v3240 = vand.u32 2147483647, %v2265
        %v3241 = vand.u32 %v3240, 8388607
        %v3242 = vor.u32 %v3241, 8388608
        %v3243 = vsub.s32 0, %v3242
        %v3244 = vadd.s32 %v3239, 1
        %vm3245 = vcmp.gt.s32.totalorder %v3244, 0
        %v3246 = vsel %vm3245, %v3244, 0
        %v3247 = vshrl.u32 %v3246, 5
        %v3248 = vand.u32 %v3246, 31
        %v3249 = vsub.s32 32, %v3248
        %v3250 = vshrl.u32 683565275, %v3249
        %v3251 = vshll.u32 683565275, %v3248
        %v3252 = vshrl.u32 2475754826, %v3249
        %v3253 = vor.u32 %v3251, %v3252
        %v3254 = vshll.u32 2475754826, %v3248
        %v3255 = vshrl.u32 2131351028, %v3249
        %v3256 = vor.u32 %v3254, %v3255
        %v3257 = vshll.u32 2131351028, %v3248
        %v3258 = vshrl.u32 2102212464, %v3249
        %v3259 = vor.u32 %v3257, %v3258
        %v3260 = vshll.u32 2102212464, %v3248
        %v3261 = vshrl.u32 920167782, %v3249
        %v3262 = vor.u32 %v3260, %v3261
        %v3263 = vshll.u32 920167782, %v3248
        %v3264 = vshrl.u32 1326507024, %v3249
        %v3265 = vor.u32 %v3263, %v3264
        %vm3266 = vcmp.lt.s32.totalorder %v3247, 1
        %vm3267 = vcmp.lt.s32.totalorder %v3247, 2
        %vm3268 = vcmp.lt.s32.totalorder %v3247, 3
        %vm3269 = vcmp.lt.s32.totalorder %v3247, 4
        %v3270 = vsel %vm3266, %v3250, %v3253
        %v3271 = vsel %vm3269, %v3259, 2102212464
        %v3272 = vsel %vm3268, %v3256, %v3271
        %v3273 = vsel %vm3267, %v3270, %v3272
        %v3274 = vsel %vm3266, %v3253, %v3256
        %v3275 = vsel %vm3269, %v3262, 920167782
        %v3276 = vsel %vm3268, %v3259, %v3275
        %v3277 = vsel %vm3267, %v3274, %v3276
        %v3278 = vsel %vm3266, %v3256, %v3259
        %v3279 = vsel %vm3269, %v3265, 1326507024
        %v3280 = vsel %vm3268, %v3262, %v3279
        %v3281 = vsel %vm3267, %v3278, %v3280
        %v3282 = vshll.u32 %v3242, 8
        %v3283 = vmul.u32.u64.compose %v3282, %v3281
        %v3284 = vextract.low.u32 %v3283
        %v3285 = vextract.high.u32 %v3283
        %v3286 = vmul.u32.u64.compose %v3282, %v3277
        %v3287 = vextract.low.u32 %v3286
        %v3288 = vextract.high.u32 %v3286
        %v3289 = vmul.u32 %v3282, %v3273
        %v3290 = vadd.s32 %v3285, %v3287
        %vm3291 = vc.u32 %v3285, %v3287
        %v3292 = vadd.s32 %v3288, 1
        %v3293 = vsel %vm3291, %v3292, %v3288
        %v3294 = vadd.s32 %v3289, %v3293
        %v3295 = vadd.s32 %v3294, 536870912
        %v3296 = vshrl.u32 %v3295, 30
        %v3297 = vshll.u32 %v3296, 30
        %v3298 = vsub.s32 %v3294, %v3297
        %vm3299 = vcmp.lt.s32.totalorder %v3298, 0
        %v3300 = vsub.s32 0, %v3298
        %v3301 = vsel %vm3299, %v3300, %v3298
        %v3302 = vclz %v3301
        %v3303 = vsub.s32 %v3302, 2
        %vm3304 = vcmp.gt.s32.totalorder 0, %v3303
        %v3305 = vsel %vm3304, 0, %v3303
        %v3306 = vsub.s32 32, %v3305
        %v3307 = vshll.u32 %v3298, %v3305
        %v3308 = vshrl.u32 %v3290, %v3306
        %v3309 = vor.u32 %v3307, %v3308
        %v3310 = vsub.s32 4294967266, %v3305
        %v3311 = vadd.s32 %v3310, 127
        %v3312 = vshll.u32 %v3311, 23
        %v3313 = vor.u32 4788187, %v3312
        %v3314 = vand.u32 2147483647, %v3313
        %v3316 = vcvt.s32.f32 %v3309
        %v3317 = vmul.f32 %v3316, %v3314
        %v3318 = vxor.u32 %v3317, 2147483648
        %v3319 = vsel %vm3236, %v3318, %v3317
        %v3320 = vsub.s32 4, %v3296
        %v3321 = vsel %vm3236, %v3320, %v3296
        %v3322 = vsel %vm3235, %v2265, %v3319
        %v3323 = vsel %vm3235, 0, %v3321
        %v3324 = vcosq.f32.pop %v3322
        %v3325 = vsinq.f32.pop %v3322
        %vm3326 = vweird.f32 %v2265
        %v3327 = vadd.s32 %v3323, 3
        %v3328 = vand.u32 %v3327, 3
        %vm3329 = vcmp.lt.s32.totalorder %v3328, 2
        %vm3330 = vcmp.eq.s32.totalorder %v3328, 0
        %v3331 = vxor.u32 %v3325, 2147483648
        %v3332 = vsel %vm3330, %v3324, %v3331
        %vm3333 = vcmp.eq.s32.totalorder %v3328, 2
        %v3334 = vxor.u32 %v3324, 2147483648
        %v3335 = vsel %vm3333, %v3334, %v3325
        %v3336 = vsel %vm3329, %v3332, %v3335
        %v3337 = vsel %vm3326, nan, %v3336
        %v3338 = vand.u32 2147483647, %v2270
        %vm3339 = vcmp.le.f32.partialorder %v3338, 0.7853982
        %vm3340 = vcmp.lt.s32.totalorder %v2270, 0
        %v3341 = vand.u32 %v2270, 2139095040
        %v3342 = vshrl.u32 %v3341, 23
        %v3343 = vsub.s32 %v3342, 127
        %v3344 = vand.u32 2147483647, %v2270
        %v3345 = vand.u32 %v3344, 8388607
        %v3346 = vor.u32 %v3345, 8388608
        %v3347 = vsub.s32 0, %v3346
        %v3348 = vadd.s32 %v3343, 1
        %vm3349 = vcmp.gt.s32.totalorder %v3348, 0
        %v3350 = vsel %vm3349, %v3348, 0
        %v3351 = vshrl.u32 %v3350, 5
        %v3352 = vand.u32 %v3350, 31
        %v3353 = vsub.s32 32, %v3352
        %v3354 = vshrl.u32 683565275, %v3353
        %v3355 = vshll.u32 683565275, %v3352
        %v3356 = vshrl.u32 2475754826, %v3353
        %v3357 = vor.u32 %v3355, %v3356
        %v3358 = vshll.u32 2475754826, %v3352
        %v3359 = vshrl.u32 2131351028, %v3353
        %v3360 = vor.u32 %v3358, %v3359
        %v3361 = vshll.u32 2131351028, %v3352
        %v3362 = vshrl.u32 2102212464, %v3353
        %v3363 = vor.u32 %v3361, %v3362
        %v3364 = vshll.u32 2102212464, %v3352
        %v3365 = vshrl.u32 920167782, %v3353
        %v3366 = vor.u32 %v3364, %v3365
        %v3367 = vshll.u32 920167782, %v3352
        %v3368 = vshrl.u32 1326507024, %v3353
        %v3369 = vor.u32 %v3367, %v3368
        %vm3370 = vcmp.lt.s32.totalorder %v3351, 1
        %vm3371 = vcmp.lt.s32.totalorder %v3351, 2
        %vm3372 = vcmp.lt.s32.totalorder %v3351, 3
        %vm3373 = vcmp.lt.s32.totalorder %v3351, 4
        %v3374 = vsel %vm3370, %v3354, %v3357
        %v3375 = vsel %vm3373, %v3363, 2102212464
        %v3376 = vsel %vm3372, %v3360, %v3375
        %v3377 = vsel %vm3371, %v3374, %v3376
        %v3378 = vsel %vm3370, %v3357, %v3360
        %v3379 = vsel %vm3373, %v3366, 920167782
        %v3380 = vsel %vm3372, %v3363, %v3379
        %v3381 = vsel %vm3371, %v3378, %v3380
        %v3382 = vsel %vm3370, %v3360, %v3363
        %v3383 = vsel %vm3373, %v3369, 1326507024
        %v3384 = vsel %vm3372, %v3366, %v3383
        %v3385 = vsel %vm3371, %v3382, %v3384
        %v3386 = vshll.u32 %v3346, 8
        %v3387 = vmul.u32.u64.compose %v3386, %v3385
        %v3388 = vextract.low.u32 %v3387
        %v3389 = vextract.high.u32 %v3387
        %v3390 = vmul.u32.u64.compose %v3386, %v3381
        %v3391 = vextract.low.u32 %v3390
        %v3392 = vextract.high.u32 %v3390
        %v3393 = vmul.u32 %v3386, %v3377
        %v3394 = vadd.s32 %v3389, %v3391
        %vm3395 = vc.u32 %v3389, %v3391
        %v3396 = vadd.s32 %v3392, 1
        %v3397 = vsel %vm3395, %v3396, %v3392
        %v3398 = vadd.s32 %v3393, %v3397
        %v3399 = vadd.s32 %v3398, 536870912
        %v3400 = vshrl.u32 %v3399, 30
        %v3401 = vshll.u32 %v3400, 30
        %v3402 = vsub.s32 %v3398, %v3401
        %vm3403 = vcmp.lt.s32.totalorder %v3402, 0
        %v3404 = vsub.s32 0, %v3402
        %v3405 = vsel %vm3403, %v3404, %v3402
        %v3406 = vclz %v3405
        %v3407 = vsub.s32 %v3406, 2
        %vm3408 = vcmp.gt.s32.totalorder 0, %v3407
        %v3409 = vsel %vm3408, 0, %v3407
        %v3410 = vsub.s32 32, %v3409
        %v3411 = vshll.u32 %v3402, %v3409
        %v3412 = vshrl.u32 %v3394, %v3410
        %v3413 = vor.u32 %v3411, %v3412
        %v3414 = vsub.s32 4294967266, %v3409
        %v3415 = vadd.s32 %v3414, 127
        %v3416 = vshll.u32 %v3415, 23
        %v3417 = vor.u32 4788187, %v3416
        %v3418 = vand.u32 2147483647, %v3417
        %v3420 = vcvt.s32.f32 %v3413
        %v3421 = vmul.f32 %v3420, %v3418
        %v3422 = vxor.u32 %v3421, 2147483648
        %v3423 = vsel %vm3340, %v3422, %v3421
        %v3424 = vsub.s32 4, %v3400
        %v3425 = vsel %vm3340, %v3424, %v3400
        %v3426 = vsel %vm3339, %v2270, %v3423
        %v3427 = vsel %vm3339, 0, %v3425
        %v3428 = vcosq.f32.pop %v3426
        %v3429 = vsinq.f32.pop %v3426
        %vm3430 = vweird.f32 %v2270
        %v3431 = vadd.s32 %v3427, 3
        %v3432 = vand.u32 %v3431, 3
        %vm3433 = vcmp.lt.s32.totalorder %v3432, 2
        %vm3434 = vcmp.eq.s32.totalorder %v3432, 0
        %v3435 = vxor.u32 %v3429, 2147483648
        %v3436 = vsel %vm3434, %v3428, %v3435
        %vm3437 = vcmp.eq.s32.totalorder %v3432, 2
        %v3438 = vxor.u32 %v3428, 2147483648
        %v3439 = vsel %vm3437, %v3438, %v3429
        %v3440 = vsel %vm3433, %v3436, %v3439
        %v3441 = vsel %vm3430, nan, %v3440
        %v3442 = vand.u32 2147483647, %v2275
        %vm3443 = vcmp.le.f32.partialorder %v3442, 0.7853982
        %vm3444 = vcmp.lt.s32.totalorder %v2275, 0
        %v3445 = vand.u32 %v2275, 2139095040
        %v3446 = vshrl.u32 %v3445, 23
        %v3447 = vsub.s32 %v3446, 127
        %v3448 = vand.u32 2147483647, %v2275
        %v3449 = vand.u32 %v3448, 8388607
        %v3450 = vor.u32 %v3449, 8388608
        %v3451 = vsub.s32 0, %v3450
        %v3452 = vadd.s32 %v3447, 1
        %vm3453 = vcmp.gt.s32.totalorder %v3452, 0
        %v3454 = vsel %vm3453, %v3452, 0
        %v3455 = vshrl.u32 %v3454, 5
        %v3456 = vand.u32 %v3454, 31
        %v3457 = vsub.s32 32, %v3456
        %v3458 = vshrl.u32 683565275, %v3457
        %v3459 = vshll.u32 683565275, %v3456
        %v3460 = vshrl.u32 2475754826, %v3457
        %v3461 = vor.u32 %v3459, %v3460
        %v3462 = vshll.u32 2475754826, %v3456
        %v3463 = vshrl.u32 2131351028, %v3457
        %v3464 = vor.u32 %v3462, %v3463
        %v3465 = vshll.u32 2131351028, %v3456
        %v3466 = vshrl.u32 2102212464, %v3457
        %v3467 = vor.u32 %v3465, %v3466
        %v3468 = vshll.u32 2102212464, %v3456
        %v3469 = vshrl.u32 920167782, %v3457
        %v3470 = vor.u32 %v3468, %v3469
        %v3471 = vshll.u32 920167782, %v3456
        %v3472 = vshrl.u32 1326507024, %v3457
        %v3473 = vor.u32 %v3471, %v3472
        %vm3474 = vcmp.lt.s32.totalorder %v3455, 1
        %vm3475 = vcmp.lt.s32.totalorder %v3455, 2
        %vm3476 = vcmp.lt.s32.totalorder %v3455, 3
        %vm3477 = vcmp.lt.s32.totalorder %v3455, 4
        %v3478 = vsel %vm3474, %v3458, %v3461
        %v3479 = vsel %vm3477, %v3467, 2102212464
        %v3480 = vsel %vm3476, %v3464, %v3479
        %v3481 = vsel %vm3475, %v3478, %v3480
        %v3482 = vsel %vm3474, %v3461, %v3464
        %v3483 = vsel %vm3477, %v3470, 920167782
        %v3484 = vsel %vm3476, %v3467, %v3483
        %v3485 = vsel %vm3475, %v3482, %v3484
        %v3486 = vsel %vm3474, %v3464, %v3467
        %v3487 = vsel %vm3477, %v3473, 1326507024
        %v3488 = vsel %vm3476, %v3470, %v3487
        %v3489 = vsel %vm3475, %v3486, %v3488
        %v3490 = vshll.u32 %v3450, 8
        %v3491 = vmul.u32.u64.compose %v3490, %v3489
        %v3492 = vextract.low.u32 %v3491
        %v3493 = vextract.high.u32 %v3491
        %v3494 = vmul.u32.u64.compose %v3490, %v3485
        %v3495 = vextract.low.u32 %v3494
        %v3496 = vextract.high.u32 %v3494
        %v3497 = vmul.u32 %v3490, %v3481
        %v3498 = vadd.s32 %v3493, %v3495
        %vm3499 = vc.u32 %v3493, %v3495
        %v3500 = vadd.s32 %v3496, 1
        %v3501 = vsel %vm3499, %v3500, %v3496
        %v3502 = vadd.s32 %v3497, %v3501
        %v3503 = vadd.s32 %v3502, 536870912
        %v3504 = vshrl.u32 %v3503, 30
        %v3505 = vshll.u32 %v3504, 30
        %v3506 = vsub.s32 %v3502, %v3505
        %vm3507 = vcmp.lt.s32.totalorder %v3506, 0
        %v3508 = vsub.s32 0, %v3506
        %v3509 = vsel %vm3507, %v3508, %v3506
        %v3510 = vclz %v3509
        %v3511 = vsub.s32 %v3510, 2
        %vm3512 = vcmp.gt.s32.totalorder 0, %v3511
        %v3513 = vsel %vm3512, 0, %v3511
        %v3514 = vsub.s32 32, %v3513
        %v3515 = vshll.u32 %v3506, %v3513
        %v3516 = vshrl.u32 %v3498, %v3514
        %v3517 = vor.u32 %v3515, %v3516
        %v3518 = vsub.s32 4294967266, %v3513
        %v3519 = vadd.s32 %v3518, 127
        %v3520 = vshll.u32 %v3519, 23
        %v3521 = vor.u32 4788187, %v3520
        %v3522 = vand.u32 2147483647, %v3521
        %v3524 = vcvt.s32.f32 %v3517
        %v3525 = vmul.f32 %v3524, %v3522
        %v3526 = vxor.u32 %v3525, 2147483648
        %v3527 = vsel %vm3444, %v3526, %v3525
        %v3528 = vsub.s32 4, %v3504
        %v3529 = vsel %vm3444, %v3528, %v3504
        %v3530 = vsel %vm3443, %v2275, %v3527
        %v3531 = vsel %vm3443, 0, %v3529
        %v3532 = vcosq.f32.pop %v3530
        %v3533 = vsinq.f32.pop %v3530
        %vm3534 = vweird.f32 %v2275
        %v3535 = vadd.s32 %v3531, 3
        %v3536 = vand.u32 %v3535, 3
        %vm3537 = vcmp.lt.s32.totalorder %v3536, 2
        %vm3538 = vcmp.eq.s32.totalorder %v3536, 0
        %v3539 = vxor.u32 %v3533, 2147483648
        %v3540 = vsel %vm3538, %v3532, %v3539
        %vm3541 = vcmp.eq.s32.totalorder %v3536, 2
        %v3542 = vxor.u32 %v3532, 2147483648
        %v3543 = vsel %vm3541, %v3542, %v3533
        %v3544 = vsel %vm3537, %v3540, %v3543
        %v3545 = vsel %vm3534, nan, %v3544
        %v3546 = vand.u32 2147483647, %v2280
        %vm3547 = vcmp.le.f32.partialorder %v3546, 0.7853982
        %vm3548 = vcmp.lt.s32.totalorder %v2280, 0
        %v3549 = vand.u32 %v2280, 2139095040
        %v3550 = vshrl.u32 %v3549, 23
        %v3551 = vsub.s32 %v3550, 127
        %v3552 = vand.u32 2147483647, %v2280
        %v3553 = vand.u32 %v3552, 8388607
        %v3554 = vor.u32 %v3553, 8388608
        %v3555 = vsub.s32 0, %v3554
        %v3556 = vadd.s32 %v3551, 1
        %vm3557 = vcmp.gt.s32.totalorder %v3556, 0
        %v3558 = vsel %vm3557, %v3556, 0
        %v3559 = vshrl.u32 %v3558, 5
        %v3560 = vand.u32 %v3558, 31
        %v3561 = vsub.s32 32, %v3560
        %v3562 = vshrl.u32 683565275, %v3561
        %v3563 = vshll.u32 683565275, %v3560
        %v3564 = vshrl.u32 2475754826, %v3561
        %v3565 = vor.u32 %v3563, %v3564
        %v3566 = vshll.u32 2475754826, %v3560
        %v3567 = vshrl.u32 2131351028, %v3561
        %v3568 = vor.u32 %v3566, %v3567
        %v3569 = vshll.u32 2131351028, %v3560
        %v3570 = vshrl.u32 2102212464, %v3561
        %v3571 = vor.u32 %v3569, %v3570
        %v3572 = vshll.u32 2102212464, %v3560
        %v3573 = vshrl.u32 920167782, %v3561
        %v3574 = vor.u32 %v3572, %v3573
        %v3575 = vshll.u32 920167782, %v3560
        %v3576 = vshrl.u32 1326507024, %v3561
        %v3577 = vor.u32 %v3575, %v3576
        %vm3578 = vcmp.lt.s32.totalorder %v3559, 1
        %vm3579 = vcmp.lt.s32.totalorder %v3559, 2
        %vm3580 = vcmp.lt.s32.totalorder %v3559, 3
        %vm3581 = vcmp.lt.s32.totalorder %v3559, 4
        %v3582 = vsel %vm3578, %v3562, %v3565
        %v3583 = vsel %vm3581, %v3571, 2102212464
        %v3584 = vsel %vm3580, %v3568, %v3583
        %v3585 = vsel %vm3579, %v3582, %v3584
        %v3586 = vsel %vm3578, %v3565, %v3568
        %v3587 = vsel %vm3581, %v3574, 920167782
        %v3588 = vsel %vm3580, %v3571, %v3587
        %v3589 = vsel %vm3579, %v3586, %v3588
        %v3590 = vsel %vm3578, %v3568, %v3571
        %v3591 = vsel %vm3581, %v3577, 1326507024
        %v3592 = vsel %vm3580, %v3574, %v3591
        %v3593 = vsel %vm3579, %v3590, %v3592
        %v3594 = vshll.u32 %v3554, 8
        %v3595 = vmul.u32.u64.compose %v3594, %v3593
        %v3596 = vextract.low.u32 %v3595
        %v3597 = vextract.high.u32 %v3595
        %v3598 = vmul.u32.u64.compose %v3594, %v3589
        %v3599 = vextract.low.u32 %v3598
        %v3600 = vextract.high.u32 %v3598
        %v3601 = vmul.u32 %v3594, %v3585
        %v3602 = vadd.s32 %v3597, %v3599
        %vm3603 = vc.u32 %v3597, %v3599
        %v3604 = vadd.s32 %v3600, 1
        %v3605 = vsel %vm3603, %v3604, %v3600
        %v3606 = vadd.s32 %v3601, %v3605
        %v3607 = vadd.s32 %v3606, 536870912
        %v3608 = vshrl.u32 %v3607, 30
        %v3609 = vshll.u32 %v3608, 30
        %v3610 = vsub.s32 %v3606, %v3609
        %vm3611 = vcmp.lt.s32.totalorder %v3610, 0
        %v3612 = vsub.s32 0, %v3610
        %v3613 = vsel %vm3611, %v3612, %v3610
        %v3614 = vclz %v3613
        %v3615 = vsub.s32 %v3614, 2
        %vm3616 = vcmp.gt.s32.totalorder 0, %v3615
        %v3617 = vsel %vm3616, 0, %v3615
        %v3618 = vsub.s32 32, %v3617
        %v3619 = vshll.u32 %v3610, %v3617
        %v3620 = vshrl.u32 %v3602, %v3618
        %v3621 = vor.u32 %v3619, %v3620
        %v3622 = vsub.s32 4294967266, %v3617
        %v3623 = vadd.s32 %v3622, 127
        %v3624 = vshll.u32 %v3623, 23
        %v3625 = vor.u32 4788187, %v3624
        %v3626 = vand.u32 2147483647, %v3625
        %v3628 = vcvt.s32.f32 %v3621
        %v3629 = vmul.f32 %v3628, %v3626
        %v3630 = vxor.u32 %v3629, 2147483648
        %v3631 = vsel %vm3548, %v3630, %v3629
        %v3632 = vsub.s32 4, %v3608
        %v3633 = vsel %vm3548, %v3632, %v3608
        %v3634 = vsel %vm3547, %v2280, %v3631
        %v3635 = vsel %vm3547, 0, %v3633
        %v3636 = vcosq.f32.pop %v3634
        %v3637 = vsinq.f32.pop %v3634
        %vm3638 = vweird.f32 %v2280
        %v3639 = vadd.s32 %v3635, 3
        %v3640 = vand.u32 %v3639, 3
        %vm3641 = vcmp.lt.s32.totalorder %v3640, 2
        %vm3642 = vcmp.eq.s32.totalorder %v3640, 0
        %v3643 = vxor.u32 %v3637, 2147483648
        %v3644 = vsel %vm3642, %v3636, %v3643
        %vm3645 = vcmp.eq.s32.totalorder %v3640, 2
        %v3646 = vxor.u32 %v3636, 2147483648
        %v3647 = vsel %vm3645, %v3646, %v3637
        %v3648 = vsel %vm3641, %v3644, %v3647
        %v3649 = vsel %vm3638, nan, %v3648
        %v3650 = vand.u32 2147483647, %v2285
        %vm3651 = vcmp.le.f32.partialorder %v3650, 0.7853982
        %vm3652 = vcmp.lt.s32.totalorder %v2285, 0
        %v3653 = vand.u32 %v2285, 2139095040
        %v3654 = vshrl.u32 %v3653, 23
        %v3655 = vsub.s32 %v3654, 127
        %v3656 = vand.u32 2147483647, %v2285
        %v3657 = vand.u32 %v3656, 8388607
        %v3658 = vor.u32 %v3657, 8388608
        %v3659 = vsub.s32 0, %v3658
        %v3660 = vadd.s32 %v3655, 1
        %vm3661 = vcmp.gt.s32.totalorder %v3660, 0
        %v3662 = vsel %vm3661, %v3660, 0
        %v3663 = vshrl.u32 %v3662, 5
        %v3664 = vand.u32 %v3662, 31
        %v3665 = vsub.s32 32, %v3664
        %v3666 = vshrl.u32 683565275, %v3665
        %v3667 = vshll.u32 683565275, %v3664
        %v3668 = vshrl.u32 2475754826, %v3665
        %v3669 = vor.u32 %v3667, %v3668
        %v3670 = vshll.u32 2475754826, %v3664
        %v3671 = vshrl.u32 2131351028, %v3665
        %v3672 = vor.u32 %v3670, %v3671
        %v3673 = vshll.u32 2131351028, %v3664
        %v3674 = vshrl.u32 2102212464, %v3665
        %v3675 = vor.u32 %v3673, %v3674
        %v3676 = vshll.u32 2102212464, %v3664
        %v3677 = vshrl.u32 920167782, %v3665
        %v3678 = vor.u32 %v3676, %v3677
        %v3679 = vshll.u32 920167782, %v3664
        %v3680 = vshrl.u32 1326507024, %v3665
        %v3681 = vor.u32 %v3679, %v3680
        %vm3682 = vcmp.lt.s32.totalorder %v3663, 1
        %vm3683 = vcmp.lt.s32.totalorder %v3663, 2
        %vm3684 = vcmp.lt.s32.totalorder %v3663, 3
        %vm3685 = vcmp.lt.s32.totalorder %v3663, 4
        %v3686 = vsel %vm3682, %v3666, %v3669
        %v3687 = vsel %vm3685, %v3675, 2102212464
        %v3688 = vsel %vm3684, %v3672, %v3687
        %v3689 = vsel %vm3683, %v3686, %v3688
        %v3690 = vsel %vm3682, %v3669, %v3672
        %v3691 = vsel %vm3685, %v3678, 920167782
        %v3692 = vsel %vm3684, %v3675, %v3691
        %v3693 = vsel %vm3683, %v3690, %v3692
        %v3694 = vsel %vm3682, %v3672, %v3675
        %v3695 = vsel %vm3685, %v3681, 1326507024
        %v3696 = vsel %vm3684, %v3678, %v3695
        %v3697 = vsel %vm3683, %v3694, %v3696
        %v3698 = vshll.u32 %v3658, 8
        %v3699 = vmul.u32.u64.compose %v3698, %v3697
        %v3700 = vextract.low.u32 %v3699
        %v3701 = vextract.high.u32 %v3699
        %v3702 = vmul.u32.u64.compose %v3698, %v3693
        %v3703 = vextract.low.u32 %v3702
        %v3704 = vextract.high.u32 %v3702
        %v3705 = vmul.u32 %v3698, %v3689
        %v3706 = vadd.s32 %v3701, %v3703
        %vm3707 = vc.u32 %v3701, %v3703
        %v3708 = vadd.s32 %v3704, 1
        %v3709 = vsel %vm3707, %v3708, %v3704
        %v3710 = vadd.s32 %v3705, %v3709
        %v3711 = vadd.s32 %v3710, 536870912
        %v3712 = vshrl.u32 %v3711, 30
        %v3713 = vshll.u32 %v3712, 30
        %v3714 = vsub.s32 %v3710, %v3713
        %vm3715 = vcmp.lt.s32.totalorder %v3714, 0
        %v3716 = vsub.s32 0, %v3714
        %v3717 = vsel %vm3715, %v3716, %v3714
        %v3718 = vclz %v3717
        %v3719 = vsub.s32 %v3718, 2
        %vm3720 = vcmp.gt.s32.totalorder 0, %v3719
        %v3721 = vsel %vm3720, 0, %v3719
        %v3722 = vsub.s32 32, %v3721
        %v3723 = vshll.u32 %v3714, %v3721
        %v3724 = vshrl.u32 %v3706, %v3722
        %v3725 = vor.u32 %v3723, %v3724
        %v3726 = vsub.s32 4294967266, %v3721
        %v3727 = vadd.s32 %v3726, 127
        %v3728 = vshll.u32 %v3727, 23
        %v3729 = vor.u32 4788187, %v3728
        %v3730 = vand.u32 2147483647, %v3729
        %v3732 = vcvt.s32.f32 %v3725
        %v3733 = vmul.f32 %v3732, %v3730
        %v3734 = vxor.u32 %v3733, 2147483648
        %v3735 = vsel %vm3652, %v3734, %v3733
        %v3736 = vsub.s32 4, %v3712
        %v3737 = vsel %vm3652, %v3736, %v3712
        %v3738 = vsel %vm3651, %v2285, %v3735
        %v3739 = vsel %vm3651, 0, %v3737
        %v3740 = vcosq.f32.pop %v3738
        %v3741 = vsinq.f32.pop %v3738
        %vm3742 = vweird.f32 %v2285
        %v3743 = vadd.s32 %v3739, 3
        %v3744 = vand.u32 %v3743, 3
        %vm3745 = vcmp.lt.s32.totalorder %v3744, 2
        %vm3746 = vcmp.eq.s32.totalorder %v3744, 0
        %v3747 = vxor.u32 %v3741, 2147483648
        %v3748 = vsel %vm3746, %v3740, %v3747
        %vm3749 = vcmp.eq.s32.totalorder %v3744, 2
        %v3750 = vxor.u32 %v3740, 2147483648
        %v3751 = vsel %vm3749, %v3750, %v3741
        %v3752 = vsel %vm3745, %v3748, %v3751
        %v3753 = vsel %vm3742, nan, %v3752
        %v3754 = vand.u32 2147483647, %v2290
        %vm3755 = vcmp.le.f32.partialorder %v3754, 0.7853982
        %vm3756 = vcmp.lt.s32.totalorder %v2290, 0
        %v3757 = vand.u32 %v2290, 2139095040
        %v3758 = vshrl.u32 %v3757, 23
        %v3759 = vsub.s32 %v3758, 127
        %v3760 = vand.u32 2147483647, %v2290
        %v3761 = vand.u32 %v3760, 8388607
        %v3762 = vor.u32 %v3761, 8388608
        %v3763 = vsub.s32 0, %v3762
        %v3764 = vadd.s32 %v3759, 1
        %vm3765 = vcmp.gt.s32.totalorder %v3764, 0
        %v3766 = vsel %vm3765, %v3764, 0
        %v3767 = vshrl.u32 %v3766, 5
        %v3768 = vand.u32 %v3766, 31
        %v3769 = vsub.s32 32, %v3768
        %v3770 = vshrl.u32 683565275, %v3769
        %v3771 = vshll.u32 683565275, %v3768
        %v3772 = vshrl.u32 2475754826, %v3769
        %v3773 = vor.u32 %v3771, %v3772
        %v3774 = vshll.u32 2475754826, %v3768
        %v3775 = vshrl.u32 2131351028, %v3769
        %v3776 = vor.u32 %v3774, %v3775
        %v3777 = vshll.u32 2131351028, %v3768
        %v3778 = vshrl.u32 2102212464, %v3769
        %v3779 = vor.u32 %v3777, %v3778
        %v3780 = vshll.u32 2102212464, %v3768
        %v3781 = vshrl.u32 920167782, %v3769
        %v3782 = vor.u32 %v3780, %v3781
        %v3783 = vshll.u32 920167782, %v3768
        %v3784 = vshrl.u32 1326507024, %v3769
        %v3785 = vor.u32 %v3783, %v3784
        %vm3786 = vcmp.lt.s32.totalorder %v3767, 1
        %vm3787 = vcmp.lt.s32.totalorder %v3767, 2
        %vm3788 = vcmp.lt.s32.totalorder %v3767, 3
        %vm3789 = vcmp.lt.s32.totalorder %v3767, 4
        %v3790 = vsel %vm3786, %v3770, %v3773
        %v3791 = vsel %vm3789, %v3779, 2102212464
        %v3792 = vsel %vm3788, %v3776, %v3791
        %v3793 = vsel %vm3787, %v3790, %v3792
        %v3794 = vsel %vm3786, %v3773, %v3776
        %v3795 = vsel %vm3789, %v3782, 920167782
        %v3796 = vsel %vm3788, %v3779, %v3795
        %v3797 = vsel %vm3787, %v3794, %v3796
        %v3798 = vsel %vm3786, %v3776, %v3779
        %v3799 = vsel %vm3789, %v3785, 1326507024
        %v3800 = vsel %vm3788, %v3782, %v3799
        %v3801 = vsel %vm3787, %v3798, %v3800
        %v3802 = vshll.u32 %v3762, 8
        %v3803 = vmul.u32.u64.compose %v3802, %v3801
        %v3804 = vextract.low.u32 %v3803
        %v3805 = vextract.high.u32 %v3803
        %v3806 = vmul.u32.u64.compose %v3802, %v3797
        %v3807 = vextract.low.u32 %v3806
        %v3808 = vextract.high.u32 %v3806
        %v3809 = vmul.u32 %v3802, %v3793
        %v3810 = vadd.s32 %v3805, %v3807
        %vm3811 = vc.u32 %v3805, %v3807
        %v3812 = vadd.s32 %v3808, 1
        %v3813 = vsel %vm3811, %v3812, %v3808
        %v3814 = vadd.s32 %v3809, %v3813
        %v3815 = vadd.s32 %v3814, 536870912
        %v3816 = vshrl.u32 %v3815, 30
        %v3817 = vshll.u32 %v3816, 30
        %v3818 = vsub.s32 %v3814, %v3817
        %vm3819 = vcmp.lt.s32.totalorder %v3818, 0
        %v3820 = vsub.s32 0, %v3818
        %v3821 = vsel %vm3819, %v3820, %v3818
        %v3822 = vclz %v3821
        %v3823 = vsub.s32 %v3822, 2
        %vm3824 = vcmp.gt.s32.totalorder 0, %v3823
        %v3825 = vsel %vm3824, 0, %v3823
        %v3826 = vsub.s32 32, %v3825
        %v3827 = vshll.u32 %v3818, %v3825
        %v3828 = vshrl.u32 %v3810, %v3826
        %v3829 = vor.u32 %v3827, %v3828
        %v3830 = vsub.s32 4294967266, %v3825
        %v3831 = vadd.s32 %v3830, 127
        %v3832 = vshll.u32 %v3831, 23
        %v3833 = vor.u32 4788187, %v3832
        %v3834 = vand.u32 2147483647, %v3833
        %v3836 = vcvt.s32.f32 %v3829
        %v3837 = vmul.f32 %v3836, %v3834
        %v3838 = vxor.u32 %v3837, 2147483648
        %v3839 = vsel %vm3756, %v3838, %v3837
        %v3840 = vsub.s32 4, %v3816
        %v3841 = vsel %vm3756, %v3840, %v3816
        %v3842 = vsel %vm3755, %v2290, %v3839
        %v3843 = vsel %vm3755, 0, %v3841
        %v3844 = vcosq.f32.pop %v3842
        %v3845 = vsinq.f32.pop %v3842
        %vm3846 = vweird.f32 %v2290
        %v3847 = vadd.s32 %v3843, 3
        %v3848 = vand.u32 %v3847, 3
        %vm3849 = vcmp.lt.s32.totalorder %v3848, 2
        %vm3850 = vcmp.eq.s32.totalorder %v3848, 0
        %v3851 = vxor.u32 %v3845, 2147483648
        %v3852 = vsel %vm3850, %v3844, %v3851
        %vm3853 = vcmp.eq.s32.totalorder %v3848, 2
        %v3854 = vxor.u32 %v3844, 2147483648
        %v3855 = vsel %vm3853, %v3854, %v3845
        %v3856 = vsel %vm3849, %v3852, %v3855
        %v3857 = vsel %vm3846, nan, %v3856
        %v3858 = vand.u32 2147483647, %v2295
        %vm3859 = vcmp.le.f32.partialorder %v3858, 0.7853982
        %vm3860 = vcmp.lt.s32.totalorder %v2295, 0
        %v3861 = vand.u32 %v2295, 2139095040
        %v3862 = vshrl.u32 %v3861, 23
        %v3863 = vsub.s32 %v3862, 127
        %v3864 = vand.u32 2147483647, %v2295
        %v3865 = vand.u32 %v3864, 8388607
        %v3866 = vor.u32 %v3865, 8388608
        %v3867 = vsub.s32 0, %v3866
        %v3868 = vadd.s32 %v3863, 1
        %vm3869 = vcmp.gt.s32.totalorder %v3868, 0
        %v3870 = vsel %vm3869, %v3868, 0
        %v3871 = vshrl.u32 %v3870, 5
        %v3872 = vand.u32 %v3870, 31
        %v3873 = vsub.s32 32, %v3872
        %v3874 = vshrl.u32 683565275, %v3873
        %v3875 = vshll.u32 683565275, %v3872
        %v3876 = vshrl.u32 2475754826, %v3873
        %v3877 = vor.u32 %v3875, %v3876
        %v3878 = vshll.u32 2475754826, %v3872
        %v3879 = vshrl.u32 2131351028, %v3873
        %v3880 = vor.u32 %v3878, %v3879
        %v3881 = vshll.u32 2131351028, %v3872
        %v3882 = vshrl.u32 2102212464, %v3873
        %v3883 = vor.u32 %v3881, %v3882
        %v3884 = vshll.u32 2102212464, %v3872
        %v3885 = vshrl.u32 920167782, %v3873
        %v3886 = vor.u32 %v3884, %v3885
        %v3887 = vshll.u32 920167782, %v3872
        %v3888 = vshrl.u32 1326507024, %v3873
        %v3889 = vor.u32 %v3887, %v3888
        %vm3890 = vcmp.lt.s32.totalorder %v3871, 1
        %vm3891 = vcmp.lt.s32.totalorder %v3871, 2
        %vm3892 = vcmp.lt.s32.totalorder %v3871, 3
        %vm3893 = vcmp.lt.s32.totalorder %v3871, 4
        %v3894 = vsel %vm3890, %v3874, %v3877
        %v3895 = vsel %vm3893, %v3883, 2102212464
        %v3896 = vsel %vm3892, %v3880, %v3895
        %v3897 = vsel %vm3891, %v3894, %v3896
        %v3898 = vsel %vm3890, %v3877, %v3880
        %v3899 = vsel %vm3893, %v3886, 920167782
        %v3900 = vsel %vm3892, %v3883, %v3899
        %v3901 = vsel %vm3891, %v3898, %v3900
        %v3902 = vsel %vm3890, %v3880, %v3883
        %v3903 = vsel %vm3893, %v3889, 1326507024
        %v3904 = vsel %vm3892, %v3886, %v3903
        %v3905 = vsel %vm3891, %v3902, %v3904
        %v3906 = vshll.u32 %v3866, 8
        %v3907 = vmul.u32.u64.compose %v3906, %v3905
        %v3908 = vextract.low.u32 %v3907
        %v3909 = vextract.high.u32 %v3907
        %v3910 = vmul.u32.u64.compose %v3906, %v3901
        %v3911 = vextract.low.u32 %v3910
        %v3912 = vextract.high.u32 %v3910
        %v3913 = vmul.u32 %v3906, %v3897
        %v3914 = vadd.s32 %v3909, %v3911
        %vm3915 = vc.u32 %v3909, %v3911
        %v3916 = vadd.s32 %v3912, 1
        %v3917 = vsel %vm3915, %v3916, %v3912
        %v3918 = vadd.s32 %v3913, %v3917
        %v3919 = vadd.s32 %v3918, 536870912
        %v3920 = vshrl.u32 %v3919, 30
        %v3921 = vshll.u32 %v3920, 30
        %v3922 = vsub.s32 %v3918, %v3921
        %vm3923 = vcmp.lt.s32.totalorder %v3922, 0
        %v3924 = vsub.s32 0, %v3922
        %v3925 = vsel %vm3923, %v3924, %v3922
        %v3926 = vclz %v3925
        %v3927 = vsub.s32 %v3926, 2
        %vm3928 = vcmp.gt.s32.totalorder 0, %v3927
        %v3929 = vsel %vm3928, 0, %v3927
        %v3930 = vsub.s32 32, %v3929
        %v3931 = vshll.u32 %v3922, %v3929
        %v3932 = vshrl.u32 %v3914, %v3930
        %v3933 = vor.u32 %v3931, %v3932
        %v3934 = vsub.s32 4294967266, %v3929
        %v3935 = vadd.s32 %v3934, 127
        %v3936 = vshll.u32 %v3935, 23
        %v3937 = vor.u32 4788187, %v3936
        %v3938 = vand.u32 2147483647, %v3937
        %v3940 = vcvt.s32.f32 %v3933
        %v3941 = vmul.f32 %v3940, %v3938
        %v3942 = vxor.u32 %v3941, 2147483648
        %v3943 = vsel %vm3860, %v3942, %v3941
        %v3944 = vsub.s32 4, %v3920
        %v3945 = vsel %vm3860, %v3944, %v3920
        %v3946 = vsel %vm3859, %v2295, %v3943
        %v3947 = vsel %vm3859, 0, %v3945
        %v3948 = vcosq.f32.pop %v3946
        %v3949 = vsinq.f32.pop %v3946
        %vm3950 = vweird.f32 %v2295
        %v3951 = vadd.s32 %v3947, 3
        %v3952 = vand.u32 %v3951, 3
        %vm3953 = vcmp.lt.s32.totalorder %v3952, 2
        %vm3954 = vcmp.eq.s32.totalorder %v3952, 0
        %v3955 = vxor.u32 %v3949, 2147483648
        %v3956 = vsel %vm3954, %v3948, %v3955
        %vm3957 = vcmp.eq.s32.totalorder %v3952, 2
        %v3958 = vxor.u32 %v3948, 2147483648
        %v3959 = vsel %vm3957, %v3958, %v3949
        %v3960 = vsel %vm3953, %v3956, %v3959
        %v3961 = vsel %vm3950, nan, %v3960
        %s3962 = scalar_lea.vmem %s2, 128
        %v3963 = vld [vmem:[%s3962] sm:$0xff]
        %v3964 = vld [vmem:[%s3962 + $0x8] sm:$0xff]
        %v3965 = vld [vmem:[%s3962 + $0x10] sm:$0xff]
        %v3966 = vld [vmem:[%s3962 + $0x18] sm:$0xff]
        %v3967 = vld [vmem:[%s3962 + $0x20] sm:$0xff]
        %v3968 = vld [vmem:[%s3962 + $0x28] sm:$0xff]
        %v3969 = vld [vmem:[%s3962 + $0x30] sm:$0xff]
        %v3970 = vld [vmem:[%s3962 + $0x38] sm:$0xff]
        %v3971 = vld [vmem:[%s3962 + $0x40] sm:$0xff]
        %v3972 = vld [vmem:[%s3962 + $0x48] sm:$0xff]
        %v3973 = vld [vmem:[%s3962 + $0x50] sm:$0xff]
        %v3974 = vld [vmem:[%s3962 + $0x58] sm:$0xff]
        %v3975 = vld [vmem:[%s3962 + $0x60] sm:$0xff]
        %v3976 = vld [vmem:[%s3962 + $0x68] sm:$0xff]
        %v3977 = vld [vmem:[%s3962 + $0x70] sm:$0xff]
        %v3978 = vld [vmem:[%s3962 + $0x78] sm:$0xff]
        %v3979 = vld [vmem:[%s3 + $0x2] sm:$0x1]
        %v3980 = vlaneseq
        %v3981 = vshrl.u32 %v3980, 7
        %v3982 = vsub.s32 0, %v3981
        %v3983 = vrot.slane %v3979, %v3982
        %3984 = vmatprep.subr.mxu0 0.0
        %3985 = vmatpush1.msra.mxu0 %v3963
        %3986 = vmatprep.subr.mxu0 0.0
        %3987 = vmatpush1.msra.mxu0 %v3964
        %3988 = vmatprep.subr.mxu0 0.0
        %3989 = vmatpush1.msra.mxu0 %v3965
        %3990 = vmatprep.subr.mxu0 0.0
        %3991 = vmatpush1.msra.mxu0 %v3966
        %3992 = vmatprep.subr.mxu0 0.0
        %3993 = vmatpush1.msra.mxu0 %v3967
        %3994 = vmatprep.subr.mxu0 0.0
        %3995 = vmatpush1.msra.mxu0 %v3968
        %3996 = vmatprep.subr.mxu0 0.0
        %3997 = vmatpush1.msra.mxu0 %v3969
        %3998 = vmatprep.subr.mxu0 0.0
        %3999 = vmatpush1.msra.mxu0 %v3970
        %4000 = vmatprep.subr.mxu0 0.0
        %4001 = vmatpush1.msra.mxu0 %v3971
        %4002 = vmatprep.subr.mxu0 0.0
        %4003 = vmatpush1.msra.mxu0 %v3972
        %4004 = vmatprep.subr.mxu0 0.0
        %4005 = vmatpush1.msra.mxu0 %v3973
        %4006 = vmatprep.subr.mxu0 0.0
        %4007 = vmatpush1.msra.mxu0 %v3974
        %4008 = vmatprep.subr.mxu0 0.0
        %4009 = vmatpush1.msra.mxu0 %v3975
        %4010 = vmatprep.subr.mxu0 0.0
        %4011 = vmatpush1.msra.mxu0 %v3976
        %4012 = vmatprep.subr.mxu0 0.0
        %4013 = vmatpush1.msra.mxu0 %v3977
        %4014 = vmatprep.subr.mxu0 0.0
        %4015 = vmatpush1.msra.mxu0 %v3978
        %4016 = vmatprep.subr.mxu0 0.0
        %4017 = vmatpush1.msra.mxu0 0.0
        %4018 = vmatprep.subr.mxu0 0.0
        %4019 = vmatpush1.msra.mxu0 0.0
        %4020 = vmatprep.subr.mxu0 0.0
        %4021 = vmatpush1.msra.mxu0 0.0
        %4022 = vmatprep.subr.mxu0 0.0
        %4023 = vmatpush1.msra.mxu0 0.0
        %4024 = vmatprep.subr.mxu0 0.0
        %4025 = vmatpush1.msra.mxu0 0.0
        %4026 = vmatprep.subr.mxu0 0.0
        %4027 = vmatpush1.msra.mxu0 0.0
        %4028 = vmatprep.subr.mxu0 0.0
        %4029 = vmatpush1.msra.mxu0 0.0
        %4030 = vmatprep.subr.mxu0 0.0
        %4031 = vmatpush1.msra.mxu0 0.0
        %4032 = vmatprep.subr.mxu0 0.0
        %4033 = vmatpush1.msra.mxu0 0.0
        %4034 = vmatprep.subr.mxu0 0.0
        %4035 = vmatpush1.msra.mxu0 0.0
        %4036 = vmatprep.subr.mxu0 0.0
        %4037 = vmatpush1.msra.mxu0 0.0
        %4038 = vmatprep.subr.mxu0 0.0
        %4039 = vmatpush1.msra.mxu0 0.0
        %4040 = vmatprep.subr.mxu0 0.0
        %4041 = vmatpush1.msra.mxu0 0.0
        %4042 = vmatprep.subr.mxu0 0.0
        %4043 = vmatpush1.msra.mxu0 0.0
        %4044 = vmatprep.subr.mxu0 0.0
        %4045 = vmatpush1.msra.mxu0 0.0
        %4046 = vmatprep.subr.mxu0 0.0
        %4047 = vmatpush1.msra.mxu0 0.0
        %4048 = vmatprep.mubr.f32.mxu0 0.0
        %4049 = vmatmul.mubr.f32.gmra.mrb[0].mxu0 %v2401
        %v4050 = vpop.f32.mrb[0].mxu0
        %v4051 = vadd.f32 %v3983, %v4050
        %v4052 = vpop.f32.mrb[0].mxu0
        %4053 = vmatprep.mubr.f32.mxu0 0.0
        %4054 = vmatmul.mubr.f32.gmra.mrb[0].mxu0 %v2505
        %v4055 = vpop.f32.mrb[0].mxu0
        %v4056 = vadd.f32 %v3983, %v4055
        %v4057 = vpop.f32.mrb[0].mxu0
        %4058 = vmatprep.mubr.f32.mxu0 0.0
        %4059 = vmatmul.mubr.f32.gmra.mrb[0].mxu0 %v2609
        %v4060 = vpop.f32.mrb[0].mxu0
        %v4061 = vadd.f32 %v3983, %v4060
        %v4062 = vpop.f32.mrb[0].mxu0
        %4063 = vmatprep.mubr.f32.mxu0 0.0
        %4064 = vmatmul.mubr.f32.gmra.mrb[0].mxu0 %v2713
        %v4065 = vpop.f32.mrb[0].mxu0
        %v4066 = vadd.f32 %v3983, %v4065
        %v4067 = vpop.f32.mrb[0].mxu0
        %4068 = vmatprep.mubr.f32.mxu0 0.0
        %4069 = vmatmul.mubr.f32.gmra.mrb[0].mxu0 %v2817
        %v4070 = vpop.f32.mrb[0].mxu0
        %v4071 = vadd.f32 %v3983, %v4070
        %v4072 = vpop.f32.mrb[0].mxu0
        %4073 = vmatprep.mubr.f32.mxu0 0.0
        %4074 = vmatmul.mubr.f32.gmra.mrb[0].mxu0 %v2921
        %v4075 = vpop.f32.mrb[0].mxu0
        %v4076 = vadd.f32 %v3983, %v4075
        %v4077 = vpop.f32.mrb[0].mxu0
        %4078 = vmatprep.mubr.f32.mxu0 0.0
        %4079 = vmatmul.mubr.f32.gmra.mrb[0].mxu0 %v3025
        %v4080 = vpop.f32.mrb[0].mxu0
        %v4081 = vadd.f32 %v3983, %v4080
        %v4082 = vpop.f32.mrb[0].mxu0
        %4083 = vmatprep.mubr.f32.mxu0 0.0
        %4084 = vmatmul.mubr.f32.gmra.mrb[0].mxu0 %v3129
        %v4085 = vpop.f32.mrb[0].mxu0
        %v4086 = vadd.f32 %v3983, %v4085
        %v4087 = vpop.f32.mrb[0].mxu0
        %4088 = vmatprep.mubr.f32.mxu0 0.0
        %4089 = vmatmul.mubr.f32.gmra.mrb[0].mxu0 %v3233
        %v4090 = vpop.f32.mrb[0].mxu0
        %v4091 = vadd.f32 %v3983, %v4090
        %v4092 = vpop.f32.mrb[0].mxu0
        %4093 = vmatprep.mubr.f32.mxu0 0.0
        %4094 = vmatmul.mubr.f32.gmra.mrb[0].mxu0 %v3337
        %v4095 = vpop.f32.mrb[0].mxu0
        %v4096 = vadd.f32 %v3983, %v4095
        %v4097 = vpop.f32.mrb[0].mxu0
        %4098 = vmatprep.mubr.f32.mxu0 0.0
        %4099 = vmatmul.mubr.f32.gmra.mrb[0].mxu0 %v3441
        %v4100 = vpop.f32.mrb[0].mxu0
        %v4101 = vadd.f32 %v3983, %v4100
        %v4102 = vpop.f32.mrb[0].mxu0
        %4103 = vmatprep.mubr.f32.mxu0 0.0
        %4104 = vmatmul.mubr.f32.gmra.mrb[0].mxu0 %v3545
        %v4105 = vpop.f32.mrb[0].mxu0
        %v4106 = vadd.f32 %v3983, %v4105
        %v4107 = vpop.f32.mrb[0].mxu0
        %4108 = vmatprep.mubr.f32.mxu0 0.0
        %4109 = vmatmul.mubr.f32.gmra.mrb[0].mxu0 %v3649
        %v4110 = vpop.f32.mrb[0].mxu0
        %v4111 = vadd.f32 %v3983, %v4110
        %v4112 = vpop.f32.mrb[0].mxu0
        %4113 = vmatprep.mubr.f32.mxu0 0.0
        %4114 = vmatmul.mubr.f32.gmra.mrb[0].mxu0 %v3753
        %v4115 = vpop.f32.mrb[0].mxu0
        %v4116 = vadd.f32 %v3983, %v4115
        %v4117 = vpop.f32.mrb[0].mxu0
        %4118 = vmatprep.mubr.f32.mxu0 0.0
        %4119 = vmatmul.mubr.f32.gmra.mrb[0].mxu0 %v3857
        %v4120 = vpop.f32.mrb[0].mxu0
        %v4121 = vadd.f32 %v3983, %v4120
        %v4122 = vpop.f32.mrb[0].mxu0
        %4123 = vmatprep.mubr.f32.mxu0 0.0
        %4124 = vmatmul.mubr.f32.gmra.mrb[0].mxu0 %v3961
        %v4125 = vpop.f32.mrb[0].mxu0
        %v4126 = vadd.f32 %v3983, %v4125
        %v4127 = vpop.f32.mrb[0].mxu0
        %4128 = vdwg.mxu0
        %v4129 = vand.u32 2147483647, %v4051
        %vm4130 = vcmp.le.f32.partialorder %v4129, 0.7853982
        %vm4131 = vcmp.lt.s32.totalorder %v4051, 0
        %v4132 = vand.u32 %v4051, 2139095040
        %v4133 = vshrl.u32 %v4132, 23
        %v4134 = vsub.s32 %v4133, 127
        %v4135 = vand.u32 2147483647, %v4051
        %v4136 = vand.u32 %v4135, 8388607
        %v4137 = vor.u32 %v4136, 8388608
        %v4138 = vsub.s32 0, %v4137
        %v4139 = vadd.s32 %v4134, 1
        %vm4140 = vcmp.gt.s32.totalorder %v4139, 0
        %v4141 = vsel %vm4140, %v4139, 0
        %v4142 = vshrl.u32 %v4141, 5
        %v4143 = vand.u32 %v4141, 31
        %v4144 = vsub.s32 32, %v4143
        %v4145 = vshrl.u32 683565275, %v4144
        %v4146 = vshll.u32 683565275, %v4143
        %v4147 = vshrl.u32 2475754826, %v4144
        %v4148 = vor.u32 %v4146, %v4147
        %v4149 = vshll.u32 2475754826, %v4143
        %v4150 = vshrl.u32 2131351028, %v4144
        %v4151 = vor.u32 %v4149, %v4150
        %v4152 = vshll.u32 2131351028, %v4143
        %v4153 = vshrl.u32 2102212464, %v4144
        %v4154 = vor.u32 %v4152, %v4153
        %v4155 = vshll.u32 2102212464, %v4143
        %v4156 = vshrl.u32 920167782, %v4144
        %v4157 = vor.u32 %v4155, %v4156
        %v4158 = vshll.u32 920167782, %v4143
        %v4159 = vshrl.u32 1326507024, %v4144
        %v4160 = vor.u32 %v4158, %v4159
        %vm4161 = vcmp.lt.s32.totalorder %v4142, 1
        %vm4162 = vcmp.lt.s32.totalorder %v4142, 2
        %vm4163 = vcmp.lt.s32.totalorder %v4142, 3
        %vm4164 = vcmp.lt.s32.totalorder %v4142, 4
        %v4165 = vsel %vm4161, %v4145, %v4148
        %v4166 = vsel %vm4164, %v4154, 2102212464
        %v4167 = vsel %vm4163, %v4151, %v4166
        %v4168 = vsel %vm4162, %v4165, %v4167
        %v4169 = vsel %vm4161, %v4148, %v4151
        %v4170 = vsel %vm4164, %v4157, 920167782
        %v4171 = vsel %vm4163, %v4154, %v4170
        %v4172 = vsel %vm4162, %v4169, %v4171
        %v4173 = vsel %vm4161, %v4151, %v4154
        %v4174 = vsel %vm4164, %v4160, 1326507024
        %v4175 = vsel %vm4163, %v4157, %v4174
        %v4176 = vsel %vm4162, %v4173, %v4175
        %v4177 = vshll.u32 %v4137, 8
        %v4178 = vmul.u32.u64.compose %v4177, %v4176
        %v4179 = vextract.low.u32 %v4178
        %v4180 = vextract.high.u32 %v4178
        %v4181 = vmul.u32.u64.compose %v4177, %v4172
        %v4182 = vextract.low.u32 %v4181
        %v4183 = vextract.high.u32 %v4181
        %v4184 = vmul.u32 %v4177, %v4168
        %v4185 = vadd.s32 %v4180, %v4182
        %vm4186 = vc.u32 %v4180, %v4182
        %v4187 = vadd.s32 %v4183, 1
        %v4188 = vsel %vm4186, %v4187, %v4183
        %v4189 = vadd.s32 %v4184, %v4188
        %v4190 = vadd.s32 %v4189, 536870912
        %v4191 = vshrl.u32 %v4190, 30
        %v4192 = vshll.u32 %v4191, 30
        %v4193 = vsub.s32 %v4189, %v4192
        %vm4194 = vcmp.lt.s32.totalorder %v4193, 0
        %v4195 = vsub.s32 0, %v4193
        %v4196 = vsel %vm4194, %v4195, %v4193
        %v4197 = vclz %v4196
        %v4198 = vsub.s32 %v4197, 2
        %vm4199 = vcmp.gt.s32.totalorder 0, %v4198
        %v4200 = vsel %vm4199, 0, %v4198
        %v4201 = vsub.s32 32, %v4200
        %v4202 = vshll.u32 %v4193, %v4200
        %v4203 = vshrl.u32 %v4185, %v4201
        %v4204 = vor.u32 %v4202, %v4203
        %v4205 = vsub.s32 4294967266, %v4200
        %v4206 = vadd.s32 %v4205, 127
        %v4207 = vshll.u32 %v4206, 23
        %v4208 = vor.u32 4788187, %v4207
        %v4209 = vand.u32 2147483647, %v4208
        %v4211 = vcvt.s32.f32 %v4204
        %v4212 = vmul.f32 %v4211, %v4209
        %v4213 = vxor.u32 %v4212, 2147483648
        %v4214 = vsel %vm4131, %v4213, %v4212
        %v4215 = vsub.s32 4, %v4191
        %v4216 = vsel %vm4131, %v4215, %v4191
        %v4217 = vsel %vm4130, %v4051, %v4214
        %v4218 = vsel %vm4130, 0, %v4216
        %v4219 = vcosq.f32.pop %v4217
        %v4220 = vsinq.f32.pop %v4217
        %vm4221 = vweird.f32 %v4051
        %v4222 = vadd.s32 %v4218, 3
        %v4223 = vand.u32 %v4222, 3
        %vm4224 = vcmp.lt.s32.totalorder %v4223, 2
        %vm4225 = vcmp.eq.s32.totalorder %v4223, 0
        %v4226 = vxor.u32 %v4220, 2147483648
        %v4227 = vsel %vm4225, %v4219, %v4226
        %vm4228 = vcmp.eq.s32.totalorder %v4223, 2
        %v4229 = vxor.u32 %v4219, 2147483648
        %v4230 = vsel %vm4228, %v4229, %v4220
        %v4231 = vsel %vm4224, %v4227, %v4230
        %v4232 = vsel %vm4221, nan, %v4231
        %v4233 = vand.u32 2147483647, %v4056
        %vm4234 = vcmp.le.f32.partialorder %v4233, 0.7853982
        %vm4235 = vcmp.lt.s32.totalorder %v4056, 0
        %v4236 = vand.u32 %v4056, 2139095040
        %v4237 = vshrl.u32 %v4236, 23
        %v4238 = vsub.s32 %v4237, 127
        %v4239 = vand.u32 2147483647, %v4056
        %v4240 = vand.u32 %v4239, 8388607
        %v4241 = vor.u32 %v4240, 8388608
        %v4242 = vsub.s32 0, %v4241
        %v4243 = vadd.s32 %v4238, 1
        %vm4244 = vcmp.gt.s32.totalorder %v4243, 0
        %v4245 = vsel %vm4244, %v4243, 0
        %v4246 = vshrl.u32 %v4245, 5
        %v4247 = vand.u32 %v4245, 31
        %v4248 = vsub.s32 32, %v4247
        %v4249 = vshrl.u32 683565275, %v4248
        %v4250 = vshll.u32 683565275, %v4247
        %v4251 = vshrl.u32 2475754826, %v4248
        %v4252 = vor.u32 %v4250, %v4251
        %v4253 = vshll.u32 2475754826, %v4247
        %v4254 = vshrl.u32 2131351028, %v4248
        %v4255 = vor.u32 %v4253, %v4254
        %v4256 = vshll.u32 2131351028, %v4247
        %v4257 = vshrl.u32 2102212464, %v4248
        %v4258 = vor.u32 %v4256, %v4257
        %v4259 = vshll.u32 2102212464, %v4247
        %v4260 = vshrl.u32 920167782, %v4248
        %v4261 = vor.u32 %v4259, %v4260
        %v4262 = vshll.u32 920167782, %v4247
        %v4263 = vshrl.u32 1326507024, %v4248
        %v4264 = vor.u32 %v4262, %v4263
        %vm4265 = vcmp.lt.s32.totalorder %v4246, 1
        %vm4266 = vcmp.lt.s32.totalorder %v4246, 2
        %vm4267 = vcmp.lt.s32.totalorder %v4246, 3
        %vm4268 = vcmp.lt.s32.totalorder %v4246, 4
        %v4269 = vsel %vm4265, %v4249, %v4252
        %v4270 = vsel %vm4268, %v4258, 2102212464
        %v4271 = vsel %vm4267, %v4255, %v4270
        %v4272 = vsel %vm4266, %v4269, %v4271
        %v4273 = vsel %vm4265, %v4252, %v4255
        %v4274 = vsel %vm4268, %v4261, 920167782
        %v4275 = vsel %vm4267, %v4258, %v4274
        %v4276 = vsel %vm4266, %v4273, %v4275
        %v4277 = vsel %vm4265, %v4255, %v4258
        %v4278 = vsel %vm4268, %v4264, 1326507024
        %v4279 = vsel %vm4267, %v4261, %v4278
        %v4280 = vsel %vm4266, %v4277, %v4279
        %v4281 = vshll.u32 %v4241, 8
        %v4282 = vmul.u32.u64.compose %v4281, %v4280
        %v4283 = vextract.low.u32 %v4282
        %v4284 = vextract.high.u32 %v4282
        %v4285 = vmul.u32.u64.compose %v4281, %v4276
        %v4286 = vextract.low.u32 %v4285
        %v4287 = vextract.high.u32 %v4285
        %v4288 = vmul.u32 %v4281, %v4272
        %v4289 = vadd.s32 %v4284, %v4286
        %vm4290 = vc.u32 %v4284, %v4286
        %v4291 = vadd.s32 %v4287, 1
        %v4292 = vsel %vm4290, %v4291, %v4287
        %v4293 = vadd.s32 %v4288, %v4292
        %v4294 = vadd.s32 %v4293, 536870912
        %v4295 = vshrl.u32 %v4294, 30
        %v4296 = vshll.u32 %v4295, 30
        %v4297 = vsub.s32 %v4293, %v4296
        %vm4298 = vcmp.lt.s32.totalorder %v4297, 0
        %v4299 = vsub.s32 0, %v4297
        %v4300 = vsel %vm4298, %v4299, %v4297
        %v4301 = vclz %v4300
        %v4302 = vsub.s32 %v4301, 2
        %vm4303 = vcmp.gt.s32.totalorder 0, %v4302
        %v4304 = vsel %vm4303, 0, %v4302
        %v4305 = vsub.s32 32, %v4304
        %v4306 = vshll.u32 %v4297, %v4304
        %v4307 = vshrl.u32 %v4289, %v4305
        %v4308 = vor.u32 %v4306, %v4307
        %v4309 = vsub.s32 4294967266, %v4304
        %v4310 = vadd.s32 %v4309, 127
        %v4311 = vshll.u32 %v4310, 23
        %v4312 = vor.u32 4788187, %v4311
        %v4313 = vand.u32 2147483647, %v4312
        %v4315 = vcvt.s32.f32 %v4308
        %v4316 = vmul.f32 %v4315, %v4313
        %v4317 = vxor.u32 %v4316, 2147483648
        %v4318 = vsel %vm4235, %v4317, %v4316
        %v4319 = vsub.s32 4, %v4295
        %v4320 = vsel %vm4235, %v4319, %v4295
        %v4321 = vsel %vm4234, %v4056, %v4318
        %v4322 = vsel %vm4234, 0, %v4320
        %v4323 = vcosq.f32.pop %v4321
        %v4324 = vsinq.f32.pop %v4321
        %vm4325 = vweird.f32 %v4056
        %v4326 = vadd.s32 %v4322, 3
        %v4327 = vand.u32 %v4326, 3
        %vm4328 = vcmp.lt.s32.totalorder %v4327, 2
        %vm4329 = vcmp.eq.s32.totalorder %v4327, 0
        %v4330 = vxor.u32 %v4324, 2147483648
        %v4331 = vsel %vm4329, %v4323, %v4330
        %vm4332 = vcmp.eq.s32.totalorder %v4327, 2
        %v4333 = vxor.u32 %v4323, 2147483648
        %v4334 = vsel %vm4332, %v4333, %v4324
        %v4335 = vsel %vm4328, %v4331, %v4334
        %v4336 = vsel %vm4325, nan, %v4335
        %v4337 = vand.u32 2147483647, %v4061
        %vm4338 = vcmp.le.f32.partialorder %v4337, 0.7853982
        %vm4339 = vcmp.lt.s32.totalorder %v4061, 0
        %v4340 = vand.u32 %v4061, 2139095040
        %v4341 = vshrl.u32 %v4340, 23
        %v4342 = vsub.s32 %v4341, 127
        %v4343 = vand.u32 2147483647, %v4061
        %v4344 = vand.u32 %v4343, 8388607
        %v4345 = vor.u32 %v4344, 8388608
        %v4346 = vsub.s32 0, %v4345
        %v4347 = vadd.s32 %v4342, 1
        %vm4348 = vcmp.gt.s32.totalorder %v4347, 0
        %v4349 = vsel %vm4348, %v4347, 0
        %v4350 = vshrl.u32 %v4349, 5
        %v4351 = vand.u32 %v4349, 31
        %v4352 = vsub.s32 32, %v4351
        %v4353 = vshrl.u32 683565275, %v4352
        %v4354 = vshll.u32 683565275, %v4351
        %v4355 = vshrl.u32 2475754826, %v4352
        %v4356 = vor.u32 %v4354, %v4355
        %v4357 = vshll.u32 2475754826, %v4351
        %v4358 = vshrl.u32 2131351028, %v4352
        %v4359 = vor.u32 %v4357, %v4358
        %v4360 = vshll.u32 2131351028, %v4351
        %v4361 = vshrl.u32 2102212464, %v4352
        %v4362 = vor.u32 %v4360, %v4361
        %v4363 = vshll.u32 2102212464, %v4351
        %v4364 = vshrl.u32 920167782, %v4352
        %v4365 = vor.u32 %v4363, %v4364
        %v4366 = vshll.u32 920167782, %v4351
        %v4367 = vshrl.u32 1326507024, %v4352
        %v4368 = vor.u32 %v4366, %v4367
        %vm4369 = vcmp.lt.s32.totalorder %v4350, 1
        %vm4370 = vcmp.lt.s32.totalorder %v4350, 2
        %vm4371 = vcmp.lt.s32.totalorder %v4350, 3
        %vm4372 = vcmp.lt.s32.totalorder %v4350, 4
        %v4373 = vsel %vm4369, %v4353, %v4356
        %v4374 = vsel %vm4372, %v4362, 2102212464
        %v4375 = vsel %vm4371, %v4359, %v4374
        %v4376 = vsel %vm4370, %v4373, %v4375
        %v4377 = vsel %vm4369, %v4356, %v4359
        %v4378 = vsel %vm4372, %v4365, 920167782
        %v4379 = vsel %vm4371, %v4362, %v4378
        %v4380 = vsel %vm4370, %v4377, %v4379
        %v4381 = vsel %vm4369, %v4359, %v4362
        %v4382 = vsel %vm4372, %v4368, 1326507024
        %v4383 = vsel %vm4371, %v4365, %v4382
        %v4384 = vsel %vm4370, %v4381, %v4383
        %v4385 = vshll.u32 %v4345, 8
        %v4386 = vmul.u32.u64.compose %v4385, %v4384
        %v4387 = vextract.low.u32 %v4386
        %v4388 = vextract.high.u32 %v4386
        %v4389 = vmul.u32.u64.compose %v4385, %v4380
        %v4390 = vextract.low.u32 %v4389
        %v4391 = vextract.high.u32 %v4389
        %v4392 = vmul.u32 %v4385, %v4376
        %v4393 = vadd.s32 %v4388, %v4390
        %vm4394 = vc.u32 %v4388, %v4390
        %v4395 = vadd.s32 %v4391, 1
        %v4396 = vsel %vm4394, %v4395, %v4391
        %v4397 = vadd.s32 %v4392, %v4396
        %v4398 = vadd.s32 %v4397, 536870912
        %v4399 = vshrl.u32 %v4398, 30
        %v4400 = vshll.u32 %v4399, 30
        %v4401 = vsub.s32 %v4397, %v4400
        %vm4402 = vcmp.lt.s32.totalorder %v4401, 0
        %v4403 = vsub.s32 0, %v4401
        %v4404 = vsel %vm4402, %v4403, %v4401
        %v4405 = vclz %v4404
        %v4406 = vsub.s32 %v4405, 2
        %vm4407 = vcmp.gt.s32.totalorder 0, %v4406
        %v4408 = vsel %vm4407, 0, %v4406
        %v4409 = vsub.s32 32, %v4408
        %v4410 = vshll.u32 %v4401, %v4408
        %v4411 = vshrl.u32 %v4393, %v4409
        %v4412 = vor.u32 %v4410, %v4411
        %v4413 = vsub.s32 4294967266, %v4408
        %v4414 = vadd.s32 %v4413, 127
        %v4415 = vshll.u32 %v4414, 23
        %v4416 = vor.u32 4788187, %v4415
        %v4417 = vand.u32 2147483647, %v4416
        %v4419 = vcvt.s32.f32 %v4412
        %v4420 = vmul.f32 %v4419, %v4417
        %v4421 = vxor.u32 %v4420, 2147483648
        %v4422 = vsel %vm4339, %v4421, %v4420
        %v4423 = vsub.s32 4, %v4399
        %v4424 = vsel %vm4339, %v4423, %v4399
        %v4425 = vsel %vm4338, %v4061, %v4422
        %v4426 = vsel %vm4338, 0, %v4424
        %v4427 = vcosq.f32.pop %v4425
        %v4428 = vsinq.f32.pop %v4425
        %vm4429 = vweird.f32 %v4061
        %v4430 = vadd.s32 %v4426, 3
        %v4431 = vand.u32 %v4430, 3
        %vm4432 = vcmp.lt.s32.totalorder %v4431, 2
        %vm4433 = vcmp.eq.s32.totalorder %v4431, 0
        %v4434 = vxor.u32 %v4428, 2147483648
        %v4435 = vsel %vm4433, %v4427, %v4434
        %vm4436 = vcmp.eq.s32.totalorder %v4431, 2
        %v4437 = vxor.u32 %v4427, 2147483648
        %v4438 = vsel %vm4436, %v4437, %v4428
        %v4439 = vsel %vm4432, %v4435, %v4438
        %v4440 = vsel %vm4429, nan, %v4439
        %v4441 = vand.u32 2147483647, %v4066
        %vm4442 = vcmp.le.f32.partialorder %v4441, 0.7853982
        %vm4443 = vcmp.lt.s32.totalorder %v4066, 0
        %v4444 = vand.u32 %v4066, 2139095040
        %v4445 = vshrl.u32 %v4444, 23
        %v4446 = vsub.s32 %v4445, 127
        %v4447 = vand.u32 2147483647, %v4066
        %v4448 = vand.u32 %v4447, 8388607
        %v4449 = vor.u32 %v4448, 8388608
        %v4450 = vsub.s32 0, %v4449
        %v4451 = vadd.s32 %v4446, 1
        %vm4452 = vcmp.gt.s32.totalorder %v4451, 0
        %v4453 = vsel %vm4452, %v4451, 0
        %v4454 = vshrl.u32 %v4453, 5
        %v4455 = vand.u32 %v4453, 31
        %v4456 = vsub.s32 32, %v4455
        %v4457 = vshrl.u32 683565275, %v4456
        %v4458 = vshll.u32 683565275, %v4455
        %v4459 = vshrl.u32 2475754826, %v4456
        %v4460 = vor.u32 %v4458, %v4459
        %v4461 = vshll.u32 2475754826, %v4455
        %v4462 = vshrl.u32 2131351028, %v4456
        %v4463 = vor.u32 %v4461, %v4462
        %v4464 = vshll.u32 2131351028, %v4455
        %v4465 = vshrl.u32 2102212464, %v4456
        %v4466 = vor.u32 %v4464, %v4465
        %v4467 = vshll.u32 2102212464, %v4455
        %v4468 = vshrl.u32 920167782, %v4456
        %v4469 = vor.u32 %v4467, %v4468
        %v4470 = vshll.u32 920167782, %v4455
        %v4471 = vshrl.u32 1326507024, %v4456
        %v4472 = vor.u32 %v4470, %v4471
        %vm4473 = vcmp.lt.s32.totalorder %v4454, 1
        %vm4474 = vcmp.lt.s32.totalorder %v4454, 2
        %vm4475 = vcmp.lt.s32.totalorder %v4454, 3
        %vm4476 = vcmp.lt.s32.totalorder %v4454, 4
        %v4477 = vsel %vm4473, %v4457, %v4460
        %v4478 = vsel %vm4476, %v4466, 2102212464
        %v4479 = vsel %vm4475, %v4463, %v4478
        %v4480 = vsel %vm4474, %v4477, %v4479
        %v4481 = vsel %vm4473, %v4460, %v4463
        %v4482 = vsel %vm4476, %v4469, 920167782
        %v4483 = vsel %vm4475, %v4466, %v4482
        %v4484 = vsel %vm4474, %v4481, %v4483
        %v4485 = vsel %vm4473, %v4463, %v4466
        %v4486 = vsel %vm4476, %v4472, 1326507024
        %v4487 = vsel %vm4475, %v4469, %v4486
        %v4488 = vsel %vm4474, %v4485, %v4487
        %v4489 = vshll.u32 %v4449, 8
        %v4490 = vmul.u32.u64.compose %v4489, %v4488
        %v4491 = vextract.low.u32 %v4490
        %v4492 = vextract.high.u32 %v4490
        %v4493 = vmul.u32.u64.compose %v4489, %v4484
        %v4494 = vextract.low.u32 %v4493
        %v4495 = vextract.high.u32 %v4493
        %v4496 = vmul.u32 %v4489, %v4480
        %v4497 = vadd.s32 %v4492, %v4494
        %vm4498 = vc.u32 %v4492, %v4494
        %v4499 = vadd.s32 %v4495, 1
        %v4500 = vsel %vm4498, %v4499, %v4495
        %v4501 = vadd.s32 %v4496, %v4500
        %v4502 = vadd.s32 %v4501, 536870912
        %v4503 = vshrl.u32 %v4502, 30
        %v4504 = vshll.u32 %v4503, 30
        %v4505 = vsub.s32 %v4501, %v4504
        %vm4506 = vcmp.lt.s32.totalorder %v4505, 0
        %v4507 = vsub.s32 0, %v4505
        %v4508 = vsel %vm4506, %v4507, %v4505
        %v4509 = vclz %v4508
        %v4510 = vsub.s32 %v4509, 2
        %vm4511 = vcmp.gt.s32.totalorder 0, %v4510
        %v4512 = vsel %vm4511, 0, %v4510
        %v4513 = vsub.s32 32, %v4512
        %v4514 = vshll.u32 %v4505, %v4512
        %v4515 = vshrl.u32 %v4497, %v4513
        %v4516 = vor.u32 %v4514, %v4515
        %v4517 = vsub.s32 4294967266, %v4512
        %v4518 = vadd.s32 %v4517, 127
        %v4519 = vshll.u32 %v4518, 23
        %v4520 = vor.u32 4788187, %v4519
        %v4521 = vand.u32 2147483647, %v4520
        %v4523 = vcvt.s32.f32 %v4516
        %v4524 = vmul.f32 %v4523, %v4521
        %v4525 = vxor.u32 %v4524, 2147483648
        %v4526 = vsel %vm4443, %v4525, %v4524
        %v4527 = vsub.s32 4, %v4503
        %v4528 = vsel %vm4443, %v4527, %v4503
        %v4529 = vsel %vm4442, %v4066, %v4526
        %v4530 = vsel %vm4442, 0, %v4528
        %v4531 = vcosq.f32.pop %v4529
        %v4532 = vsinq.f32.pop %v4529
        %vm4533 = vweird.f32 %v4066
        %v4534 = vadd.s32 %v4530, 3
        %v4535 = vand.u32 %v4534, 3
        %vm4536 = vcmp.lt.s32.totalorder %v4535, 2
        %vm4537 = vcmp.eq.s32.totalorder %v4535, 0
        %v4538 = vxor.u32 %v4532, 2147483648
        %v4539 = vsel %vm4537, %v4531, %v4538
        %vm4540 = vcmp.eq.s32.totalorder %v4535, 2
        %v4541 = vxor.u32 %v4531, 2147483648
        %v4542 = vsel %vm4540, %v4541, %v4532
        %v4543 = vsel %vm4536, %v4539, %v4542
        %v4544 = vsel %vm4533, nan, %v4543
        %v4545 = vand.u32 2147483647, %v4071
        %vm4546 = vcmp.le.f32.partialorder %v4545, 0.7853982
        %vm4547 = vcmp.lt.s32.totalorder %v4071, 0
        %v4548 = vand.u32 %v4071, 2139095040
        %v4549 = vshrl.u32 %v4548, 23
        %v4550 = vsub.s32 %v4549, 127
        %v4551 = vand.u32 2147483647, %v4071
        %v4552 = vand.u32 %v4551, 8388607
        %v4553 = vor.u32 %v4552, 8388608
        %v4554 = vsub.s32 0, %v4553
        %v4555 = vadd.s32 %v4550, 1
        %vm4556 = vcmp.gt.s32.totalorder %v4555, 0
        %v4557 = vsel %vm4556, %v4555, 0
        %v4558 = vshrl.u32 %v4557, 5
        %v4559 = vand.u32 %v4557, 31
        %v4560 = vsub.s32 32, %v4559
        %v4561 = vshrl.u32 683565275, %v4560
        %v4562 = vshll.u32 683565275, %v4559
        %v4563 = vshrl.u32 2475754826, %v4560
        %v4564 = vor.u32 %v4562, %v4563
        %v4565 = vshll.u32 2475754826, %v4559
        %v4566 = vshrl.u32 2131351028, %v4560
        %v4567 = vor.u32 %v4565, %v4566
        %v4568 = vshll.u32 2131351028, %v4559
        %v4569 = vshrl.u32 2102212464, %v4560
        %v4570 = vor.u32 %v4568, %v4569
        %v4571 = vshll.u32 2102212464, %v4559
        %v4572 = vshrl.u32 920167782, %v4560
        %v4573 = vor.u32 %v4571, %v4572
        %v4574 = vshll.u32 920167782, %v4559
        %v4575 = vshrl.u32 1326507024, %v4560
        %v4576 = vor.u32 %v4574, %v4575
        %vm4577 = vcmp.lt.s32.totalorder %v4558, 1
        %vm4578 = vcmp.lt.s32.totalorder %v4558, 2
        %vm4579 = vcmp.lt.s32.totalorder %v4558, 3
        %vm4580 = vcmp.lt.s32.totalorder %v4558, 4
        %v4581 = vsel %vm4577, %v4561, %v4564
        %v4582 = vsel %vm4580, %v4570, 2102212464
        %v4583 = vsel %vm4579, %v4567, %v4582
        %v4584 = vsel %vm4578, %v4581, %v4583
        %v4585 = vsel %vm4577, %v4564, %v4567
        %v4586 = vsel %vm4580, %v4573, 920167782
        %v4587 = vsel %vm4579, %v4570, %v4586
        %v4588 = vsel %vm4578, %v4585, %v4587
        %v4589 = vsel %vm4577, %v4567, %v4570
        %v4590 = vsel %vm4580, %v4576, 1326507024
        %v4591 = vsel %vm4579, %v4573, %v4590
        %v4592 = vsel %vm4578, %v4589, %v4591
        %v4593 = vshll.u32 %v4553, 8
        %v4594 = vmul.u32.u64.compose %v4593, %v4592
        %v4595 = vextract.low.u32 %v4594
        %v4596 = vextract.high.u32 %v4594
        %v4597 = vmul.u32.u64.compose %v4593, %v4588
        %v4598 = vextract.low.u32 %v4597
        %v4599 = vextract.high.u32 %v4597
        %v4600 = vmul.u32 %v4593, %v4584
        %v4601 = vadd.s32 %v4596, %v4598
        %vm4602 = vc.u32 %v4596, %v4598
        %v4603 = vadd.s32 %v4599, 1
        %v4604 = vsel %vm4602, %v4603, %v4599
        %v4605 = vadd.s32 %v4600, %v4604
        %v4606 = vadd.s32 %v4605, 536870912
        %v4607 = vshrl.u32 %v4606, 30
        %v4608 = vshll.u32 %v4607, 30
        %v4609 = vsub.s32 %v4605, %v4608
        %vm4610 = vcmp.lt.s32.totalorder %v4609, 0
        %v4611 = vsub.s32 0, %v4609
        %v4612 = vsel %vm4610, %v4611, %v4609
        %v4613 = vclz %v4612
        %v4614 = vsub.s32 %v4613, 2
        %vm4615 = vcmp.gt.s32.totalorder 0, %v4614
        %v4616 = vsel %vm4615, 0, %v4614
        %v4617 = vsub.s32 32, %v4616
        %v4618 = vshll.u32 %v4609, %v4616
        %v4619 = vshrl.u32 %v4601, %v4617
        %v4620 = vor.u32 %v4618, %v4619
        %v4621 = vsub.s32 4294967266, %v4616
        %v4622 = vadd.s32 %v4621, 127
        %v4623 = vshll.u32 %v4622, 23
        %v4624 = vor.u32 4788187, %v4623
        %v4625 = vand.u32 2147483647, %v4624
        %v4627 = vcvt.s32.f32 %v4620
        %v4628 = vmul.f32 %v4627, %v4625
        %v4629 = vxor.u32 %v4628, 2147483648
        %v4630 = vsel %vm4547, %v4629, %v4628
        %v4631 = vsub.s32 4, %v4607
        %v4632 = vsel %vm4547, %v4631, %v4607
        %v4633 = vsel %vm4546, %v4071, %v4630
        %v4634 = vsel %vm4546, 0, %v4632
        %v4635 = vcosq.f32.pop %v4633
        %v4636 = vsinq.f32.pop %v4633
        %vm4637 = vweird.f32 %v4071
        %v4638 = vadd.s32 %v4634, 3
        %v4639 = vand.u32 %v4638, 3
        %vm4640 = vcmp.lt.s32.totalorder %v4639, 2
        %vm4641 = vcmp.eq.s32.totalorder %v4639, 0
        %v4642 = vxor.u32 %v4636, 2147483648
        %v4643 = vsel %vm4641, %v4635, %v4642
        %vm4644 = vcmp.eq.s32.totalorder %v4639, 2
        %v4645 = vxor.u32 %v4635, 2147483648
        %v4646 = vsel %vm4644, %v4645, %v4636
        %v4647 = vsel %vm4640, %v4643, %v4646
        %v4648 = vsel %vm4637, nan, %v4647
        %v4649 = vand.u32 2147483647, %v4076
        %vm4650 = vcmp.le.f32.partialorder %v4649, 0.7853982
        %vm4651 = vcmp.lt.s32.totalorder %v4076, 0
        %v4652 = vand.u32 %v4076, 2139095040
        %v4653 = vshrl.u32 %v4652, 23
        %v4654 = vsub.s32 %v4653, 127
        %v4655 = vand.u32 2147483647, %v4076
        %v4656 = vand.u32 %v4655, 8388607
        %v4657 = vor.u32 %v4656, 8388608
        %v4658 = vsub.s32 0, %v4657
        %v4659 = vadd.s32 %v4654, 1
        %vm4660 = vcmp.gt.s32.totalorder %v4659, 0
        %v4661 = vsel %vm4660, %v4659, 0
        %v4662 = vshrl.u32 %v4661, 5
        %v4663 = vand.u32 %v4661, 31
        %v4664 = vsub.s32 32, %v4663
        %v4665 = vshrl.u32 683565275, %v4664
        %v4666 = vshll.u32 683565275, %v4663
        %v4667 = vshrl.u32 2475754826, %v4664
        %v4668 = vor.u32 %v4666, %v4667
        %v4669 = vshll.u32 2475754826, %v4663
        %v4670 = vshrl.u32 2131351028, %v4664
        %v4671 = vor.u32 %v4669, %v4670
        %v4672 = vshll.u32 2131351028, %v4663
        %v4673 = vshrl.u32 2102212464, %v4664
        %v4674 = vor.u32 %v4672, %v4673
        %v4675 = vshll.u32 2102212464, %v4663
        %v4676 = vshrl.u32 920167782, %v4664
        %v4677 = vor.u32 %v4675, %v4676
        %v4678 = vshll.u32 920167782, %v4663
        %v4679 = vshrl.u32 1326507024, %v4664
        %v4680 = vor.u32 %v4678, %v4679
        %vm4681 = vcmp.lt.s32.totalorder %v4662, 1
        %vm4682 = vcmp.lt.s32.totalorder %v4662, 2
        %vm4683 = vcmp.lt.s32.totalorder %v4662, 3
        %vm4684 = vcmp.lt.s32.totalorder %v4662, 4
        %v4685 = vsel %vm4681, %v4665, %v4668
        %v4686 = vsel %vm4684, %v4674, 2102212464
        %v4687 = vsel %vm4683, %v4671, %v4686
        %v4688 = vsel %vm4682, %v4685, %v4687
        %v4689 = vsel %vm4681, %v4668, %v4671
        %v4690 = vsel %vm4684, %v4677, 920167782
        %v4691 = vsel %vm4683, %v4674, %v4690
        %v4692 = vsel %vm4682, %v4689, %v4691
        %v4693 = vsel %vm4681, %v4671, %v4674
        %v4694 = vsel %vm4684, %v4680, 1326507024
        %v4695 = vsel %vm4683, %v4677, %v4694
        %v4696 = vsel %vm4682, %v4693, %v4695
        %v4697 = vshll.u32 %v4657, 8
        %v4698 = vmul.u32.u64.compose %v4697, %v4696
        %v4699 = vextract.low.u32 %v4698
        %v4700 = vextract.high.u32 %v4698
        %v4701 = vmul.u32.u64.compose %v4697, %v4692
        %v4702 = vextract.low.u32 %v4701
        %v4703 = vextract.high.u32 %v4701
        %v4704 = vmul.u32 %v4697, %v4688
        %v4705 = vadd.s32 %v4700, %v4702
        %vm4706 = vc.u32 %v4700, %v4702
        %v4707 = vadd.s32 %v4703, 1
        %v4708 = vsel %vm4706, %v4707, %v4703
        %v4709 = vadd.s32 %v4704, %v4708
        %v4710 = vadd.s32 %v4709, 536870912
        %v4711 = vshrl.u32 %v4710, 30
        %v4712 = vshll.u32 %v4711, 30
        %v4713 = vsub.s32 %v4709, %v4712
        %vm4714 = vcmp.lt.s32.totalorder %v4713, 0
        %v4715 = vsub.s32 0, %v4713
        %v4716 = vsel %vm4714, %v4715, %v4713
        %v4717 = vclz %v4716
        %v4718 = vsub.s32 %v4717, 2
        %vm4719 = vcmp.gt.s32.totalorder 0, %v4718
        %v4720 = vsel %vm4719, 0, %v4718
        %v4721 = vsub.s32 32, %v4720
        %v4722 = vshll.u32 %v4713, %v4720
        %v4723 = vshrl.u32 %v4705, %v4721
        %v4724 = vor.u32 %v4722, %v4723
        %v4725 = vsub.s32 4294967266, %v4720
        %v4726 = vadd.s32 %v4725, 127
        %v4727 = vshll.u32 %v4726, 23
        %v4728 = vor.u32 4788187, %v4727
        %v4729 = vand.u32 2147483647, %v4728
        %v4731 = vcvt.s32.f32 %v4724
        %v4732 = vmul.f32 %v4731, %v4729
        %v4733 = vxor.u32 %v4732, 2147483648
        %v4734 = vsel %vm4651, %v4733, %v4732
        %v4735 = vsub.s32 4, %v4711
        %v4736 = vsel %vm4651, %v4735, %v4711
        %v4737 = vsel %vm4650, %v4076, %v4734
        %v4738 = vsel %vm4650, 0, %v4736
        %v4739 = vcosq.f32.pop %v4737
        %v4740 = vsinq.f32.pop %v4737
        %vm4741 = vweird.f32 %v4076
        %v4742 = vadd.s32 %v4738, 3
        %v4743 = vand.u32 %v4742, 3
        %vm4744 = vcmp.lt.s32.totalorder %v4743, 2
        %vm4745 = vcmp.eq.s32.totalorder %v4743, 0
        %v4746 = vxor.u32 %v4740, 2147483648
        %v4747 = vsel %vm4745, %v4739, %v4746
        %vm4748 = vcmp.eq.s32.totalorder %v4743, 2
        %v4749 = vxor.u32 %v4739, 2147483648
        %v4750 = vsel %vm4748, %v4749, %v4740
        %v4751 = vsel %vm4744, %v4747, %v4750
        %v4752 = vsel %vm4741, nan, %v4751
        %v4753 = vand.u32 2147483647, %v4081
        %vm4754 = vcmp.le.f32.partialorder %v4753, 0.7853982
        %vm4755 = vcmp.lt.s32.totalorder %v4081, 0
        %v4756 = vand.u32 %v4081, 2139095040
        %v4757 = vshrl.u32 %v4756, 23
        %v4758 = vsub.s32 %v4757, 127
        %v4759 = vand.u32 2147483647, %v4081
        %v4760 = vand.u32 %v4759, 8388607
        %v4761 = vor.u32 %v4760, 8388608
        %v4762 = vsub.s32 0, %v4761
        %v4763 = vadd.s32 %v4758, 1
        %vm4764 = vcmp.gt.s32.totalorder %v4763, 0
        %v4765 = vsel %vm4764, %v4763, 0
        %v4766 = vshrl.u32 %v4765, 5
        %v4767 = vand.u32 %v4765, 31
        %v4768 = vsub.s32 32, %v4767
        %v4769 = vshrl.u32 683565275, %v4768
        %v4770 = vshll.u32 683565275, %v4767
        %v4771 = vshrl.u32 2475754826, %v4768
        %v4772 = vor.u32 %v4770, %v4771
        %v4773 = vshll.u32 2475754826, %v4767
        %v4774 = vshrl.u32 2131351028, %v4768
        %v4775 = vor.u32 %v4773, %v4774
        %v4776 = vshll.u32 2131351028, %v4767
        %v4777 = vshrl.u32 2102212464, %v4768
        %v4778 = vor.u32 %v4776, %v4777
        %v4779 = vshll.u32 2102212464, %v4767
        %v4780 = vshrl.u32 920167782, %v4768
        %v4781 = vor.u32 %v4779, %v4780
        %v4782 = vshll.u32 920167782, %v4767
        %v4783 = vshrl.u32 1326507024, %v4768
        %v4784 = vor.u32 %v4782, %v4783
        %vm4785 = vcmp.lt.s32.totalorder %v4766, 1
        %vm4786 = vcmp.lt.s32.totalorder %v4766, 2
        %vm4787 = vcmp.lt.s32.totalorder %v4766, 3
        %vm4788 = vcmp.lt.s32.totalorder %v4766, 4
        %v4789 = vsel %vm4785, %v4769, %v4772
        %v4790 = vsel %vm4788, %v4778, 2102212464
        %v4791 = vsel %vm4787, %v4775, %v4790
        %v4792 = vsel %vm4786, %v4789, %v4791
        %v4793 = vsel %vm4785, %v4772, %v4775
        %v4794 = vsel %vm4788, %v4781, 920167782
        %v4795 = vsel %vm4787, %v4778, %v4794
        %v4796 = vsel %vm4786, %v4793, %v4795
        %v4797 = vsel %vm4785, %v4775, %v4778
        %v4798 = vsel %vm4788, %v4784, 1326507024
        %v4799 = vsel %vm4787, %v4781, %v4798
        %v4800 = vsel %vm4786, %v4797, %v4799
        %v4801 = vshll.u32 %v4761, 8
        %v4802 = vmul.u32.u64.compose %v4801, %v4800
        %v4803 = vextract.low.u32 %v4802
        %v4804 = vextract.high.u32 %v4802
        %v4805 = vmul.u32.u64.compose %v4801, %v4796
        %v4806 = vextract.low.u32 %v4805
        %v4807 = vextract.high.u32 %v4805
        %v4808 = vmul.u32 %v4801, %v4792
        %v4809 = vadd.s32 %v4804, %v4806
        %vm4810 = vc.u32 %v4804, %v4806
        %v4811 = vadd.s32 %v4807, 1
        %v4812 = vsel %vm4810, %v4811, %v4807
        %v4813 = vadd.s32 %v4808, %v4812
        %v4814 = vadd.s32 %v4813, 536870912
        %v4815 = vshrl.u32 %v4814, 30
        %v4816 = vshll.u32 %v4815, 30
        %v4817 = vsub.s32 %v4813, %v4816
        %vm4818 = vcmp.lt.s32.totalorder %v4817, 0
        %v4819 = vsub.s32 0, %v4817
        %v4820 = vsel %vm4818, %v4819, %v4817
        %v4821 = vclz %v4820
        %v4822 = vsub.s32 %v4821, 2
        %vm4823 = vcmp.gt.s32.totalorder 0, %v4822
        %v4824 = vsel %vm4823, 0, %v4822
        %v4825 = vsub.s32 32, %v4824
        %v4826 = vshll.u32 %v4817, %v4824
        %v4827 = vshrl.u32 %v4809, %v4825
        %v4828 = vor.u32 %v4826, %v4827
        %v4829 = vsub.s32 4294967266, %v4824
        %v4830 = vadd.s32 %v4829, 127
        %v4831 = vshll.u32 %v4830, 23
        %v4832 = vor.u32 4788187, %v4831
        %v4833 = vand.u32 2147483647, %v4832
        %v4835 = vcvt.s32.f32 %v4828
        %v4836 = vmul.f32 %v4835, %v4833
        %v4837 = vxor.u32 %v4836, 2147483648
        %v4838 = vsel %vm4755, %v4837, %v4836
        %v4839 = vsub.s32 4, %v4815
        %v4840 = vsel %vm4755, %v4839, %v4815
        %v4841 = vsel %vm4754, %v4081, %v4838
        %v4842 = vsel %vm4754, 0, %v4840
        %v4843 = vcosq.f32.pop %v4841
        %v4844 = vsinq.f32.pop %v4841
        %vm4845 = vweird.f32 %v4081
        %v4846 = vadd.s32 %v4842, 3
        %v4847 = vand.u32 %v4846, 3
        %vm4848 = vcmp.lt.s32.totalorder %v4847, 2
        %vm4849 = vcmp.eq.s32.totalorder %v4847, 0
        %v4850 = vxor.u32 %v4844, 2147483648
        %v4851 = vsel %vm4849, %v4843, %v4850
        %vm4852 = vcmp.eq.s32.totalorder %v4847, 2
        %v4853 = vxor.u32 %v4843, 2147483648
        %v4854 = vsel %vm4852, %v4853, %v4844
        %v4855 = vsel %vm4848, %v4851, %v4854
        %v4856 = vsel %vm4845, nan, %v4855
        %v4857 = vand.u32 2147483647, %v4086
        %vm4858 = vcmp.le.f32.partialorder %v4857, 0.7853982
        %vm4859 = vcmp.lt.s32.totalorder %v4086, 0
        %v4860 = vand.u32 %v4086, 2139095040
        %v4861 = vshrl.u32 %v4860, 23
        %v4862 = vsub.s32 %v4861, 127
        %v4863 = vand.u32 2147483647, %v4086
        %v4864 = vand.u32 %v4863, 8388607
        %v4865 = vor.u32 %v4864, 8388608
        %v4866 = vsub.s32 0, %v4865
        %v4867 = vadd.s32 %v4862, 1
        %vm4868 = vcmp.gt.s32.totalorder %v4867, 0
        %v4869 = vsel %vm4868, %v4867, 0
        %v4870 = vshrl.u32 %v4869, 5
        %v4871 = vand.u32 %v4869, 31
        %v4872 = vsub.s32 32, %v4871
        %v4873 = vshrl.u32 683565275, %v4872
        %v4874 = vshll.u32 683565275, %v4871
        %v4875 = vshrl.u32 2475754826, %v4872
        %v4876 = vor.u32 %v4874, %v4875
        %v4877 = vshll.u32 2475754826, %v4871
        %v4878 = vshrl.u32 2131351028, %v4872
        %v4879 = vor.u32 %v4877, %v4878
        %v4880 = vshll.u32 2131351028, %v4871
        %v4881 = vshrl.u32 2102212464, %v4872
        %v4882 = vor.u32 %v4880, %v4881
        %v4883 = vshll.u32 2102212464, %v4871
        %v4884 = vshrl.u32 920167782, %v4872
        %v4885 = vor.u32 %v4883, %v4884
        %v4886 = vshll.u32 920167782, %v4871
        %v4887 = vshrl.u32 1326507024, %v4872
        %v4888 = vor.u32 %v4886, %v4887
        %vm4889 = vcmp.lt.s32.totalorder %v4870, 1
        %vm4890 = vcmp.lt.s32.totalorder %v4870, 2
        %vm4891 = vcmp.lt.s32.totalorder %v4870, 3
        %vm4892 = vcmp.lt.s32.totalorder %v4870, 4
        %v4893 = vsel %vm4889, %v4873, %v4876
        %v4894 = vsel %vm4892, %v4882, 2102212464
        %v4895 = vsel %vm4891, %v4879, %v4894
        %v4896 = vsel %vm4890, %v4893, %v4895
        %v4897 = vsel %vm4889, %v4876, %v4879
        %v4898 = vsel %vm4892, %v4885, 920167782
        %v4899 = vsel %vm4891, %v4882, %v4898
        %v4900 = vsel %vm4890, %v4897, %v4899
        %v4901 = vsel %vm4889, %v4879, %v4882
        %v4902 = vsel %vm4892, %v4888, 1326507024
        %v4903 = vsel %vm4891, %v4885, %v4902
        %v4904 = vsel %vm4890, %v4901, %v4903
        %v4905 = vshll.u32 %v4865, 8
        %v4906 = vmul.u32.u64.compose %v4905, %v4904
        %v4907 = vextract.low.u32 %v4906
        %v4908 = vextract.high.u32 %v4906
        %v4909 = vmul.u32.u64.compose %v4905, %v4900
        %v4910 = vextract.low.u32 %v4909
        %v4911 = vextract.high.u32 %v4909
        %v4912 = vmul.u32 %v4905, %v4896
        %v4913 = vadd.s32 %v4908, %v4910
        %vm4914 = vc.u32 %v4908, %v4910
        %v4915 = vadd.s32 %v4911, 1
        %v4916 = vsel %vm4914, %v4915, %v4911
        %v4917 = vadd.s32 %v4912, %v4916
        %v4918 = vadd.s32 %v4917, 536870912
        %v4919 = vshrl.u32 %v4918, 30
        %v4920 = vshll.u32 %v4919, 30
        %v4921 = vsub.s32 %v4917, %v4920
        %vm4922 = vcmp.lt.s32.totalorder %v4921, 0
        %v4923 = vsub.s32 0, %v4921
        %v4924 = vsel %vm4922, %v4923, %v4921
        %v4925 = vclz %v4924
        %v4926 = vsub.s32 %v4925, 2
        %vm4927 = vcmp.gt.s32.totalorder 0, %v4926
        %v4928 = vsel %vm4927, 0, %v4926
        %v4929 = vsub.s32 32, %v4928
        %v4930 = vshll.u32 %v4921, %v4928
        %v4931 = vshrl.u32 %v4913, %v4929
        %v4932 = vor.u32 %v4930, %v4931
        %v4933 = vsub.s32 4294967266, %v4928
        %v4934 = vadd.s32 %v4933, 127
        %v4935 = vshll.u32 %v4934, 23
        %v4936 = vor.u32 4788187, %v4935
        %v4937 = vand.u32 2147483647, %v4936
        %v4939 = vcvt.s32.f32 %v4932
        %v4940 = vmul.f32 %v4939, %v4937
        %v4941 = vxor.u32 %v4940, 2147483648
        %v4942 = vsel %vm4859, %v4941, %v4940
        %v4943 = vsub.s32 4, %v4919
        %v4944 = vsel %vm4859, %v4943, %v4919
        %v4945 = vsel %vm4858, %v4086, %v4942
        %v4946 = vsel %vm4858, 0, %v4944
        %v4947 = vcosq.f32.pop %v4945
        %v4948 = vsinq.f32.pop %v4945
        %vm4949 = vweird.f32 %v4086
        %v4950 = vadd.s32 %v4946, 3
        %v4951 = vand.u32 %v4950, 3
        %vm4952 = vcmp.lt.s32.totalorder %v4951, 2
        %vm4953 = vcmp.eq.s32.totalorder %v4951, 0
        %v4954 = vxor.u32 %v4948, 2147483648
        %v4955 = vsel %vm4953, %v4947, %v4954
        %vm4956 = vcmp.eq.s32.totalorder %v4951, 2
        %v4957 = vxor.u32 %v4947, 2147483648
        %v4958 = vsel %vm4956, %v4957, %v4948
        %v4959 = vsel %vm4952, %v4955, %v4958
        %v4960 = vsel %vm4949, nan, %v4959
        %v4961 = vand.u32 2147483647, %v4091
        %vm4962 = vcmp.le.f32.partialorder %v4961, 0.7853982
        %vm4963 = vcmp.lt.s32.totalorder %v4091, 0
        %v4964 = vand.u32 %v4091, 2139095040
        %v4965 = vshrl.u32 %v4964, 23
        %v4966 = vsub.s32 %v4965, 127
        %v4967 = vand.u32 2147483647, %v4091
        %v4968 = vand.u32 %v4967, 8388607
        %v4969 = vor.u32 %v4968, 8388608
        %v4970 = vsub.s32 0, %v4969
        %v4971 = vadd.s32 %v4966, 1
        %vm4972 = vcmp.gt.s32.totalorder %v4971, 0
        %v4973 = vsel %vm4972, %v4971, 0
        %v4974 = vshrl.u32 %v4973, 5
        %v4975 = vand.u32 %v4973, 31
        %v4976 = vsub.s32 32, %v4975
        %v4977 = vshrl.u32 683565275, %v4976
        %v4978 = vshll.u32 683565275, %v4975
        %v4979 = vshrl.u32 2475754826, %v4976
        %v4980 = vor.u32 %v4978, %v4979
        %v4981 = vshll.u32 2475754826, %v4975
        %v4982 = vshrl.u32 2131351028, %v4976
        %v4983 = vor.u32 %v4981, %v4982
        %v4984 = vshll.u32 2131351028, %v4975
        %v4985 = vshrl.u32 2102212464, %v4976
        %v4986 = vor.u32 %v4984, %v4985
        %v4987 = vshll.u32 2102212464, %v4975
        %v4988 = vshrl.u32 920167782, %v4976
        %v4989 = vor.u32 %v4987, %v4988
        %v4990 = vshll.u32 920167782, %v4975
        %v4991 = vshrl.u32 1326507024, %v4976
        %v4992 = vor.u32 %v4990, %v4991
        %vm4993 = vcmp.lt.s32.totalorder %v4974, 1
        %vm4994 = vcmp.lt.s32.totalorder %v4974, 2
        %vm4995 = vcmp.lt.s32.totalorder %v4974, 3
        %vm4996 = vcmp.lt.s32.totalorder %v4974, 4
        %v4997 = vsel %vm4993, %v4977, %v4980
        %v4998 = vsel %vm4996, %v4986, 2102212464
        %v4999 = vsel %vm4995, %v4983, %v4998
        %v5000 = vsel %vm4994, %v4997, %v4999
        %v5001 = vsel %vm4993, %v4980, %v4983
        %v5002 = vsel %vm4996, %v4989, 920167782
        %v5003 = vsel %vm4995, %v4986, %v5002
        %v5004 = vsel %vm4994, %v5001, %v5003
        %v5005 = vsel %vm4993, %v4983, %v4986
        %v5006 = vsel %vm4996, %v4992, 1326507024
        %v5007 = vsel %vm4995, %v4989, %v5006
        %v5008 = vsel %vm4994, %v5005, %v5007
        %v5009 = vshll.u32 %v4969, 8
        %v5010 = vmul.u32.u64.compose %v5009, %v5008
        %v5011 = vextract.low.u32 %v5010
        %v5012 = vextract.high.u32 %v5010
        %v5013 = vmul.u32.u64.compose %v5009, %v5004
        %v5014 = vextract.low.u32 %v5013
        %v5015 = vextract.high.u32 %v5013
        %v5016 = vmul.u32 %v5009, %v5000
        %v5017 = vadd.s32 %v5012, %v5014
        %vm5018 = vc.u32 %v5012, %v5014
        %v5019 = vadd.s32 %v5015, 1
        %v5020 = vsel %vm5018, %v5019, %v5015
        %v5021 = vadd.s32 %v5016, %v5020
        %v5022 = vadd.s32 %v5021, 536870912
        %v5023 = vshrl.u32 %v5022, 30
        %v5024 = vshll.u32 %v5023, 30
        %v5025 = vsub.s32 %v5021, %v5024
        %vm5026 = vcmp.lt.s32.totalorder %v5025, 0
        %v5027 = vsub.s32 0, %v5025
        %v5028 = vsel %vm5026, %v5027, %v5025
        %v5029 = vclz %v5028
        %v5030 = vsub.s32 %v5029, 2
        %vm5031 = vcmp.gt.s32.totalorder 0, %v5030
        %v5032 = vsel %vm5031, 0, %v5030
        %v5033 = vsub.s32 32, %v5032
        %v5034 = vshll.u32 %v5025, %v5032
        %v5035 = vshrl.u32 %v5017, %v5033
        %v5036 = vor.u32 %v5034, %v5035
        %v5037 = vsub.s32 4294967266, %v5032
        %v5038 = vadd.s32 %v5037, 127
        %v5039 = vshll.u32 %v5038, 23
        %v5040 = vor.u32 4788187, %v5039
        %v5041 = vand.u32 2147483647, %v5040
        %v5043 = vcvt.s32.f32 %v5036
        %v5044 = vmul.f32 %v5043, %v5041
        %v5045 = vxor.u32 %v5044, 2147483648
        %v5046 = vsel %vm4963, %v5045, %v5044
        %v5047 = vsub.s32 4, %v5023
        %v5048 = vsel %vm4963, %v5047, %v5023
        %v5049 = vsel %vm4962, %v4091, %v5046
        %v5050 = vsel %vm4962, 0, %v5048
        %v5051 = vcosq.f32.pop %v5049
        %v5052 = vsinq.f32.pop %v5049
        %vm5053 = vweird.f32 %v4091
        %v5054 = vadd.s32 %v5050, 3
        %v5055 = vand.u32 %v5054, 3
        %vm5056 = vcmp.lt.s32.totalorder %v5055, 2
        %vm5057 = vcmp.eq.s32.totalorder %v5055, 0
        %v5058 = vxor.u32 %v5052, 2147483648
        %v5059 = vsel %vm5057, %v5051, %v5058
        %vm5060 = vcmp.eq.s32.totalorder %v5055, 2
        %v5061 = vxor.u32 %v5051, 2147483648
        %v5062 = vsel %vm5060, %v5061, %v5052
        %v5063 = vsel %vm5056, %v5059, %v5062
        %v5064 = vsel %vm5053, nan, %v5063
        %v5065 = vand.u32 2147483647, %v4096
        %vm5066 = vcmp.le.f32.partialorder %v5065, 0.7853982
        %vm5067 = vcmp.lt.s32.totalorder %v4096, 0
        %v5068 = vand.u32 %v4096, 2139095040
        %v5069 = vshrl.u32 %v5068, 23
        %v5070 = vsub.s32 %v5069, 127
        %v5071 = vand.u32 2147483647, %v4096
        %v5072 = vand.u32 %v5071, 8388607
        %v5073 = vor.u32 %v5072, 8388608
        %v5074 = vsub.s32 0, %v5073
        %v5075 = vadd.s32 %v5070, 1
        %vm5076 = vcmp.gt.s32.totalorder %v5075, 0
        %v5077 = vsel %vm5076, %v5075, 0
        %v5078 = vshrl.u32 %v5077, 5
        %v5079 = vand.u32 %v5077, 31
        %v5080 = vsub.s32 32, %v5079
        %v5081 = vshrl.u32 683565275, %v5080
        %v5082 = vshll.u32 683565275, %v5079
        %v5083 = vshrl.u32 2475754826, %v5080
        %v5084 = vor.u32 %v5082, %v5083
        %v5085 = vshll.u32 2475754826, %v5079
        %v5086 = vshrl.u32 2131351028, %v5080
        %v5087 = vor.u32 %v5085, %v5086
        %v5088 = vshll.u32 2131351028, %v5079
        %v5089 = vshrl.u32 2102212464, %v5080
        %v5090 = vor.u32 %v5088, %v5089
        %v5091 = vshll.u32 2102212464, %v5079
        %v5092 = vshrl.u32 920167782, %v5080
        %v5093 = vor.u32 %v5091, %v5092
        %v5094 = vshll.u32 920167782, %v5079
        %v5095 = vshrl.u32 1326507024, %v5080
        %v5096 = vor.u32 %v5094, %v5095
        %vm5097 = vcmp.lt.s32.totalorder %v5078, 1
        %vm5098 = vcmp.lt.s32.totalorder %v5078, 2
        %vm5099 = vcmp.lt.s32.totalorder %v5078, 3
        %vm5100 = vcmp.lt.s32.totalorder %v5078, 4
        %v5101 = vsel %vm5097, %v5081, %v5084
        %v5102 = vsel %vm5100, %v5090, 2102212464
        %v5103 = vsel %vm5099, %v5087, %v5102
        %v5104 = vsel %vm5098, %v5101, %v5103
        %v5105 = vsel %vm5097, %v5084, %v5087
        %v5106 = vsel %vm5100, %v5093, 920167782
        %v5107 = vsel %vm5099, %v5090, %v5106
        %v5108 = vsel %vm5098, %v5105, %v5107
        %v5109 = vsel %vm5097, %v5087, %v5090
        %v5110 = vsel %vm5100, %v5096, 1326507024
        %v5111 = vsel %vm5099, %v5093, %v5110
        %v5112 = vsel %vm5098, %v5109, %v5111
        %v5113 = vshll.u32 %v5073, 8
        %v5114 = vmul.u32.u64.compose %v5113, %v5112
        %v5115 = vextract.low.u32 %v5114
        %v5116 = vextract.high.u32 %v5114
        %v5117 = vmul.u32.u64.compose %v5113, %v5108
        %v5118 = vextract.low.u32 %v5117
        %v5119 = vextract.high.u32 %v5117
        %v5120 = vmul.u32 %v5113, %v5104
        %v5121 = vadd.s32 %v5116, %v5118
        %vm5122 = vc.u32 %v5116, %v5118
        %v5123 = vadd.s32 %v5119, 1
        %v5124 = vsel %vm5122, %v5123, %v5119
        %v5125 = vadd.s32 %v5120, %v5124
        %v5126 = vadd.s32 %v5125, 536870912
        %v5127 = vshrl.u32 %v5126, 30
        %v5128 = vshll.u32 %v5127, 30
        %v5129 = vsub.s32 %v5125, %v5128
        %vm5130 = vcmp.lt.s32.totalorder %v5129, 0
        %v5131 = vsub.s32 0, %v5129
        %v5132 = vsel %vm5130, %v5131, %v5129
        %v5133 = vclz %v5132
        %v5134 = vsub.s32 %v5133, 2
        %vm5135 = vcmp.gt.s32.totalorder 0, %v5134
        %v5136 = vsel %vm5135, 0, %v5134
        %v5137 = vsub.s32 32, %v5136
        %v5138 = vshll.u32 %v5129, %v5136
        %v5139 = vshrl.u32 %v5121, %v5137
        %v5140 = vor.u32 %v5138, %v5139
        %v5141 = vsub.s32 4294967266, %v5136
        %v5142 = vadd.s32 %v5141, 127
        %v5143 = vshll.u32 %v5142, 23
        %v5144 = vor.u32 4788187, %v5143
        %v5145 = vand.u32 2147483647, %v5144
        %v5147 = vcvt.s32.f32 %v5140
        %v5148 = vmul.f32 %v5147, %v5145
        %v5149 = vxor.u32 %v5148, 2147483648
        %v5150 = vsel %vm5067, %v5149, %v5148
        %v5151 = vsub.s32 4, %v5127
        %v5152 = vsel %vm5067, %v5151, %v5127
        %v5153 = vsel %vm5066, %v4096, %v5150
        %v5154 = vsel %vm5066, 0, %v5152
        %v5155 = vcosq.f32.pop %v5153
        %v5156 = vsinq.f32.pop %v5153
        %vm5157 = vweird.f32 %v4096
        %v5158 = vadd.s32 %v5154, 3
        %v5159 = vand.u32 %v5158, 3
        %vm5160 = vcmp.lt.s32.totalorder %v5159, 2
        %vm5161 = vcmp.eq.s32.totalorder %v5159, 0
        %v5162 = vxor.u32 %v5156, 2147483648
        %v5163 = vsel %vm5161, %v5155, %v5162
        %vm5164 = vcmp.eq.s32.totalorder %v5159, 2
        %v5165 = vxor.u32 %v5155, 2147483648
        %v5166 = vsel %vm5164, %v5165, %v5156
        %v5167 = vsel %vm5160, %v5163, %v5166
        %v5168 = vsel %vm5157, nan, %v5167
        %v5169 = vand.u32 2147483647, %v4101
        %vm5170 = vcmp.le.f32.partialorder %v5169, 0.7853982
        %vm5171 = vcmp.lt.s32.totalorder %v4101, 0
        %v5172 = vand.u32 %v4101, 2139095040
        %v5173 = vshrl.u32 %v5172, 23
        %v5174 = vsub.s32 %v5173, 127
        %v5175 = vand.u32 2147483647, %v4101
        %v5176 = vand.u32 %v5175, 8388607
        %v5177 = vor.u32 %v5176, 8388608
        %v5178 = vsub.s32 0, %v5177
        %v5179 = vadd.s32 %v5174, 1
        %vm5180 = vcmp.gt.s32.totalorder %v5179, 0
        %v5181 = vsel %vm5180, %v5179, 0
        %v5182 = vshrl.u32 %v5181, 5
        %v5183 = vand.u32 %v5181, 31
        %v5184 = vsub.s32 32, %v5183
        %v5185 = vshrl.u32 683565275, %v5184
        %v5186 = vshll.u32 683565275, %v5183
        %v5187 = vshrl.u32 2475754826, %v5184
        %v5188 = vor.u32 %v5186, %v5187
        %v5189 = vshll.u32 2475754826, %v5183
        %v5190 = vshrl.u32 2131351028, %v5184
        %v5191 = vor.u32 %v5189, %v5190
        %v5192 = vshll.u32 2131351028, %v5183
        %v5193 = vshrl.u32 2102212464, %v5184
        %v5194 = vor.u32 %v5192, %v5193
        %v5195 = vshll.u32 2102212464, %v5183
        %v5196 = vshrl.u32 920167782, %v5184
        %v5197 = vor.u32 %v5195, %v5196
        %v5198 = vshll.u32 920167782, %v5183
        %v5199 = vshrl.u32 1326507024, %v5184
        %v5200 = vor.u32 %v5198, %v5199
        %vm5201 = vcmp.lt.s32.totalorder %v5182, 1
        %vm5202 = vcmp.lt.s32.totalorder %v5182, 2
        %vm5203 = vcmp.lt.s32.totalorder %v5182, 3
        %vm5204 = vcmp.lt.s32.totalorder %v5182, 4
        %v5205 = vsel %vm5201, %v5185, %v5188
        %v5206 = vsel %vm5204, %v5194, 2102212464
        %v5207 = vsel %vm5203, %v5191, %v5206
        %v5208 = vsel %vm5202, %v5205, %v5207
        %v5209 = vsel %vm5201, %v5188, %v5191
        %v5210 = vsel %vm5204, %v5197, 920167782
        %v5211 = vsel %vm5203, %v5194, %v5210
        %v5212 = vsel %vm5202, %v5209, %v5211
        %v5213 = vsel %vm5201, %v5191, %v5194
        %v5214 = vsel %vm5204, %v5200, 1326507024
        %v5215 = vsel %vm5203, %v5197, %v5214
        %v5216 = vsel %vm5202, %v5213, %v5215
        %v5217 = vshll.u32 %v5177, 8
        %v5218 = vmul.u32.u64.compose %v5217, %v5216
        %v5219 = vextract.low.u32 %v5218
        %v5220 = vextract.high.u32 %v5218
        %v5221 = vmul.u32.u64.compose %v5217, %v5212
        %v5222 = vextract.low.u32 %v5221
        %v5223 = vextract.high.u32 %v5221
        %v5224 = vmul.u32 %v5217, %v5208
        %v5225 = vadd.s32 %v5220, %v5222
        %vm5226 = vc.u32 %v5220, %v5222
        %v5227 = vadd.s32 %v5223, 1
        %v5228 = vsel %vm5226, %v5227, %v5223
        %v5229 = vadd.s32 %v5224, %v5228
        %v5230 = vadd.s32 %v5229, 536870912
        %v5231 = vshrl.u32 %v5230, 30
        %v5232 = vshll.u32 %v5231, 30
        %v5233 = vsub.s32 %v5229, %v5232
        %vm5234 = vcmp.lt.s32.totalorder %v5233, 0
        %v5235 = vsub.s32 0, %v5233
        %v5236 = vsel %vm5234, %v5235, %v5233
        %v5237 = vclz %v5236
        %v5238 = vsub.s32 %v5237, 2
        %vm5239 = vcmp.gt.s32.totalorder 0, %v5238
        %v5240 = vsel %vm5239, 0, %v5238
        %v5241 = vsub.s32 32, %v5240
        %v5242 = vshll.u32 %v5233, %v5240
        %v5243 = vshrl.u32 %v5225, %v5241
        %v5244 = vor.u32 %v5242, %v5243
        %v5245 = vsub.s32 4294967266, %v5240
        %v5246 = vadd.s32 %v5245, 127
        %v5247 = vshll.u32 %v5246, 23
        %v5248 = vor.u32 4788187, %v5247
        %v5249 = vand.u32 2147483647, %v5248
        %v5251 = vcvt.s32.f32 %v5244
        %v5252 = vmul.f32 %v5251, %v5249
        %v5253 = vxor.u32 %v5252, 2147483648
        %v5254 = vsel %vm5171, %v5253, %v5252
        %v5255 = vsub.s32 4, %v5231
        %v5256 = vsel %vm5171, %v5255, %v5231
        %v5257 = vsel %vm5170, %v4101, %v5254
        %v5258 = vsel %vm5170, 0, %v5256
        %v5259 = vcosq.f32.pop %v5257
        %v5260 = vsinq.f32.pop %v5257
        %vm5261 = vweird.f32 %v4101
        %v5262 = vadd.s32 %v5258, 3
        %v5263 = vand.u32 %v5262, 3
        %vm5264 = vcmp.lt.s32.totalorder %v5263, 2
        %vm5265 = vcmp.eq.s32.totalorder %v5263, 0
        %v5266 = vxor.u32 %v5260, 2147483648
        %v5267 = vsel %vm5265, %v5259, %v5266
        %vm5268 = vcmp.eq.s32.totalorder %v5263, 2
        %v5269 = vxor.u32 %v5259, 2147483648
        %v5270 = vsel %vm5268, %v5269, %v5260
        %v5271 = vsel %vm5264, %v5267, %v5270
        %v5272 = vsel %vm5261, nan, %v5271
        %v5273 = vand.u32 2147483647, %v4106
        %vm5274 = vcmp.le.f32.partialorder %v5273, 0.7853982
        %vm5275 = vcmp.lt.s32.totalorder %v4106, 0
        %v5276 = vand.u32 %v4106, 2139095040
        %v5277 = vshrl.u32 %v5276, 23
        %v5278 = vsub.s32 %v5277, 127
        %v5279 = vand.u32 2147483647, %v4106
        %v5280 = vand.u32 %v5279, 8388607
        %v5281 = vor.u32 %v5280, 8388608
        %v5282 = vsub.s32 0, %v5281
        %v5283 = vadd.s32 %v5278, 1
        %vm5284 = vcmp.gt.s32.totalorder %v5283, 0
        %v5285 = vsel %vm5284, %v5283, 0
        %v5286 = vshrl.u32 %v5285, 5
        %v5287 = vand.u32 %v5285, 31
        %v5288 = vsub.s32 32, %v5287
        %v5289 = vshrl.u32 683565275, %v5288
        %v5290 = vshll.u32 683565275, %v5287
        %v5291 = vshrl.u32 2475754826, %v5288
        %v5292 = vor.u32 %v5290, %v5291
        %v5293 = vshll.u32 2475754826, %v5287
        %v5294 = vshrl.u32 2131351028, %v5288
        %v5295 = vor.u32 %v5293, %v5294
        %v5296 = vshll.u32 2131351028, %v5287
        %v5297 = vshrl.u32 2102212464, %v5288
        %v5298 = vor.u32 %v5296, %v5297
        %v5299 = vshll.u32 2102212464, %v5287
        %v5300 = vshrl.u32 920167782, %v5288
        %v5301 = vor.u32 %v5299, %v5300
        %v5302 = vshll.u32 920167782, %v5287
        %v5303 = vshrl.u32 1326507024, %v5288
        %v5304 = vor.u32 %v5302, %v5303
        %vm5305 = vcmp.lt.s32.totalorder %v5286, 1
        %vm5306 = vcmp.lt.s32.totalorder %v5286, 2
        %vm5307 = vcmp.lt.s32.totalorder %v5286, 3
        %vm5308 = vcmp.lt.s32.totalorder %v5286, 4
        %v5309 = vsel %vm5305, %v5289, %v5292
        %v5310 = vsel %vm5308, %v5298, 2102212464
        %v5311 = vsel %vm5307, %v5295, %v5310
        %v5312 = vsel %vm5306, %v5309, %v5311
        %v5313 = vsel %vm5305, %v5292, %v5295
        %v5314 = vsel %vm5308, %v5301, 920167782
        %v5315 = vsel %vm5307, %v5298, %v5314
        %v5316 = vsel %vm5306, %v5313, %v5315
        %v5317 = vsel %vm5305, %v5295, %v5298
        %v5318 = vsel %vm5308, %v5304, 1326507024
        %v5319 = vsel %vm5307, %v5301, %v5318
        %v5320 = vsel %vm5306, %v5317, %v5319
        %v5321 = vshll.u32 %v5281, 8
        %v5322 = vmul.u32.u64.compose %v5321, %v5320
        %v5323 = vextract.low.u32 %v5322
        %v5324 = vextract.high.u32 %v5322
        %v5325 = vmul.u32.u64.compose %v5321, %v5316
        %v5326 = vextract.low.u32 %v5325
        %v5327 = vextract.high.u32 %v5325
        %v5328 = vmul.u32 %v5321, %v5312
        %v5329 = vadd.s32 %v5324, %v5326
        %vm5330 = vc.u32 %v5324, %v5326
        %v5331 = vadd.s32 %v5327, 1
        %v5332 = vsel %vm5330, %v5331, %v5327
        %v5333 = vadd.s32 %v5328, %v5332
        %v5334 = vadd.s32 %v5333, 536870912
        %v5335 = vshrl.u32 %v5334, 30
        %v5336 = vshll.u32 %v5335, 30
        %v5337 = vsub.s32 %v5333, %v5336
        %vm5338 = vcmp.lt.s32.totalorder %v5337, 0
        %v5339 = vsub.s32 0, %v5337
        %v5340 = vsel %vm5338, %v5339, %v5337
        %v5341 = vclz %v5340
        %v5342 = vsub.s32 %v5341, 2
        %vm5343 = vcmp.gt.s32.totalorder 0, %v5342
        %v5344 = vsel %vm5343, 0, %v5342
        %v5345 = vsub.s32 32, %v5344
        %v5346 = vshll.u32 %v5337, %v5344
        %v5347 = vshrl.u32 %v5329, %v5345
        %v5348 = vor.u32 %v5346, %v5347
        %v5349 = vsub.s32 4294967266, %v5344
        %v5350 = vadd.s32 %v5349, 127
        %v5351 = vshll.u32 %v5350, 23
        %v5352 = vor.u32 4788187, %v5351
        %v5353 = vand.u32 2147483647, %v5352
        %v5355 = vcvt.s32.f32 %v5348
        %v5356 = vmul.f32 %v5355, %v5353
        %v5357 = vxor.u32 %v5356, 2147483648
        %v5358 = vsel %vm5275, %v5357, %v5356
        %v5359 = vsub.s32 4, %v5335
        %v5360 = vsel %vm5275, %v5359, %v5335
        %v5361 = vsel %vm5274, %v4106, %v5358
        %v5362 = vsel %vm5274, 0, %v5360
        %v5363 = vcosq.f32.pop %v5361
        %v5364 = vsinq.f32.pop %v5361
        %vm5365 = vweird.f32 %v4106
        %v5366 = vadd.s32 %v5362, 3
        %v5367 = vand.u32 %v5366, 3
        %vm5368 = vcmp.lt.s32.totalorder %v5367, 2
        %vm5369 = vcmp.eq.s32.totalorder %v5367, 0
        %v5370 = vxor.u32 %v5364, 2147483648
        %v5371 = vsel %vm5369, %v5363, %v5370
        %vm5372 = vcmp.eq.s32.totalorder %v5367, 2
        %v5373 = vxor.u32 %v5363, 2147483648
        %v5374 = vsel %vm5372, %v5373, %v5364
        %v5375 = vsel %vm5368, %v5371, %v5374
        %v5376 = vsel %vm5365, nan, %v5375
        %v5377 = vand.u32 2147483647, %v4111
        %vm5378 = vcmp.le.f32.partialorder %v5377, 0.7853982
        %vm5379 = vcmp.lt.s32.totalorder %v4111, 0
        %v5380 = vand.u32 %v4111, 2139095040
        %v5381 = vshrl.u32 %v5380, 23
        %v5382 = vsub.s32 %v5381, 127
        %v5383 = vand.u32 2147483647, %v4111
        %v5384 = vand.u32 %v5383, 8388607
        %v5385 = vor.u32 %v5384, 8388608
        %v5386 = vsub.s32 0, %v5385
        %v5387 = vadd.s32 %v5382, 1
        %vm5388 = vcmp.gt.s32.totalorder %v5387, 0
        %v5389 = vsel %vm5388, %v5387, 0
        %v5390 = vshrl.u32 %v5389, 5
        %v5391 = vand.u32 %v5389, 31
        %v5392 = vsub.s32 32, %v5391
        %v5393 = vshrl.u32 683565275, %v5392
        %v5394 = vshll.u32 683565275, %v5391
        %v5395 = vshrl.u32 2475754826, %v5392
        %v5396 = vor.u32 %v5394, %v5395
        %v5397 = vshll.u32 2475754826, %v5391
        %v5398 = vshrl.u32 2131351028, %v5392
        %v5399 = vor.u32 %v5397, %v5398
        %v5400 = vshll.u32 2131351028, %v5391
        %v5401 = vshrl.u32 2102212464, %v5392
        %v5402 = vor.u32 %v5400, %v5401
        %v5403 = vshll.u32 2102212464, %v5391
        %v5404 = vshrl.u32 920167782, %v5392
        %v5405 = vor.u32 %v5403, %v5404
        %v5406 = vshll.u32 920167782, %v5391
        %v5407 = vshrl.u32 1326507024, %v5392
        %v5408 = vor.u32 %v5406, %v5407
        %vm5409 = vcmp.lt.s32.totalorder %v5390, 1
        %vm5410 = vcmp.lt.s32.totalorder %v5390, 2
        %vm5411 = vcmp.lt.s32.totalorder %v5390, 3
        %vm5412 = vcmp.lt.s32.totalorder %v5390, 4
        %v5413 = vsel %vm5409, %v5393, %v5396
        %v5414 = vsel %vm5412, %v5402, 2102212464
        %v5415 = vsel %vm5411, %v5399, %v5414
        %v5416 = vsel %vm5410, %v5413, %v5415
        %v5417 = vsel %vm5409, %v5396, %v5399
        %v5418 = vsel %vm5412, %v5405, 920167782
        %v5419 = vsel %vm5411, %v5402, %v5418
        %v5420 = vsel %vm5410, %v5417, %v5419
        %v5421 = vsel %vm5409, %v5399, %v5402
        %v5422 = vsel %vm5412, %v5408, 1326507024
        %v5423 = vsel %vm5411, %v5405, %v5422
        %v5424 = vsel %vm5410, %v5421, %v5423
        %v5425 = vshll.u32 %v5385, 8
        %v5426 = vmul.u32.u64.compose %v5425, %v5424
        %v5427 = vextract.low.u32 %v5426
        %v5428 = vextract.high.u32 %v5426
        %v5429 = vmul.u32.u64.compose %v5425, %v5420
        %v5430 = vextract.low.u32 %v5429
        %v5431 = vextract.high.u32 %v5429
        %v5432 = vmul.u32 %v5425, %v5416
        %v5433 = vadd.s32 %v5428, %v5430
        %vm5434 = vc.u32 %v5428, %v5430
        %v5435 = vadd.s32 %v5431, 1
        %v5436 = vsel %vm5434, %v5435, %v5431
        %v5437 = vadd.s32 %v5432, %v5436
        %v5438 = vadd.s32 %v5437, 536870912
        %v5439 = vshrl.u32 %v5438, 30
        %v5440 = vshll.u32 %v5439, 30
        %v5441 = vsub.s32 %v5437, %v5440
        %vm5442 = vcmp.lt.s32.totalorder %v5441, 0
        %v5443 = vsub.s32 0, %v5441
        %v5444 = vsel %vm5442, %v5443, %v5441
        %v5445 = vclz %v5444
        %v5446 = vsub.s32 %v5445, 2
        %vm5447 = vcmp.gt.s32.totalorder 0, %v5446
        %v5448 = vsel %vm5447, 0, %v5446
        %v5449 = vsub.s32 32, %v5448
        %v5450 = vshll.u32 %v5441, %v5448
        %v5451 = vshrl.u32 %v5433, %v5449
        %v5452 = vor.u32 %v5450, %v5451
        %v5453 = vsub.s32 4294967266, %v5448
        %v5454 = vadd.s32 %v5453, 127
        %v5455 = vshll.u32 %v5454, 23
        %v5456 = vor.u32 4788187, %v5455
        %v5457 = vand.u32 2147483647, %v5456
        %v5459 = vcvt.s32.f32 %v5452
        %v5460 = vmul.f32 %v5459, %v5457
        %v5461 = vxor.u32 %v5460, 2147483648
        %v5462 = vsel %vm5379, %v5461, %v5460
        %v5463 = vsub.s32 4, %v5439
        %v5464 = vsel %vm5379, %v5463, %v5439
        %v5465 = vsel %vm5378, %v4111, %v5462
        %v5466 = vsel %vm5378, 0, %v5464
        %v5467 = vcosq.f32.pop %v5465
        %v5468 = vsinq.f32.pop %v5465
        %vm5469 = vweird.f32 %v4111
        %v5470 = vadd.s32 %v5466, 3
        %v5471 = vand.u32 %v5470, 3
        %vm5472 = vcmp.lt.s32.totalorder %v5471, 2
        %vm5473 = vcmp.eq.s32.totalorder %v5471, 0
        %v5474 = vxor.u32 %v5468, 2147483648
        %v5475 = vsel %vm5473, %v5467, %v5474
        %vm5476 = vcmp.eq.s32.totalorder %v5471, 2
        %v5477 = vxor.u32 %v5467, 2147483648
        %v5478 = vsel %vm5476, %v5477, %v5468
        %v5479 = vsel %vm5472, %v5475, %v5478
        %v5480 = vsel %vm5469, nan, %v5479
        %v5481 = vand.u32 2147483647, %v4116
        %vm5482 = vcmp.le.f32.partialorder %v5481, 0.7853982
        %vm5483 = vcmp.lt.s32.totalorder %v4116, 0
        %v5484 = vand.u32 %v4116, 2139095040
        %v5485 = vshrl.u32 %v5484, 23
        %v5486 = vsub.s32 %v5485, 127
        %v5487 = vand.u32 2147483647, %v4116
        %v5488 = vand.u32 %v5487, 8388607
        %v5489 = vor.u32 %v5488, 8388608
        %v5490 = vsub.s32 0, %v5489
        %v5491 = vadd.s32 %v5486, 1
        %vm5492 = vcmp.gt.s32.totalorder %v5491, 0
        %v5493 = vsel %vm5492, %v5491, 0
        %v5494 = vshrl.u32 %v5493, 5
        %v5495 = vand.u32 %v5493, 31
        %v5496 = vsub.s32 32, %v5495
        %v5497 = vshrl.u32 683565275, %v5496
        %v5498 = vshll.u32 683565275, %v5495
        %v5499 = vshrl.u32 2475754826, %v5496
        %v5500 = vor.u32 %v5498, %v5499
        %v5501 = vshll.u32 2475754826, %v5495
        %v5502 = vshrl.u32 2131351028, %v5496
        %v5503 = vor.u32 %v5501, %v5502
        %v5504 = vshll.u32 2131351028, %v5495
        %v5505 = vshrl.u32 2102212464, %v5496
        %v5506 = vor.u32 %v5504, %v5505
        %v5507 = vshll.u32 2102212464, %v5495
        %v5508 = vshrl.u32 920167782, %v5496
        %v5509 = vor.u32 %v5507, %v5508
        %v5510 = vshll.u32 920167782, %v5495
        %v5511 = vshrl.u32 1326507024, %v5496
        %v5512 = vor.u32 %v5510, %v5511
        %vm5513 = vcmp.lt.s32.totalorder %v5494, 1
        %vm5514 = vcmp.lt.s32.totalorder %v5494, 2
        %vm5515 = vcmp.lt.s32.totalorder %v5494, 3
        %vm5516 = vcmp.lt.s32.totalorder %v5494, 4
        %v5517 = vsel %vm5513, %v5497, %v5500
        %v5518 = vsel %vm5516, %v5506, 2102212464
        %v5519 = vsel %vm5515, %v5503, %v5518
        %v5520 = vsel %vm5514, %v5517, %v5519
        %v5521 = vsel %vm5513, %v5500, %v5503
        %v5522 = vsel %vm5516, %v5509, 920167782
        %v5523 = vsel %vm5515, %v5506, %v5522
        %v5524 = vsel %vm5514, %v5521, %v5523
        %v5525 = vsel %vm5513, %v5503, %v5506
        %v5526 = vsel %vm5516, %v5512, 1326507024
        %v5527 = vsel %vm5515, %v5509, %v5526
        %v5528 = vsel %vm5514, %v5525, %v5527
        %v5529 = vshll.u32 %v5489, 8
        %v5530 = vmul.u32.u64.compose %v5529, %v5528
        %v5531 = vextract.low.u32 %v5530
        %v5532 = vextract.high.u32 %v5530
        %v5533 = vmul.u32.u64.compose %v5529, %v5524
        %v5534 = vextract.low.u32 %v5533
        %v5535 = vextract.high.u32 %v5533
        %v5536 = vmul.u32 %v5529, %v5520
        %v5537 = vadd.s32 %v5532, %v5534
        %vm5538 = vc.u32 %v5532, %v5534
        %v5539 = vadd.s32 %v5535, 1
        %v5540 = vsel %vm5538, %v5539, %v5535
        %v5541 = vadd.s32 %v5536, %v5540
        %v5542 = vadd.s32 %v5541, 536870912
        %v5543 = vshrl.u32 %v5542, 30
        %v5544 = vshll.u32 %v5543, 30
        %v5545 = vsub.s32 %v5541, %v5544
        %vm5546 = vcmp.lt.s32.totalorder %v5545, 0
        %v5547 = vsub.s32 0, %v5545
        %v5548 = vsel %vm5546, %v5547, %v5545
        %v5549 = vclz %v5548
        %v5550 = vsub.s32 %v5549, 2
        %vm5551 = vcmp.gt.s32.totalorder 0, %v5550
        %v5552 = vsel %vm5551, 0, %v5550
        %v5553 = vsub.s32 32, %v5552
        %v5554 = vshll.u32 %v5545, %v5552
        %v5555 = vshrl.u32 %v5537, %v5553
        %v5556 = vor.u32 %v5554, %v5555
        %v5557 = vsub.s32 4294967266, %v5552
        %v5558 = vadd.s32 %v5557, 127
        %v5559 = vshll.u32 %v5558, 23
        %v5560 = vor.u32 4788187, %v5559
        %v5561 = vand.u32 2147483647, %v5560
        %v5563 = vcvt.s32.f32 %v5556
        %v5564 = vmul.f32 %v5563, %v5561
        %v5565 = vxor.u32 %v5564, 2147483648
        %v5566 = vsel %vm5483, %v5565, %v5564
        %v5567 = vsub.s32 4, %v5543
        %v5568 = vsel %vm5483, %v5567, %v5543
        %v5569 = vsel %vm5482, %v4116, %v5566
        %v5570 = vsel %vm5482, 0, %v5568
        %v5571 = vcosq.f32.pop %v5569
        %v5572 = vsinq.f32.pop %v5569
        %vm5573 = vweird.f32 %v4116
        %v5574 = vadd.s32 %v5570, 3
        %v5575 = vand.u32 %v5574, 3
        %vm5576 = vcmp.lt.s32.totalorder %v5575, 2
        %vm5577 = vcmp.eq.s32.totalorder %v5575, 0
        %v5578 = vxor.u32 %v5572, 2147483648
        %v5579 = vsel %vm5577, %v5571, %v5578
        %vm5580 = vcmp.eq.s32.totalorder %v5575, 2
        %v5581 = vxor.u32 %v5571, 2147483648
        %v5582 = vsel %vm5580, %v5581, %v5572
        %v5583 = vsel %vm5576, %v5579, %v5582
        %v5584 = vsel %vm5573, nan, %v5583
        %v5585 = vand.u32 2147483647, %v4121
        %vm5586 = vcmp.le.f32.partialorder %v5585, 0.7853982
        %vm5587 = vcmp.lt.s32.totalorder %v4121, 0
        %v5588 = vand.u32 %v4121, 2139095040
        %v5589 = vshrl.u32 %v5588, 23
        %v5590 = vsub.s32 %v5589, 127
        %v5591 = vand.u32 2147483647, %v4121
        %v5592 = vand.u32 %v5591, 8388607
        %v5593 = vor.u32 %v5592, 8388608
        %v5594 = vsub.s32 0, %v5593
        %v5595 = vadd.s32 %v5590, 1
        %vm5596 = vcmp.gt.s32.totalorder %v5595, 0
        %v5597 = vsel %vm5596, %v5595, 0
        %v5598 = vshrl.u32 %v5597, 5
        %v5599 = vand.u32 %v5597, 31
        %v5600 = vsub.s32 32, %v5599
        %v5601 = vshrl.u32 683565275, %v5600
        %v5602 = vshll.u32 683565275, %v5599
        %v5603 = vshrl.u32 2475754826, %v5600
        %v5604 = vor.u32 %v5602, %v5603
        %v5605 = vshll.u32 2475754826, %v5599
        %v5606 = vshrl.u32 2131351028, %v5600
        %v5607 = vor.u32 %v5605, %v5606
        %v5608 = vshll.u32 2131351028, %v5599
        %v5609 = vshrl.u32 2102212464, %v5600
        %v5610 = vor.u32 %v5608, %v5609
        %v5611 = vshll.u32 2102212464, %v5599
        %v5612 = vshrl.u32 920167782, %v5600
        %v5613 = vor.u32 %v5611, %v5612
        %v5614 = vshll.u32 920167782, %v5599
        %v5615 = vshrl.u32 1326507024, %v5600
        %v5616 = vor.u32 %v5614, %v5615
        %vm5617 = vcmp.lt.s32.totalorder %v5598, 1
        %vm5618 = vcmp.lt.s32.totalorder %v5598, 2
        %vm5619 = vcmp.lt.s32.totalorder %v5598, 3
        %vm5620 = vcmp.lt.s32.totalorder %v5598, 4
        %v5621 = vsel %vm5617, %v5601, %v5604
        %v5622 = vsel %vm5620, %v5610, 2102212464
        %v5623 = vsel %vm5619, %v5607, %v5622
        %v5624 = vsel %vm5618, %v5621, %v5623
        %v5625 = vsel %vm5617, %v5604, %v5607
        %v5626 = vsel %vm5620, %v5613, 920167782
        %v5627 = vsel %vm5619, %v5610, %v5626
        %v5628 = vsel %vm5618, %v5625, %v5627
        %v5629 = vsel %vm5617, %v5607, %v5610
        %v5630 = vsel %vm5620, %v5616, 1326507024
        %v5631 = vsel %vm5619, %v5613, %v5630
        %v5632 = vsel %vm5618, %v5629, %v5631
        %v5633 = vshll.u32 %v5593, 8
        %v5634 = vmul.u32.u64.compose %v5633, %v5632
        %v5635 = vextract.low.u32 %v5634
        %v5636 = vextract.high.u32 %v5634
        %v5637 = vmul.u32.u64.compose %v5633, %v5628
        %v5638 = vextract.low.u32 %v5637
        %v5639 = vextract.high.u32 %v5637
        %v5640 = vmul.u32 %v5633, %v5624
        %v5641 = vadd.s32 %v5636, %v5638
        %vm5642 = vc.u32 %v5636, %v5638
        %v5643 = vadd.s32 %v5639, 1
        %v5644 = vsel %vm5642, %v5643, %v5639
        %v5645 = vadd.s32 %v5640, %v5644
        %v5646 = vadd.s32 %v5645, 536870912
        %v5647 = vshrl.u32 %v5646, 30
        %v5648 = vshll.u32 %v5647, 30
        %v5649 = vsub.s32 %v5645, %v5648
        %vm5650 = vcmp.lt.s32.totalorder %v5649, 0
        %v5651 = vsub.s32 0, %v5649
        %v5652 = vsel %vm5650, %v5651, %v5649
        %v5653 = vclz %v5652
        %v5654 = vsub.s32 %v5653, 2
        %vm5655 = vcmp.gt.s32.totalorder 0, %v5654
        %v5656 = vsel %vm5655, 0, %v5654
        %v5657 = vsub.s32 32, %v5656
        %v5658 = vshll.u32 %v5649, %v5656
        %v5659 = vshrl.u32 %v5641, %v5657
        %v5660 = vor.u32 %v5658, %v5659
        %v5661 = vsub.s32 4294967266, %v5656
        %v5662 = vadd.s32 %v5661, 127
        %v5663 = vshll.u32 %v5662, 23
        %v5664 = vor.u32 4788187, %v5663
        %v5665 = vand.u32 2147483647, %v5664
        %v5667 = vcvt.s32.f32 %v5660
        %v5668 = vmul.f32 %v5667, %v5665
        %v5669 = vxor.u32 %v5668, 2147483648
        %v5670 = vsel %vm5587, %v5669, %v5668
        %v5671 = vsub.s32 4, %v5647
        %v5672 = vsel %vm5587, %v5671, %v5647
        %v5673 = vsel %vm5586, %v4121, %v5670
        %v5674 = vsel %vm5586, 0, %v5672
        %v5675 = vcosq.f32.pop %v5673
        %v5676 = vsinq.f32.pop %v5673
        %vm5677 = vweird.f32 %v4121
        %v5678 = vadd.s32 %v5674, 3
        %v5679 = vand.u32 %v5678, 3
        %vm5680 = vcmp.lt.s32.totalorder %v5679, 2
        %vm5681 = vcmp.eq.s32.totalorder %v5679, 0
        %v5682 = vxor.u32 %v5676, 2147483648
        %v5683 = vsel %vm5681, %v5675, %v5682
        %vm5684 = vcmp.eq.s32.totalorder %v5679, 2
        %v5685 = vxor.u32 %v5675, 2147483648
        %v5686 = vsel %vm5684, %v5685, %v5676
        %v5687 = vsel %vm5680, %v5683, %v5686
        %v5688 = vsel %vm5677, nan, %v5687
        %v5689 = vand.u32 2147483647, %v4126
        %vm5690 = vcmp.le.f32.partialorder %v5689, 0.7853982
        %vm5691 = vcmp.lt.s32.totalorder %v4126, 0
        %v5692 = vand.u32 %v4126, 2139095040
        %v5693 = vshrl.u32 %v5692, 23
        %v5694 = vsub.s32 %v5693, 127
        %v5695 = vand.u32 2147483647, %v4126
        %v5696 = vand.u32 %v5695, 8388607
        %v5697 = vor.u32 %v5696, 8388608
        %v5698 = vsub.s32 0, %v5697
        %v5699 = vadd.s32 %v5694, 1
        %vm5700 = vcmp.gt.s32.totalorder %v5699, 0
        %v5701 = vsel %vm5700, %v5699, 0
        %v5702 = vshrl.u32 %v5701, 5
        %v5703 = vand.u32 %v5701, 31
        %v5704 = vsub.s32 32, %v5703
        %v5705 = vshrl.u32 683565275, %v5704
        %v5706 = vshll.u32 683565275, %v5703
        %v5707 = vshrl.u32 2475754826, %v5704
        %v5708 = vor.u32 %v5706, %v5707
        %v5709 = vshll.u32 2475754826, %v5703
        %v5710 = vshrl.u32 2131351028, %v5704
        %v5711 = vor.u32 %v5709, %v5710
        %v5712 = vshll.u32 2131351028, %v5703
        %v5713 = vshrl.u32 2102212464, %v5704
        %v5714 = vor.u32 %v5712, %v5713
        %v5715 = vshll.u32 2102212464, %v5703
        %v5716 = vshrl.u32 920167782, %v5704
        %v5717 = vor.u32 %v5715, %v5716
        %v5718 = vshll.u32 920167782, %v5703
        %v5719 = vshrl.u32 1326507024, %v5704
        %v5720 = vor.u32 %v5718, %v5719
        %vm5721 = vcmp.lt.s32.totalorder %v5702, 1
        %vm5722 = vcmp.lt.s32.totalorder %v5702, 2
        %vm5723 = vcmp.lt.s32.totalorder %v5702, 3
        %vm5724 = vcmp.lt.s32.totalorder %v5702, 4
        %v5725 = vsel %vm5721, %v5705, %v5708
        %v5726 = vsel %vm5724, %v5714, 2102212464
        %v5727 = vsel %vm5723, %v5711, %v5726
        %v5728 = vsel %vm5722, %v5725, %v5727
        %v5729 = vsel %vm5721, %v5708, %v5711
        %v5730 = vsel %vm5724, %v5717, 920167782
        %v5731 = vsel %vm5723, %v5714, %v5730
        %v5732 = vsel %vm5722, %v5729, %v5731
        %v5733 = vsel %vm5721, %v5711, %v5714
        %v5734 = vsel %vm5724, %v5720, 1326507024
        %v5735 = vsel %vm5723, %v5717, %v5734
        %v5736 = vsel %vm5722, %v5733, %v5735
        %v5737 = vshll.u32 %v5697, 8
        %v5738 = vmul.u32.u64.compose %v5737, %v5736
        %v5739 = vextract.low.u32 %v5738
        %v5740 = vextract.high.u32 %v5738
        %v5741 = vmul.u32.u64.compose %v5737, %v5732
        %v5742 = vextract.low.u32 %v5741
        %v5743 = vextract.high.u32 %v5741
        %v5744 = vmul.u32 %v5737, %v5728
        %v5745 = vadd.s32 %v5740, %v5742
        %vm5746 = vc.u32 %v5740, %v5742
        %v5747 = vadd.s32 %v5743, 1
        %v5748 = vsel %vm5746, %v5747, %v5743
        %v5749 = vadd.s32 %v5744, %v5748
        %v5750 = vadd.s32 %v5749, 536870912
        %v5751 = vshrl.u32 %v5750, 30
        %v5752 = vshll.u32 %v5751, 30
        %v5753 = vsub.s32 %v5749, %v5752
        %vm5754 = vcmp.lt.s32.totalorder %v5753, 0
        %v5755 = vsub.s32 0, %v5753
        %v5756 = vsel %vm5754, %v5755, %v5753
        %v5757 = vclz %v5756
        %v5758 = vsub.s32 %v5757, 2
        %vm5759 = vcmp.gt.s32.totalorder 0, %v5758
        %v5760 = vsel %vm5759, 0, %v5758
        %v5761 = vsub.s32 32, %v5760
        %v5762 = vshll.u32 %v5753, %v5760
        %v5763 = vshrl.u32 %v5745, %v5761
        %v5764 = vor.u32 %v5762, %v5763
        %v5765 = vsub.s32 4294967266, %v5760
        %v5766 = vadd.s32 %v5765, 127
        %v5767 = vshll.u32 %v5766, 23
        %v5768 = vor.u32 4788187, %v5767
        %v5769 = vand.u32 2147483647, %v5768
        %v5771 = vcvt.s32.f32 %v5764
        %v5772 = vmul.f32 %v5771, %v5769
        %v5773 = vxor.u32 %v5772, 2147483648
        %v5774 = vsel %vm5691, %v5773, %v5772
        %v5775 = vsub.s32 4, %v5751
        %v5776 = vsel %vm5691, %v5775, %v5751
        %v5777 = vsel %vm5690, %v4126, %v5774
        %v5778 = vsel %vm5690, 0, %v5776
        %v5779 = vcosq.f32.pop %v5777
        %v5780 = vsinq.f32.pop %v5777
        %vm5781 = vweird.f32 %v4126
        %v5782 = vadd.s32 %v5778, 3
        %v5783 = vand.u32 %v5782, 3
        %vm5784 = vcmp.lt.s32.totalorder %v5783, 2
        %vm5785 = vcmp.eq.s32.totalorder %v5783, 0
        %v5786 = vxor.u32 %v5780, 2147483648
        %v5787 = vsel %vm5785, %v5779, %v5786
        %vm5788 = vcmp.eq.s32.totalorder %v5783, 2
        %v5789 = vxor.u32 %v5779, 2147483648
        %v5790 = vsel %vm5788, %v5789, %v5780
        %v5791 = vsel %vm5784, %v5787, %v5790
        %v5792 = vsel %vm5781, nan, %v5791
        %v5793 = vld [vmem:[%s4] sm:$0xff]
        %v5794 = vld [vmem:[%s5] sm:$0xff]
        %5796 = vset.pattern.permute.xlu0 0
        %5797 = vperm.xlu0 %5796, %v5794
        %v5798 = vpop.permute.xlu0 %5797
        %5800 = vmatprep.subr.mxu0 0.0
        %5801 = vmatpush1.xpose.msra.mxu0 %v4232
        %5802 = vmatprep.subr.mxu0 0.0
        %5803 = vmatpush1.xpose.msra.mxu0 %v4336
        %5804 = vmatprep.subr.mxu0 0.0
        %5805 = vmatpush1.xpose.msra.mxu0 %v4440
        %5806 = vmatprep.subr.mxu0 0.0
        %5807 = vmatpush1.xpose.msra.mxu0 %v4544
        %5808 = vmatprep.subr.mxu0 0.0
        %5809 = vmatpush1.xpose.msra.mxu0 %v4648
        %5810 = vmatprep.subr.mxu0 0.0
        %5811 = vmatpush1.xpose.msra.mxu0 %v4752
        %5812 = vmatprep.subr.mxu0 0.0
        %5813 = vmatpush1.xpose.msra.mxu0 %v4856
        %5814 = vmatprep.subr.mxu0 0.0
        %5815 = vmatpush1.xpose.msra.mxu0 %v4960
        %5816 = vmatprep.subr.mxu0 0.0
        %5817 = vmatpush1.xpose.msra.mxu0 %v5064
        %5818 = vmatprep.subr.mxu0 0.0
        %5819 = vmatpush1.xpose.msra.mxu0 %v5168
        %5820 = vmatprep.subr.mxu0 0.0
        %5821 = vmatpush1.xpose.msra.mxu0 %v5272
        %5822 = vmatprep.subr.mxu0 0.0
        %5823 = vmatpush1.xpose.msra.mxu0 %v5376
        %5824 = vmatprep.subr.mxu0 0.0
        %5825 = vmatpush1.xpose.msra.mxu0 %v5480
        %5826 = vmatprep.subr.mxu0 0.0
        %5827 = vmatpush1.xpose.msra.mxu0 %v5584
        %5828 = vmatprep.subr.mxu0 0.0
        %5829 = vmatpush1.xpose.msra.mxu0 %v5688
        %5830 = vmatprep.subr.mxu0 0.0
        %5831 = vmatpush1.xpose.msra.mxu0 %v5792
        %5832 = vmatprep.subr.mxu0 0.0
        %5833 = vmatpush1.xpose.msra.mxu0 0.0
        %5834 = vmatprep.subr.mxu0 0.0
        %5835 = vmatpush1.xpose.msra.mxu0 0.0
        %5836 = vmatprep.subr.mxu0 0.0
        %5837 = vmatpush1.xpose.msra.mxu0 0.0
        %5838 = vmatprep.subr.mxu0 0.0
        %5839 = vmatpush1.xpose.msra.mxu0 0.0
        %5840 = vmatprep.subr.mxu0 0.0
        %5841 = vmatpush1.xpose.msra.mxu0 0.0
        %5842 = vmatprep.subr.mxu0 0.0
        %5843 = vmatpush1.xpose.msra.mxu0 0.0
        %5844 = vmatprep.subr.mxu0 0.0
        %5845 = vmatpush1.xpose.msra.mxu0 0.0
        %5846 = vmatprep.subr.mxu0 0.0
        %5847 = vmatpush1.xpose.msra.mxu0 0.0
        %5848 = vmatprep.subr.mxu0 0.0
        %5849 = vmatpush1.xpose.msra.mxu0 0.0
        %5850 = vmatprep.subr.mxu0 0.0
        %5851 = vmatpush1.xpose.msra.mxu0 0.0
        %5852 = vmatprep.subr.mxu0 0.0
        %5853 = vmatpush1.xpose.msra.mxu0 0.0
        %5854 = vmatprep.subr.mxu0 0.0
        %5855 = vmatpush1.xpose.msra.mxu0 0.0
        %5856 = vmatprep.subr.mxu0 0.0
        %5857 = vmatpush1.xpose.msra.mxu0 0.0
        %5858 = vmatprep.subr.mxu0 0.0
        %5859 = vmatpush1.xpose.msra.mxu0 0.0
        %5860 = vmatprep.subr.mxu0 0.0
        %5861 = vmatpush1.xpose.msra.mxu0 0.0
        %5862 = vmatprep.subr.mxu0 0.0
        %5863 = vmatpush1.xpose.msra.mxu0 0.0
        %5864 = vmatprep.mubr.f32.mxu0 0.0
        %5865 = vmatmul.mubr.f32.gmra.mrb[0].mxu0 %v5793
        %v5866 = vpop.f32.mrb[0].mxu0
        %v5867 = vadd.f32 %v5798, %v5866
        %v5868 = vpop.f32.mrb[0].mxu0
        %5869 = vdwg.mxu0
        %v5870 = vand.u32 2147483647, %v5867
        %vm5871 = vcmp.le.f32.partialorder %v5870, 0.7853982
        %vm5872 = vcmp.lt.s32.totalorder %v5867, 0
        %v5873 = vand.u32 %v5867, 2139095040
        %v5874 = vshrl.u32 %v5873, 23
        %v5875 = vsub.s32 %v5874, 127
        %v5876 = vand.u32 2147483647, %v5867
        %v5877 = vand.u32 %v5876, 8388607
        %v5878 = vor.u32 %v5877, 8388608
        %v5879 = vsub.s32 0, %v5878
        %v5880 = vadd.s32 %v5875, 1
        %vm5881 = vcmp.gt.s32.totalorder %v5880, 0
        %v5882 = vsel %vm5881, %v5880, 0
        %v5883 = vshrl.u32 %v5882, 5
        %v5884 = vand.u32 %v5882, 31
        %v5885 = vsub.s32 32, %v5884
        %v5886 = vshrl.u32 683565275, %v5885
        %v5887 = vshll.u32 683565275, %v5884
        %v5888 = vshrl.u32 2475754826, %v5885
        %v5889 = vor.u32 %v5887, %v5888
        %v5890 = vshll.u32 2475754826, %v5884
        %v5891 = vshrl.u32 2131351028, %v5885
        %v5892 = vor.u32 %v5890, %v5891
        %v5893 = vshll.u32 2131351028, %v5884
        %v5894 = vshrl.u32 2102212464, %v5885
        %v5895 = vor.u32 %v5893, %v5894
        %v5896 = vshll.u32 2102212464, %v5884
        %v5897 = vshrl.u32 920167782, %v5885
        %v5898 = vor.u32 %v5896, %v5897
        %v5899 = vshll.u32 920167782, %v5884
        %v5900 = vshrl.u32 1326507024, %v5885
        %v5901 = vor.u32 %v5899, %v5900
        %vm5902 = vcmp.lt.s32.totalorder %v5883, 1
        %vm5903 = vcmp.lt.s32.totalorder %v5883, 2
        %vm5904 = vcmp.lt.s32.totalorder %v5883, 3
        %vm5905 = vcmp.lt.s32.totalorder %v5883, 4
        %v5906 = vsel %vm5902, %v5886, %v5889
        %v5907 = vsel %vm5905, %v5895, 2102212464
        %v5908 = vsel %vm5904, %v5892, %v5907
        %v5909 = vsel %vm5903, %v5906, %v5908
        %v5910 = vsel %vm5902, %v5889, %v5892
        %v5911 = vsel %vm5905, %v5898, 920167782
        %v5912 = vsel %vm5904, %v5895, %v5911
        %v5913 = vsel %vm5903, %v5910, %v5912
        %v5914 = vsel %vm5902, %v5892, %v5895
        %v5915 = vsel %vm5905, %v5901, 1326507024
        %v5916 = vsel %vm5904, %v5898, %v5915
        %v5917 = vsel %vm5903, %v5914, %v5916
        %v5918 = vshll.u32 %v5878, 8
        %v5919 = vmul.u32.u64.compose %v5918, %v5917
        %v5920 = vextract.low.u32 %v5919
        %v5921 = vextract.high.u32 %v5919
        %v5922 = vmul.u32.u64.compose %v5918, %v5913
        %v5923 = vextract.low.u32 %v5922
        %v5924 = vextract.high.u32 %v5922
        %v5925 = vmul.u32 %v5918, %v5909
        %v5926 = vadd.s32 %v5921, %v5923
        %vm5927 = vc.u32 %v5921, %v5923
        %v5928 = vadd.s32 %v5924, 1
        %v5929 = vsel %vm5927, %v5928, %v5924
        %v5930 = vadd.s32 %v5925, %v5929
        %v5931 = vadd.s32 %v5930, 536870912
        %v5932 = vshrl.u32 %v5931, 30
        %v5933 = vshll.u32 %v5932, 30
        %v5934 = vsub.s32 %v5930, %v5933
        %vm5935 = vcmp.lt.s32.totalorder %v5934, 0
        %v5936 = vsub.s32 0, %v5934
        %v5937 = vsel %vm5935, %v5936, %v5934
        %v5938 = vclz %v5937
        %v5939 = vsub.s32 %v5938, 2
        %vm5940 = vcmp.gt.s32.totalorder 0, %v5939
        %v5941 = vsel %vm5940, 0, %v5939
        %v5942 = vsub.s32 32, %v5941
        %v5943 = vshll.u32 %v5934, %v5941
        %v5944 = vshrl.u32 %v5926, %v5942
        %v5945 = vor.u32 %v5943, %v5944
        %v5946 = vsub.s32 4294967266, %v5941
        %v5947 = vadd.s32 %v5946, 127
        %v5948 = vshll.u32 %v5947, 23
        %v5949 = vor.u32 4788187, %v5948
        %v5950 = vand.u32 2147483647, %v5949
        %v5952 = vcvt.s32.f32 %v5945
        %v5953 = vmul.f32 %v5952, %v5950
        %v5954 = vxor.u32 %v5953, 2147483648
        %v5955 = vsel %vm5872, %v5954, %v5953
        %v5956 = vsub.s32 4, %v5932
        %v5957 = vsel %vm5872, %v5956, %v5932
        %v5958 = vsel %vm5871, %v5867, %v5955
        %v5959 = vsel %vm5871, 0, %v5957
        %v5960 = vcosq.f32.pop %v5958
        %v5961 = vsinq.f32.pop %v5958
        %vm5962 = vweird.f32 %v5867
        %v5963 = vadd.s32 %v5959, 3
        %v5964 = vand.u32 %v5963, 3
        %vm5965 = vcmp.lt.s32.totalorder %v5964, 2
        %vm5966 = vcmp.eq.s32.totalorder %v5964, 0
        %v5967 = vxor.u32 %v5961, 2147483648
        %v5968 = vsel %vm5966, %v5960, %v5967
        %vm5969 = vcmp.eq.s32.totalorder %v5964, 2
        %v5970 = vxor.u32 %v5960, 2147483648
        %v5971 = vsel %vm5969, %v5970, %v5961
        %v5972 = vsel %vm5965, %v5968, %v5971
        %v5973 = vsel %vm5962, nan, %v5972
        %5974 = vst [vmem:[%s245] sm:$0xff] %v5973
        %s5975 = sand.u32 %s159, 1
        %s5976 = scalar_lea.sflag [#allocation3], %s5975
        %s5977 = sand.u32 %s159, 1
        %s5978 = smul.addr %s5977, 8
        %s5979 = scalar_lea.vmem [#allocation2], %s5978
        // Predicated region
        $region45: #{tpu_custom_call.1} parent=43 // pred_check
          %p5980 = pneg %p169
        $region46: #{tpu_custom_call.1} parent=43 // pred_check_branch
          %5982 = sbr.rel (%p5980) target = $region48
        $region47: #{tpu_custom_call.1} parent=43 // pred_region
          %s5984 = ssub.s32 128, 128
          %5985 = vsyncadd %s5976, %s5984
          %s5986 = smul.addr %s20, 128
          %s5987 = scalar_lea.hbm %s6, %s5986
          %s5989 = sshll.u32 %s5979, 4
          %s5990 = int_to_ptr.vmem [resolvable:$true] %s5989
          %5992 = dma.vmem_to_hbm [thread:$0]  %s5990, 128, %s5987, %s5976
        $region48: #{tpu_custom_call.1} parent=43 // pred_fallthru
          _
      $region44: #{tpu_custom_call.1} parent=5 // pred_fallthru
        _
      %p5993 = scmp.le.s32.totalorder 2, %s15
      // Predicated region
      $region49: #{tpu_custom_call.1} parent=5 // pred_check
        %p5994 = pneg %p5993
      $region50: #{tpu_custom_call.1} parent=5 // pred_check_branch
        %5996 = sbr.rel (%p5994) target = $region52
      $region51: #{tpu_custom_call.1} parent=5 // pred_region
        %s5997 = ssub.s32 %s15, 2
        // Predicated region
        $region53: #{tpu_custom_call.1} parent=51 // pred_check
          %p5998 = pneg %p175
        $region54: #{tpu_custom_call.1} parent=51 // pred_check_branch
          %6000 = sbr.rel (%p5998) target = $region56
        $region55: #{tpu_custom_call.1} parent=51 // pred_region
          %s6001 = sand.u32 %s160, 1
          %s6002 = scalar_lea.sflag [#allocation3], %s6001
          %s6003 = sand.u32 %s160, 1
          %s6004 = smul.addr %s6003, 8
          %s6005 = scalar_lea.vmem [#allocation2], %s6004
          %6006 = dma.done %s6002, 128
        $region56: #{tpu_custom_call.1} parent=51 // pred_fallthru
          _
      $region52: #{tpu_custom_call.1} parent=5 // pred_fallthru
        _
    $region6: #{tpu_custom_call.1} parent=1 // loop_footer
      %s19 = sadd.s32 1, %s15
    $region7: #{tpu_custom_call.1} parent=1 // loop_footer_branch
      %14 = sbr.rel target = $region3
    $region8: #{tpu_custom_call.1} parent=1 // loop_exit
      _
    %6007 = vsyncpa [#allocation3], 1
    %s6008 = scalar_lea.sflag [#allocation3], 1
    %6009 = vsyncpa %s6008, 1

</llo_original>
